<compile_context>
chip_gen: v7x
topology: tpu7x:2x2x1
jax: 0.10.0
libtpu: 0.0.40
codegen_flags: <defaults>
</compile_context>

<pallas_src>
import functools

import jax
import jax.numpy as jnp
import numpy as np
from jax.experimental import pallas as pl
from jax.experimental.pallas import tpu as pltpu

EPS = 1e-5
LANES = 128
_VMEM_LIMIT = 32 * 1024 * 1024  # well above the ~2 MiB double-buffered footprint


def _round_up(x, m):
    return (x + m - 1) // m * m


# ---------------------------------------------------------------------------
# Kernel 1: 3x3x3 conv via 27 shifted matmuls + single-pass BN statistics.
#   grid = (N, D, 3); the last axis is the depth tap (reduction, "arbitrary").
#   x_ref     : (1, 1, (H+3)*(W+2), Cpi)  padded input plane at depth d+kd
#   w_ref     : (1, 3, 3, Cpi, Cpo)       bf16 weights for this depth tap
#   mask_ref  : (H*(W+2), Cpo)            1.0 on valid rows, 0.0 on garbage cols
#   wd_ref    : (Cpi, Cpo)                bf16 1x1x1 downsample weight (optional)
#   y_ref     : (1, 1, H*(W+2), Cpo)      raw conv output (garbage cols kept)
#   stats_ref : (1, 1, 2, Cpo)            per-(n,d) [sum, sum_sq] of conv output
#   ds_ref    : (1, 1, 2, Cpo)            per-(n,d) [sum, sum_sq] of x @ wd
#   acc_ref   : VMEM (H*(W+2), Cpo) f32   tap accumulator
# ---------------------------------------------------------------------------
def _conv_tap_kernel(*refs, H, W, has_ds):
    if has_ds:
        (x_ref, w_ref, mask_ref, wd_ref,
         y_ref, stats_ref, ds_ref, acc_ref) = refs
    else:
        x_ref, w_ref, mask_ref, y_ref, stats_ref, acc_ref = refs
        wd_ref = ds_ref = None

    kd = pl.program_id(2)
    Wp = W + 2
    HW2 = H * Wp

    @pl.when(kd == 0)
    def _init():
        acc_ref[...] = jnp.zeros_like(acc_ref)

    # 9 shifted bf16 matmuls for this depth tap, accumulated in f32.
    contrib = None
    for kh in range(3):
        for kw in range(3):
            off = kh * Wp + kw
            lhs = x_ref[0, 0, off:off + HW2, :].astype(jnp.bfloat16)
            part = jnp.dot(lhs, w_ref[0, kh, kw],
                           preferred_element_type=jnp.float32)
            contrib = part if contrib is None else contrib + part
    acc_ref[...] += contrib

    if has_ds:
        # The center plane (kd == 1) holds the original x[n, d]: compute the
        # 1x1x1 downsample-conv statistics while x is already in VMEM.
        @pl.when(kd == 1)
        def _ds_stats():
            xc = x_ref[0, 0, Wp + 1:Wp + 1 + HW2, :].astype(jnp.bfloat16)
            z = jnp.dot(xc, wd_ref[...], preferred_element_type=jnp.float32)
            zm = z * mask_ref[...]
            ds_ref[0, 0, 0:1, :] = jnp.sum(zm, axis=0, keepdims=True)
            ds_ref[0, 0, 1:2, :] = jnp.sum(zm * z, axis=0, keepdims=True)

    @pl.when(kd == 2)
    def _finish():
        acc = acc_ref[...]
        y_ref[0, 0] = acc
        am = acc * mask_ref[...]
        stats_ref[0, 0, 0:1, :] = jnp.sum(am, axis=0, keepdims=True)
        stats_ref[0, 0, 1:2, :] = jnp.sum(am * acc, axis=0, keepdims=True)


def _conv3x3x3(xp_flat, w, mask, *, H, W, wd=None):
    N, Dp2, PAD_ROWS, Cpi = xp_flat.shape
    D = Dp2 - 2
    Cpo = w.shape[-1]
    HW2 = H * (W + 2)
    has_ds = wd is not None

    in_specs = [
        pl.BlockSpec((1, 1, PAD_ROWS, Cpi), lambda n, d, kd: (n, d + kd, 0, 0)),
        pl.BlockSpec((1, 3, 3, Cpi, Cpo), lambda n, d, kd: (kd, 0, 0, 0, 0)),
        pl.BlockSpec((HW2, Cpo), lambda n, d, kd: (0, 0)),
    ]
    inputs = [xp_flat, w, mask]
    out_shape = [
        jax.ShapeDtypeStruct((N, D, HW2, Cpo), jnp.float32),
        jax.ShapeDtypeStruct((N, D, 2, Cpo), jnp.float32),
    ]
    out_specs = [
        pl.BlockSpec((1, 1, HW2, Cpo), lambda n, d, kd: (n, d, 0, 0)),
        pl.BlockSpec((1, 1, 2, Cpo), lambda n, d, kd: (n, d, 0, 0)),
    ]
    if has_ds:
        in_specs.append(pl.BlockSpec((Cpi, Cpo), lambda n, d, kd: (0, 0)))
        inputs.append(wd)
        out_shape.append(jax.ShapeDtypeStruct((N, D, 2, Cpo), jnp.float32))
        out_specs.append(pl.BlockSpec((1, 1, 2, Cpo), lambda n, d, kd: (n, d, 0, 0)))

    kernel = functools.partial(_conv_tap_kernel, H=H, W=W, has_ds=has_ds)
    return pl.pallas_call(
        kernel,
        grid=(N, D, 3),
        in_specs=in_specs,
        out_specs=out_specs,
        out_shape=out_shape,
        scratch_shapes=[pltpu.VMEM((HW2, Cpo), jnp.float32)],
        compiler_params=pltpu.CompilerParams(
            dimension_semantics=("parallel", "parallel", "arbitrary"),
            vmem_limit_bytes=_VMEM_LIMIT),
    )(*inputs)


# ---------------------------------------------------------------------------
# Kernel 2: folded BatchNorm affine (scale/shift) + ReLU, tiled over (N, D).
# ---------------------------------------------------------------------------
def _bn_relu_kernel(y_ref, s_ref, b_ref, o_ref):
    o_ref[0, 0] = jnp.maximum(y_ref[0, 0] * s_ref[...] + b_ref[...], 0.0)


def _bn_relu(y, scale, shift):
    N, D, HW2, Cpo = y.shape
    return pl.pallas_call(
        _bn_relu_kernel,
        grid=(N, D),
        in_specs=[pl.BlockSpec((1, 1, HW2, Cpo), lambda n, d: (n, d, 0, 0)),
                  pl.BlockSpec((1, Cpo), lambda n, d: (0, 0)),
                  pl.BlockSpec((1, Cpo), lambda n, d: (0, 0))],
        out_specs=pl.BlockSpec((1, 1, HW2, Cpo), lambda n, d: (n, d, 0, 0)),
        out_shape=jax.ShapeDtypeStruct((N, D, HW2, Cpo), jnp.float32),
        compiler_params=pltpu.CompilerParams(
            dimension_semantics=("parallel", "parallel"),
            vmem_limit_bytes=_VMEM_LIMIT),
    )(y, scale, shift)


# ---------------------------------------------------------------------------
# Kernel 3: BN2 affine + fused residual path (optional 1x1x1 conv + BN) + ReLU.
# ---------------------------------------------------------------------------
def _finalize_kernel(*refs, has_ds):
    if has_ds:
        y_ref, x_ref, wd_ref, s2_ref, b2_ref, sd_ref, bd_ref, o_ref = refs
        z = jnp.dot(x_ref[0, 0].astype(jnp.bfloat16), wd_ref[...],
                    preferred_element_type=jnp.float32)
        identity = z * sd_ref[...] + bd_ref[...]
    else:
        y_ref, x_ref, s2_ref, b2_ref, o_ref = refs
        identity = x_ref[0, 0]
    out = y_ref[0, 0] * s2_ref[...] + b2_ref[...]
    o_ref[0, 0] = jnp.maximum(out + identity, 0.0)


def _finalize(y2, x_ident, scale2, shift2, wd=None, sd=None, bd=None):
    N, D, HW2, Cpo = y2.shape
    Cpi = x_ident.shape[-1]
    has_ds = wd is not None
    if has_ds:
        inputs = [y2, x_ident, wd, scale2, shift2, sd, bd]
        in_specs = [
            pl.BlockSpec((1, 1, HW2, Cpo), lambda n, d: (n, d, 0, 0)),
            pl.BlockSpec((1, 1, HW2, Cpi), lambda n, d: (n, d, 0, 0)),
            pl.BlockSpec((Cpi, Cpo), lambda n, d: (0, 0)),
            pl.BlockSpec((1, Cpo), lambda n, d: (0, 0)),
            pl.BlockSpec((1, Cpo), lambda n, d: (0, 0)),
            pl.BlockSpec((1, Cpo), lambda n, d: (0, 0)),
            pl.BlockSpec((1, Cpo), lambda n, d: (0, 0)),
        ]
    else:
        inputs = [y2, x_ident, scale2, shift2]
        in_specs = [
            pl.BlockSpec((1, 1, HW2, Cpo), lambda n, d: (n, d, 0, 0)),
            pl.BlockSpec((1, 1, HW2, Cpi), lambda n, d: (n, d, 0, 0)),
            pl.BlockSpec((1, Cpo), lambda n, d: (0, 0)),
            pl.BlockSpec((1, Cpo), lambda n, d: (0, 0)),
        ]
    kernel = functools.partial(_finalize_kernel, has_ds=has_ds)
    return pl.pallas_call(
        kernel,
        grid=(N, D),
        in_specs=in_specs,
        out_specs=pl.BlockSpec((1, 1, HW2, Cpo), lambda n, d: (n, d, 0, 0)),
        out_shape=jax.ShapeDtypeStruct((N, D, HW2, Cpo), jnp.float32),
        compiler_params=pltpu.CompilerParams(
            dimension_semantics=("parallel", "parallel"),
            vmem_limit_bytes=_VMEM_LIMIT),
    )(*inputs)


# ---------------------------------------------------------------------------
# Tiny JAX glue: fold accumulated (sum, sum_sq) into a per-channel scale/shift.
# ---------------------------------------------------------------------------
def _bn_scale_shift(stats, gamma, beta, count):
    s = jnp.sum(stats[:, :, 0, :], axis=(0, 1))
    sq = jnp.sum(stats[:, :, 1, :], axis=(0, 1))
    mean = s / count
    var = jnp.maximum(sq / count - mean * mean, 0.0)
    scale = gamma * jax.lax.rsqrt(var + EPS)
    shift = beta - mean * scale
    return scale.reshape(1, -1), shift.reshape(1, -1)


# ---------------------------------------------------------------------------
# ResidualBlock3D forward (Pallas-backed).
# ---------------------------------------------------------------------------
def residual_block_3d(x_ncdhw, params):
    """x_ncdhw: (N, Cin, D, H, W) float32, same layout as the PyTorch module.

    NOTE: conv biases (b1/b2/bd) are accepted but not applied — under
    training-mode BatchNorm they are exactly cancelled by the mean subtraction.
    """
    N, Cin, D, H, W = x_ncdhw.shape
    Cout = params["g1"].shape[0]
    Cpi = _round_up(Cin, LANES)
    Cpo = _round_up(Cout, LANES)
    Wp = W + 2
    HW2 = H * Wp
    M = N * D * H * W
    has_ds = "wd" in params

    # ---- layout glue (XLA): NCDHW -> NDHWC, channel pad to 128 lanes --------
    x = jnp.transpose(x_ncdhw.astype(jnp.float32), (0, 2, 3, 4, 1))
    x_cp = jnp.pad(x, ((0, 0), (0, 0), (0, 0), (0, 0), (0, Cpi - Cin)))
    # spatially padded planes, row-flattened so each conv tap is a contiguous
    # 2-D row slice inside the kernel
    xp1 = jnp.pad(x_cp, ((0, 0), (1, 1), (1, 2), (1, 1), (0, 0)))
    xp1 = xp1.reshape(N, D + 2, (H + 3) * Wp, Cpi)
    # identity rows aligned with the kernels' (W+2)-strided output rows
    x_ident = jnp.pad(x_cp, ((0, 0), (0, 0), (0, 0), (0, 2), (0, 0)))
    x_ident = x_ident.reshape(N, D, HW2, Cpi)

    # validity mask for the 2 garbage columns per output row
    mask_np = (np.arange(HW2) % Wp < W).astype(np.float32)
    mask = jnp.asarray(np.repeat(mask_np[:, None], Cpo, axis=1))

    # channel-padded weights / BN parameters (matmul operands cast to bf16)
    def padw3(w, ci, co):
        return jnp.pad(w, ((0, 0), (0, 0), (0, 0),
                           (0, ci - w.shape[3]), (0, co - w.shape[4]))
                       ).astype(jnp.bfloat16)

    def padc(v, c):
        return jnp.pad(v.astype(jnp.float32), (0, c - v.shape[0]))

    w1p = padw3(params["w1"], Cpi, Cpo)
    w2p = padw3(params["w2"], Cpo, Cpo)
    g1, be1 = padc(params["g1"], Cpo), padc(params["beta1"], Cpo)
    g2, be2 = padc(params["g2"], Cpo), padc(params["beta2"], Cpo)

    wd_p = scale_d = shift_d = None
    if has_ds:
        wd_p = jnp.pad(params["wd"], ((0, Cpi - Cin), (0, Cpo - Cout))
                       ).astype(jnp.bfloat16)
        gd, bed = padc(params["gd"], Cpo), padc(params["betad"], Cpo)

    # ---- conv1 (+ downsample stats), bn1 fold, relu -------------------------
    if has_ds:
        y1, st1, dst = _conv3x3x3(xp1, w1p, mask, H=H, W=W, wd=wd_p)
        scale_d, shift_d = _bn_scale_shift(dst, gd, bed, M)
    else:
        y1, st1 = _conv3x3x3(xp1, w1p, mask, H=H, W=W)
    scale1, shift1 = _bn_scale_shift(st1, g1, be1, M)
    out1 = _bn_relu(y1, scale1, shift1)

    # re-pad out1 for conv2 (drop garbage cols, zero halo) — cheap XLA glue
    out1 = out1.reshape(N, D, H, Wp, Cpo)[:, :, :, :W, :]
    xp2 = jnp.pad(out1, ((0, 0), (1, 1), (1, 2), (1, 1), (0, 0)))
    xp2 = xp2.reshape(N, D + 2, (H + 3) * Wp, Cpo)

    # ---- conv2, bn2 fold, fused residual/downsample add + relu --------------
    y2, st2 = _conv3x3x3(xp2, w2p, mask, H=H, W=W)
    scale2, shift2 = _bn_scale_shift(st2, g2, be2, M)
    out = _finalize(y2, x_ident, scale2, shift2, wd=wd_p, sd=scale_d, bd=shift_d)

    # TODO(synk): BatchNorm running_mean/running_var buffer updates (a training
    # side effect) are not emitted; the forward output only uses batch stats.

    # ---- layout glue back to NCDHW ------------------------------------------
    out = out.reshape(N, D, H, Wp, Cpo)[:, :, :, :W, :Cout]
    return jnp.transpose(out, (0, 4, 1, 2, 3))


# ---------------------------------------------------------------------------
# Pure-JAX reference (f32, includes conv biases) for the correctness check.
# ---------------------------------------------------------------------------
def _ref_block(x, params):
    def conv3d(x, w_oidhw, b):
        pad = w_oidhw.shape[2] // 2
        y = jax.lax.conv_general_dilated(
            x, w_oidhw, (1, 1, 1), [(pad, pad)] * 3,
            dimension_numbers=("NCDHW", "OIDHW", "NCDHW"),
            precision=jax.lax.Precision.HIGHEST)
        return y + b.reshape(1, -1, 1, 1, 1)

    def bn(y, g, beta):
        mean = y.mean(axis=(0, 2, 3, 4), keepdims=True)
        var = ((y - mean) ** 2).mean(axis=(0, 2, 3, 4), keepdims=True)
        return (g.reshape(1, -1, 1, 1, 1) * (y - mean) * jax.lax.rsqrt(var + EPS)
                + beta.reshape(1, -1, 1, 1, 1))

    w1 = jnp.transpose(params["w1"], (4, 3, 0, 1, 2))
    w2 = jnp.transpose(params["w2"], (4, 3, 0, 1, 2))
    out = jnp.maximum(bn(conv3d(x, w1, params["b1"]), params["g1"], params["beta1"]), 0.0)
    out = bn(conv3d(out, w2, params["b2"]), params["g2"], params["beta2"])
    if "wd" in params:
        wd = params["wd"].T[:, :, None, None, None]
        identity = bn(conv3d(x, wd, params["bd"]), params["gd"], params["betad"])
    else:
        identity = x
    return jnp.maximum(out + identity, 0.0)


# ---------------------------------------------------------------------------
if __name__ == "__main__":
    N, D, H, W = 2, 8, 8, 8

    def make_params(key, cin, cout, with_ds):
        ks = jax.random.split(key, 12)
        p = {
            "w1": 0.1 * jax.random.normal(ks[0], (3, 3, 3, cin, cout), jnp.float32),
            "b1": 0.1 * jax.random.normal(ks[1], (cout,), jnp.float32),
            "g1": 1.0 + 0.1 * jax.random.normal(ks[2], (cout,), jnp.float32),
            "beta1": 0.1 * jax.random.normal(ks[3], (cout,), jnp.float32),
            "w2": 0.1 * jax.random.normal(ks[4], (3, 3, 3, cout, cout), jnp.float32),
            "b2": 0.1 * jax.random.normal(ks[5], (cout,), jnp.float32),
            "g2": 1.0 + 0.1 * jax.random.normal(ks[6], (cout,), jnp.float32),
            "beta2": 0.1 * jax.random.normal(ks[7], (cout,), jnp.float32),
        }
        if with_ds:
            p.update({
                "wd": 0.1 * jax.random.normal(ks[8], (cin, cout), jnp.float32),
                "bd": 0.1 * jax.random.normal(ks[9], (cout,), jnp.float32),
                "gd": 1.0 + 0.1 * jax.random.normal(ks[10], (cout,), jnp.float32),
                "betad": 0.1 * jax.random.normal(ks[11], (cout,), jnp.float32),
            })
        return p

    run = jax.jit(residual_block_3d)

    key = jax.random.PRNGKey(0)
    k_p, k_x, k_p2, k_x2 = jax.random.split(key, 4)

    # Case 1: in_channels != out_channels (downsample path exercised).
    params = make_params(k_p, 4, 8, True)
    x = jax.random.normal(k_x, (N, 4, D, H, W), jnp.float32)
    out = jax.block_until_ready(run(x, params))
    ref = jax.block_until_ready(_ref_block(x, params))
    # bf16 MXU operands through two chained convs + BN: tolerance sized for that.
    np.testing.assert_allclose(np.asarray(out), np.asarray(ref),
                               rtol=3e-2, atol=3e-2)
    assert float(jnp.mean(jnp.abs(out - ref))) < 5e-3

    # Case 2: in_channels == out_channels (identity shortcut).
    params2 = make_params(k_p2, 8, 8, False)
    x2 = jax.random.normal(k_x2, (N, 8, D, H, W), jnp.float32)
    out2 = jax.block_until_ready(run(x2, params2))
    ref2 = jax.block_until_ready(_ref_block(x2, params2))
    np.testing.assert_allclose(np.asarray(out2), np.asarray(ref2),
                               rtol=3e-2, atol=3e-2)
    assert float(jnp.mean(jnp.abs(out2 - ref2))) < 5e-3

    print("KERNEL_OK")
</pallas_src>

<mosaic_0001>
module attributes {stable_mosaic.version = 11 : i64} {
  func.func @_conv_tap_kernel(%arg0: i32, %arg1: i32, %arg2: i32, %arg3: memref<1x1x110x128xf32, #tpu.memory_space<vmem>>, %arg4: memref<1x3x3x128x128xbf16, #tpu.memory_space<vmem>>, %arg5: memref<80x128xf32, #tpu.memory_space<vmem>>, %arg6: memref<128x128xbf16, #tpu.memory_space<vmem>>, %arg7: memref<1x1x80x128xf32, #tpu.memory_space<vmem>>, %arg8: memref<1x1x2x128xf32, #tpu.memory_space<vmem>>, %arg9: memref<1x1x2x128xf32, #tpu.memory_space<vmem>>, %arg10: memref<80x128xf32, #tpu.memory_space<vmem>>) attributes {dimension_semantics = [#tpu.dimension_semantics<parallel>, #tpu.dimension_semantics<parallel>, #tpu.dimension_semantics<arbitrary>], iteration_bounds = array<i64: 2, 8, 3>, scalar_prefetch = 0 : i64, scratch_operands = 1 : i64, tpu.core_type = #tpu.core_type<tc>, window_params = [{transform_indices = @transform_0, window_bounds = array<i64: 1, 1, 110, 128>}, {transform_indices = @transform_1, window_bounds = array<i64: 1, 3, 3, 128, 128>}, {pipeline_mode = #tpu.pipeline_mode<synchronous>, transform_indices = @transform_2, window_bounds = array<i64: 80, 128>}, {pipeline_mode = #tpu.pipeline_mode<synchronous>, transform_indices = @transform_3, window_bounds = array<i64: 128, 128>}, {transform_indices = @transform_4, window_bounds = array<i64: 1, 1, 80, 128>}, {transform_indices = @transform_5, window_bounds = array<i64: 1, 1, 2, 128>}, {transform_indices = @transform_6, window_bounds = array<i64: 1, 1, 2, 128>}]} {
    %c0_i32 = arith.constant 0 : i32
    %0 = arith.cmpi eq, %arg2, %c0_i32 : i32
    %1 = arith.extui %0 : i1 to i32
    %c0_i32_0 = arith.constant 0 : i32
    %2 = arith.cmpi ne, %1, %c0_i32_0 : i32
    scf.if %2 {
      %cst_87 = arith.constant 0.000000e+00 : f32
      %74 = vector.broadcast %cst_87 : f32 to vector<80x128xf32>
      %c0_88 = arith.constant 0 : index
      %c0_89 = arith.constant 0 : index
      %75 = vector.load %arg10[%c0_88, %c0_89] : memref<80x128xf32, #tpu.memory_space<vmem>>, vector<80x128xf32>
      tpu.vector_store %arg10[%c0_88, %c0_89], %74 {strides = array<i32>} : memref<80x128xf32, #tpu.memory_space<vmem>>, vector<80x128xf32>,
    } else {
    }
    %c0 = arith.constant 0 : index
    %c0_1 = arith.constant 0 : index
    %c0_2 = arith.constant 0 : index
    %c0_3 = arith.constant 0 : index
    %3 = vector.load %arg3[%c0, %c0_1, %c0_2, %c0_3] : memref<1x1x110x128xf32, #tpu.memory_space<vmem>>, vector<1x1x80x128xf32>
    %4 = vector.shape_cast %3 : vector<1x1x80x128xf32> to vector<80x128xf32>
    %5 = arith.truncf %4 : vector<80x128xf32> to vector<80x128xbf16>
    %c0_4 = arith.constant 0 : index
    %c0_5 = arith.constant 0 : index
    %c0_6 = arith.constant 0 : index
    %c0_7 = arith.constant 0 : index
    %c0_8 = arith.constant 0 : index
    %6 = vector.load %arg4[%c0_4, %c0_5, %c0_6, %c0_7, %c0_8] : memref<1x3x3x128x128xbf16, #tpu.memory_space<vmem>>, vector<1x1x1x128x128xbf16>
    %7 = vector.shape_cast %6 : vector<1x1x1x128x128xbf16> to vector<128x128xbf16>
    %cst = arith.constant dense<0.000000e+00> : vector<80x128xf32>
    %8 = tpu.matmul %5, %7, %cst {dimension_numbers = #tpu.dot_dimension_numbers<[1], [0], [0], [1], [0, 0, 1, 1], [], []>} : vector<80x128xbf16>, vector<128x128xbf16>, vector<80x128xf32> -> vector<80x128xf32>
    %c0_9 = arith.constant 0 : index
    %c0_10 = arith.constant 0 : index
    %c1 = arith.constant 1 : index
    %c0_11 = arith.constant 0 : index
    %9 = vector.load %arg3[%c0_9, %c0_10, %c1, %c0_11] : memref<1x1x110x128xf32, #tpu.memory_space<vmem>>, vector<1x1x80x128xf32>
    %10 = vector.shape_cast %9 : vector<1x1x80x128xf32> to vector<80x128xf32>
    %11 = arith.truncf %10 : vector<80x128xf32> to vector<80x128xbf16>
    %c0_12 = arith.constant 0 : index
    %c0_13 = arith.constant 0 : index
    %c1_14 = arith.constant 1 : index
    %c0_15 = arith.constant 0 : index
    %c0_16 = arith.constant 0 : index
    %12 = vector.load %arg4[%c0_12, %c0_13, %c1_14, %c0_15, %c0_16] : memref<1x3x3x128x128xbf16, #tpu.memory_space<vmem>>, vector<1x1x1x128x128xbf16>
    %13 = vector.shape_cast %12 : vector<1x1x1x128x128xbf16> to vector<128x128xbf16>
    %cst_17 = arith.constant dense<0.000000e+00> : vector<80x128xf32>
    %14 = tpu.matmul %11, %13, %cst_17 {dimension_numbers = #tpu.dot_dimension_numbers<[1], [0], [0], [1], [0, 0, 1, 1], [], []>} : vector<80x128xbf16>, vector<128x128xbf16>, vector<80x128xf32> -> vector<80x128xf32>
    %15 = arith.addf %8, %14 : vector<80x128xf32>
    %c0_18 = arith.constant 0 : index
    %c0_19 = arith.constant 0 : index
    %c2 = arith.constant 2 : index
    %c0_20 = arith.constant 0 : index
    %16 = vector.load %arg3[%c0_18, %c0_19, %c2, %c0_20] : memref<1x1x110x128xf32, #tpu.memory_space<vmem>>, vector<1x1x80x128xf32>
    %17 = vector.shape_cast %16 : vector<1x1x80x128xf32> to vector<80x128xf32>
    %18 = arith.truncf %17 : vector<80x128xf32> to vector<80x128xbf16>
    %c0_21 = arith.constant 0 : index
    %c0_22 = arith.constant 0 : index
    %c2_23 = arith.constant 2 : index
    %c0_24 = arith.constant 0 : index
    %c0_25 = arith.constant 0 : index
    %19 = vector.load %arg4[%c0_21, %c0_22, %c2_23, %c0_24, %c0_25] : memref<1x3x3x128x128xbf16, #tpu.memory_space<vmem>>, vector<1x1x1x128x128xbf16>
    %20 = vector.shape_cast %19 : vector<1x1x1x128x128xbf16> to vector<128x128xbf16>
    %cst_26 = arith.constant dense<0.000000e+00> : vector<80x128xf32>
    %21 = tpu.matmul %18, %20, %cst_26 {dimension_numbers = #tpu.dot_dimension_numbers<[1], [0], [0], [1], [0, 0, 1, 1], [], []>} : vector<80x128xbf16>, vector<128x128xbf16>, vector<80x128xf32> -> vector<80x128xf32>
    %22 = arith.addf %15, %21 : vector<80x128xf32>
    %c0_27 = arith.constant 0 : index
    %c0_28 = arith.constant 0 : index
    %c10 = arith.constant 10 : index
    %c0_29 = arith.constant 0 : index
    %23 = vector.load %arg3[%c0_27, %c0_28, %c10, %c0_29] : memref<1x1x110x128xf32, #tpu.memory_space<vmem>>, vector<1x1x80x128xf32>
    %24 = vector.shape_cast %23 : vector<1x1x80x128xf32> to vector<80x128xf32>
    %25 = arith.truncf %24 : vector<80x128xf32> to vector<80x128xbf16>
    %c0_30 = arith.constant 0 : index
    %c1_31 = arith.constant 1 : index
    %c0_32 = arith.constant 0 : index
    %c0_33 = arith.constant 0 : index
    %c0_34 = arith.constant 0 : index
    %26 = vector.load %arg4[%c0_30, %c1_31, %c0_32, %c0_33, %c0_34] : memref<1x3x3x128x128xbf16, #tpu.memory_space<vmem>>, vector<1x1x1x128x128xbf16>
    %27 = vector.shape_cast %26 : vector<1x1x1x128x128xbf16> to vector<128x128xbf16>
    %cst_35 = arith.constant dense<0.000000e+00> : vector<80x128xf32>
    %28 = tpu.matmul %25, %27, %cst_35 {dimension_numbers = #tpu.dot_dimension_numbers<[1], [0], [0], [1], [0, 0, 1, 1], [], []>} : vector<80x128xbf16>, vector<128x128xbf16>, vector<80x128xf32> -> vector<80x128xf32>
    %29 = arith.addf %22, %28 : vector<80x128xf32>
    %c0_36 = arith.constant 0 : index
    %c0_37 = arith.constant 0 : index
    %c11 = arith.constant 11 : index
    %c0_38 = arith.constant 0 : index
    %30 = vector.load %arg3[%c0_36, %c0_37, %c11, %c0_38] : memref<1x1x110x128xf32, #tpu.memory_space<vmem>>, vector<1x1x80x128xf32>
    %31 = vector.shape_cast %30 : vector<1x1x80x128xf32> to vector<80x128xf32>
    %32 = arith.truncf %31 : vector<80x128xf32> to vector<80x128xbf16>
    %c0_39 = arith.constant 0 : index
    %c1_40 = arith.constant 1 : index
    %c1_41 = arith.constant 1 : index
    %c0_42 = arith.constant 0 : index
    %c0_43 = arith.constant 0 : index
    %33 = vector.load %arg4[%c0_39, %c1_40, %c1_41, %c0_42, %c0_43] : memref<1x3x3x128x128xbf16, #tpu.memory_space<vmem>>, vector<1x1x1x128x128xbf16>
    %34 = vector.shape_cast %33 : vector<1x1x1x128x128xbf16> to vector<128x128xbf16>
    %cst_44 = arith.constant dense<0.000000e+00> : vector<80x128xf32>
    %35 = tpu.matmul %32, %34, %cst_44 {dimension_numbers = #tpu.dot_dimension_numbers<[1], [0], [0], [1], [0, 0, 1, 1], [], []>} : vector<80x128xbf16>, vector<128x128xbf16>, vector<80x128xf32> -> vector<80x128xf32>
    %36 = arith.addf %29, %35 : vector<80x128xf32>
    %c0_45 = arith.constant 0 : index
    %c0_46 = arith.constant 0 : index
    %c12 = arith.constant 12 : index
    %c0_47 = arith.constant 0 : index
    %37 = vector.load %arg3[%c0_45, %c0_46, %c12, %c0_47] : memref<1x1x110x128xf32, #tpu.memory_space<vmem>>, vector<1x1x80x128xf32>
    %38 = vector.shape_cast %37 : vector<1x1x80x128xf32> to vector<80x128xf32>
    %39 = arith.truncf %38 : vector<80x128xf32> to vector<80x128xbf16>
    %c0_48 = arith.constant 0 : index
    %c1_49 = arith.constant 1 : index
    %c2_50 = arith.constant 2 : index
    %c0_51 = arith.constant 0 : index
    %c0_52 = arith.constant 0 : index
    %40 = vector.load %arg4[%c0_48, %c1_49, %c2_50, %c0_51, %c0_52] : memref<1x3x3x128x128xbf16, #tpu.memory_space<vmem>>, vector<1x1x1x128x128xbf16>
    %41 = vector.shape_cast %40 : vector<1x1x1x128x128xbf16> to vector<128x128xbf16>
    %cst_53 = arith.constant dense<0.000000e+00> : vector<80x128xf32>
    %42 = tpu.matmul %39, %41, %cst_53 {dimension_numbers = #tpu.dot_dimension_numbers<[1], [0], [0], [1], [0, 0, 1, 1], [], []>} : vector<80x128xbf16>, vector<128x128xbf16>, vector<80x128xf32> -> vector<80x128xf32>
    %43 = arith.addf %36, %42 : vector<80x128xf32>
    %c0_54 = arith.constant 0 : index
    %c0_55 = arith.constant 0 : index
    %c20 = arith.constant 20 : index
    %c0_56 = arith.constant 0 : index
    %44 = vector.load %arg3[%c0_54, %c0_55, %c20, %c0_56] : memref<1x1x110x128xf32, #tpu.memory_space<vmem>>, vector<1x1x80x128xf32>
    %45 = vector.shape_cast %44 : vector<1x1x80x128xf32> to vector<80x128xf32>
    %46 = arith.truncf %45 : vector<80x128xf32> to vector<80x128xbf16>
    %c0_57 = arith.constant 0 : index
    %c2_58 = arith.constant 2 : index
    %c0_59 = arith.constant 0 : index
    %c0_60 = arith.constant 0 : index
    %c0_61 = arith.constant 0 : index
    %47 = vector.load %arg4[%c0_57, %c2_58, %c0_59, %c0_60, %c0_61] : memref<1x3x3x128x128xbf16, #tpu.memory_space<vmem>>, vector<1x1x1x128x128xbf16>
    %48 = vector.shape_cast %47 : vector<1x1x1x128x128xbf16> to vector<128x128xbf16>
    %cst_62 = arith.constant dense<0.000000e+00> : vector<80x128xf32>
    %49 = tpu.matmul %46, %48, %cst_62 {dimension_numbers = #tpu.dot_dimension_numbers<[1], [0], [0], [1], [0, 0, 1, 1], [], []>} : vector<80x128xbf16>, vector<128x128xbf16>, vector<80x128xf32> -> vector<80x128xf32>
    %50 = arith.addf %43, %49 : vector<80x128xf32>
    %c0_63 = arith.constant 0 : index
    %c0_64 = arith.constant 0 : index
    %c21 = arith.constant 21 : index
    %c0_65 = arith.constant 0 : index
    %51 = vector.load %arg3[%c0_63, %c0_64, %c21, %c0_65] : memref<1x1x110x128xf32, #tpu.memory_space<vmem>>, vector<1x1x80x128xf32>
    %52 = vector.shape_cast %51 : vector<1x1x80x128xf32> to vector<80x128xf32>
    %53 = arith.truncf %52 : vector<80x128xf32> to vector<80x128xbf16>
    %c0_66 = arith.constant 0 : index
    %c2_67 = arith.constant 2 : index
    %c1_68 = arith.constant 1 : index
    %c0_69 = arith.constant 0 : index
    %c0_70 = arith.constant 0 : index
    %54 = vector.load %arg4[%c0_66, %c2_67, %c1_68, %c0_69, %c0_70] : memref<1x3x3x128x128xbf16, #tpu.memory_space<vmem>>, vector<1x1x1x128x128xbf16>
    %55 = vector.shape_cast %54 : vector<1x1x1x128x128xbf16> to vector<128x128xbf16>
    %cst_71 = arith.constant dense<0.000000e+00> : vector<80x128xf32>
    %56 = tpu.matmul %53, %55, %cst_71 {dimension_numbers = #tpu.dot_dimension_numbers<[1], [0], [0], [1], [0, 0, 1, 1], [], []>} : vector<80x128xbf16>, vector<128x128xbf16>, vector<80x128xf32> -> vector<80x128xf32>
    %57 = arith.addf %50, %56 : vector<80x128xf32>
    %c0_72 = arith.constant 0 : index
    %c0_73 = arith.constant 0 : index
    %c22 = arith.constant 22 : index
    %c0_74 = arith.constant 0 : index
    %58 = vector.load %arg3[%c0_72, %c0_73, %c22, %c0_74] : memref<1x1x110x128xf32, #tpu.memory_space<vmem>>, vector<1x1x80x128xf32>
    %59 = vector.shape_cast %58 : vector<1x1x80x128xf32> to vector<80x128xf32>
    %60 = arith.truncf %59 : vector<80x128xf32> to vector<80x128xbf16>
    %c0_75 = arith.constant 0 : index
    %c2_76 = arith.constant 2 : index
    %c2_77 = arith.constant 2 : index
    %c0_78 = arith.constant 0 : index
    %c0_79 = arith.constant 0 : index
    %61 = vector.load %arg4[%c0_75, %c2_76, %c2_77, %c0_78, %c0_79] : memref<1x3x3x128x128xbf16, #tpu.memory_space<vmem>>, vector<1x1x1x128x128xbf16>
    %62 = vector.shape_cast %61 : vector<1x1x1x128x128xbf16> to vector<128x128xbf16>
    %cst_80 = arith.constant dense<0.000000e+00> : vector<80x128xf32>
    %63 = tpu.matmul %60, %62, %cst_80 {dimension_numbers = #tpu.dot_dimension_numbers<[1], [0], [0], [1], [0, 0, 1, 1], [], []>} : vector<80x128xbf16>, vector<128x128xbf16>, vector<80x128xf32> -> vector<80x128xf32>
    %64 = arith.addf %57, %63 : vector<80x128xf32>
    %c0_81 = arith.constant 0 : index
    %c0_82 = arith.constant 0 : index
    %65 = vector.load %arg10[%c0_81, %c0_82] : memref<80x128xf32, #tpu.memory_space<vmem>>, vector<80x128xf32>
    %66 = arith.addf %65, %64 : vector<80x128xf32>
    %c0_83 = arith.constant 0 : index
    %c0_84 = arith.constant 0 : index
    %67 = vector.load %arg10[%c0_83, %c0_84] : memref<80x128xf32, #tpu.memory_space<vmem>>, vector<80x128xf32>
    tpu.vector_store %arg10[%c0_83, %c0_84], %66 {strides = array<i32>} : memref<80x128xf32, #tpu.memory_space<vmem>>, vector<80x128xf32>,
    %c1_i32 = arith.constant 1 : i32
    %68 = arith.cmpi eq, %arg2, %c1_i32 : i32
    %69 = arith.extui %68 : i1 to i32
    %c0_i32_85 = arith.constant 0 : i32
    %70 = arith.cmpi ne, %69, %c0_i32_85 : i32
    scf.if %70 {
      %c0_87 = arith.constant 0 : index
      %c0_88 = arith.constant 0 : index
      %c11_89 = arith.constant 11 : index
      %c0_90 = arith.constant 0 : index
      %74 = vector.load %arg3[%c0_87, %c0_88, %c11_89, %c0_90] : memref<1x1x110x128xf32, #tpu.memory_space<vmem>>, vector<1x1x80x128xf32>
      %75 = vector.shape_cast %74 : vector<1x1x80x128xf32> to vector<80x128xf32>
      %76 = arith.truncf %75 : vector<80x128xf32> to vector<80x128xbf16>
      %c0_91 = arith.constant 0 : index
      %c0_92 = arith.constant 0 : index
      %77 = vector.load %arg6[%c0_91, %c0_92] : memref<128x128xbf16, #tpu.memory_space<vmem>>, vector<128x128xbf16>
      %cst_93 = arith.constant dense<0.000000e+00> : vector<80x128xf32>
      %78 = tpu.matmul %76, %77, %cst_93 {dimension_numbers = #tpu.dot_dimension_numbers<[1], [0], [0], [1], [0, 0, 1, 1], [], []>} : vector<80x128xbf16>, vector<128x128xbf16>, vector<80x128xf32> -> vector<80x128xf32>
      %c0_94 = arith.constant 0 : index
      %c0_95 = arith.constant 0 : index
      %79 = vector.load %arg5[%c0_94, %c0_95] : memref<80x128xf32, #tpu.memory_space<vmem>>, vector<80x128xf32>
      %80 = arith.mulf %78, %79 : vector<80x128xf32>
      %cst_96 = arith.constant dense<0.000000e+00> : vector<128xf32>
      %81 = vector.multi_reduction <add>, %80, %cst_96 [0] : vector<80x128xf32> to vector<128xf32>
      %82 = vector.shape_cast %81 : vector<128xf32> to vector<1x128xf32>
      %c0_97 = arith.constant 0 : index
      %c0_98 = arith.constant 0 : index
      %c0_99 = arith.constant 0 : index
      %c0_100 = arith.constant 0 : index
      %83 = vector.load %arg9[%c0_97, %c0_98, %c0_99, %c0_100] : memref<1x1x2x128xf32, #tpu.memory_space<vmem>>, vector<1x1x1x128xf32>
      %84 = vector.shape_cast %83 : vector<1x1x1x128xf32> to vector<1x128xf32>
      %85 = vector.shape_cast %82 : vector<1x128xf32> to vector<1x1x1x128xf32>
      tpu.vector_store %arg9[%c0_97, %c0_98, %c0_99, %c0_100], %85 {strides = array<i32>} : memref<1x1x2x128xf32, #tpu.memory_space<vmem>>, vector<1x1x1x128xf32>,
      %86 = arith.mulf %80, %78 : vector<80x128xf32>
      %cst_101 = arith.constant dense<0.000000e+00> : vector<128xf32>
      %87 = vector.multi_reduction <add>, %86, %cst_101 [0] : vector<80x128xf32> to vector<128xf32>
      %88 = vector.shape_cast %87 : vector<128xf32> to vector<1x128xf32>
      %c0_102 = arith.constant 0 : index
      %c0_103 = arith.constant 0 : index
      %c1_104 = arith.constant 1 : index
      %c0_105 = arith.constant 0 : index
      %89 = vector.load %arg9[%c0_102, %c0_103, %c1_104, %c0_105] : memref<1x1x2x128xf32, #tpu.memory_space<vmem>>, vector<1x1x1x128xf32>
      %90 = vector.shape_cast %89 : vector<1x1x1x128xf32> to vector<1x128xf32>
      %91 = vector.shape_cast %88 : vector<1x128xf32> to vector<1x1x1x128xf32>
      tpu.vector_store %arg9[%c0_102, %c0_103, %c1_104, %c0_105], %91 {strides = array<i32>} : memref<1x1x2x128xf32, #tpu.memory_space<vmem>>, vector<1x1x1x128xf32>,
    } else {
    }
    %c2_i32 = arith.constant 2 : i32
    %71 = arith.cmpi eq, %arg2, %c2_i32 : i32
    %72 = arith.extui %71 : i1 to i32
    %c0_i32_86 = arith.constant 0 : i32
    %73 = arith.cmpi ne, %72, %c0_i32_86 : i32
    scf.if %73 {
      %c0_87 = arith.constant 0 : index
      %c0_88 = arith.constant 0 : index
      %74 = vector.load %arg10[%c0_87, %c0_88] : memref<80x128xf32, #tpu.memory_space<vmem>>, vector<80x128xf32>
      %c0_89 = arith.constant 0 : index
      %c0_90 = arith.constant 0 : index
      %c0_91 = arith.constant 0 : index
      %c0_92 = arith.constant 0 : index
      %75 = vector.load %arg7[%c0_89, %c0_90, %c0_91, %c0_92] : memref<1x1x80x128xf32, #tpu.memory_space<vmem>>, vector<1x1x80x128xf32>
      %76 = vector.shape_cast %75 : vector<1x1x80x128xf32> to vector<80x128xf32>
      %77 = vector.shape_cast %74 : vector<80x128xf32> to vector<1x1x80x128xf32>
      tpu.vector_store %arg7[%c0_89, %c0_90, %c0_91, %c0_92], %77 {strides = array<i32>} : memref<1x1x80x128xf32, #tpu.memory_space<vmem>>, vector<1x1x80x128xf32>,
      %c0_93 = arith.constant 0 : index
      %c0_94 = arith.constant 0 : index
      %78 = vector.load %arg5[%c0_93, %c0_94] : memref<80x128xf32, #tpu.memory_space<vmem>>, vector<80x128xf32>
      %79 = arith.mulf %74, %78 : vector<80x128xf32>
      %cst_95 = arith.constant dense<0.000000e+00> : vector<128xf32>
      %80 = vector.multi_reduction <add>, %79, %cst_95 [0] : vector<80x128xf32> to vector<128xf32>
      %81 = vector.shape_cast %80 : vector<128xf32> to vector<1x128xf32>
      %c0_96 = arith.constant 0 : index
      %c0_97 = arith.constant 0 : index
      %c0_98 = arith.constant 0 : index
      %c0_99 = arith.constant 0 : index
      %82 = vector.load %arg8[%c0_96, %c0_97, %c0_98, %c0_99] : memref<1x1x2x128xf32, #tpu.memory_space<vmem>>, vector<1x1x1x128xf32>
      %83 = vector.shape_cast %82 : vector<1x1x1x128xf32> to vector<1x128xf32>
      %84 = vector.shape_cast %81 : vector<1x128xf32> to vector<1x1x1x128xf32>
      tpu.vector_store %arg8[%c0_96, %c0_97, %c0_98, %c0_99], %84 {strides = array<i32>} : memref<1x1x2x128xf32, #tpu.memory_space<vmem>>, vector<1x1x1x128xf32>,
      %85 = arith.mulf %79, %74 : vector<80x128xf32>
      %cst_100 = arith.constant dense<0.000000e+00> : vector<128xf32>
      %86 = vector.multi_reduction <add>, %85, %cst_100 [0] : vector<80x128xf32> to vector<128xf32>
      %87 = vector.shape_cast %86 : vector<128xf32> to vector<1x128xf32>
      %c0_101 = arith.constant 0 : index
      %c0_102 = arith.constant 0 : index
      %c1_103 = arith.constant 1 : index
      %c0_104 = arith.constant 0 : index
      %88 = vector.load %arg8[%c0_101, %c0_102, %c1_103, %c0_104] : memref<1x1x2x128xf32, #tpu.memory_space<vmem>>, vector<1x1x1x128xf32>
      %89 = vector.shape_cast %88 : vector<1x1x1x128xf32> to vector<1x128xf32>
      %90 = vector.shape_cast %87 : vector<1x128xf32> to vector<1x1x1x128xf32>
      tpu.vector_store %arg8[%c0_101, %c0_102, %c1_103, %c0_104], %90 {strides = array<i32>} : memref<1x1x2x128xf32, #tpu.memory_space<vmem>>, vector<1x1x1x128xf32>,
    } else {
    }
    return
  }
  func.func @transform_0(%arg0: i32, %arg1: i32, %arg2: i32) -> (i32, i32, i32, i32) {
    %0 = arith.addi %arg1, %arg2 : i32
    %c0_i32 = arith.constant 0 : i32
    %c0_i32_0 = arith.constant 0 : i32
    %c0_i32_1 = arith.constant 0 : i32
    return %arg0, %0, %c0_i32, %c0_i32_0 : i32, i32, i32, i32
  }
  func.func @transform_1(%arg0: i32, %arg1: i32, %arg2: i32) -> (i32, i32, i32, i32, i32) {
    %c0_i32 = arith.constant 0 : i32
    %c0_i32_0 = arith.constant 0 : i32
    %c0_i32_1 = arith.constant 0 : i32
    %c0_i32_2 = arith.constant 0 : i32
    %c0_i32_3 = arith.constant 0 : i32
    return %arg2, %c0_i32, %c0_i32_0, %c0_i32_1, %c0_i32_2 : i32, i32, i32, i32, i32
  }
  func.func @transform_2(%arg0: i32, %arg1: i32, %arg2: i32) -> (i32, i32) {
    %c0_i32 = arith.constant 0 : i32
    %c0_i32_0 = arith.constant 0 : i32
    %c0_i32_1 = arith.constant 0 : i32
    return %c0_i32, %c0_i32_0 : i32, i32
  }
  func.func @transform_3(%arg0: i32, %arg1: i32, %arg2: i32) -> (i32, i32) {
    %c0_i32 = arith.constant 0 : i32
    %c0_i32_0 = arith.constant 0 : i32
    %c0_i32_1 = arith.constant 0 : i32
    return %c0_i32, %c0_i32_0 : i32, i32
  }
  func.func @transform_4(%arg0: i32, %arg1: i32, %arg2: i32) -> (i32, i32, i32, i32) {
    %c0_i32 = arith.constant 0 : i32
    %c0_i32_0 = arith.constant 0 : i32
    %c0_i32_1 = arith.constant 0 : i32
    return %arg0, %arg1, %c0_i32, %c0_i32_0 : i32, i32, i32, i32
  }
  func.func @transform_5(%arg0: i32, %arg1: i32, %arg2: i32) -> (i32, i32, i32, i32) {
    %c0_i32 = arith.constant 0 : i32
    %c0_i32_0 = arith.constant 0 : i32
    %c0_i32_1 = arith.constant 0 : i32
    return %arg0, %arg1, %c0_i32, %c0_i32_0 : i32, i32, i32, i32
  }
  func.func @transform_6(%arg0: i32, %arg1: i32, %arg2: i32) -> (i32, i32, i32, i32) {
    %c0_i32 = arith.constant 0 : i32
    %c0_i32_0 = arith.constant 0 : i32
    %c0_i32_1 = arith.constant 0 : i32
    return %arg0, %arg1, %c0_i32, %c0_i32_0 : i32, i32, i32, i32
  }
}

module attributes {stable_mosaic.version = 11 : i64} {
  func.func @_bn_relu_kernel(%arg0: i32, %arg1: i32, %arg2: memref<1x1x80x128xf32, #tpu.memory_space<vmem>>, %arg3: memref<1x128xf32, #tpu.memory_space<vmem>>, %arg4: memref<1x128xf32, #tpu.memory_space<vmem>>, %arg5: memref<1x1x80x128xf32, #tpu.memory_space<vmem>>) attributes {dimension_semantics = [#tpu.dimension_semantics<parallel>, #tpu.dimension_semantics<parallel>], iteration_bounds = array<i64: 2, 8>, scalar_prefetch = 0 : i64, scratch_operands = 0 : i64, tpu.core_type = #tpu.core_type<tc>, window_params = [{transform_indices = @transform_0, window_bounds = array<i64: 1, 1, 80, 128>}, {pipeline_mode = #tpu.pipeline_mode<synchronous>, transform_indices = @transform_1, window_bounds = array<i64: 1, 128>}, {pipeline_mode = #tpu.pipeline_mode<synchronous>, transform_indices = @transform_2, window_bounds = array<i64: 1, 128>}, {transform_indices = @transform_3, window_bounds = array<i64: 1, 1, 80, 128>}]} {
    %c0 = arith.constant 0 : index
    %c0_0 = arith.constant 0 : index
    %c0_1 = arith.constant 0 : index
    %c0_2 = arith.constant 0 : index
    %0 = vector.load %arg2[%c0, %c0_0, %c0_1, %c0_2] : memref<1x1x80x128xf32, #tpu.memory_space<vmem>>, vector<1x1x80x128xf32>
    %1 = vector.shape_cast %0 : vector<1x1x80x128xf32> to vector<80x128xf32>
    %c0_3 = arith.constant 0 : index
    %c0_4 = arith.constant 0 : index
    %2 = vector.load %arg3[%c0_3, %c0_4] : memref<1x128xf32, #tpu.memory_space<vmem>>, vector<1x128xf32>
    %3 = vector.broadcast %2 : vector<1x128xf32> to vector<80x128xf32>
    %4 = arith.mulf %1, %3 : vector<80x128xf32>
    %c0_5 = arith.constant 0 : index
    %c0_6 = arith.constant 0 : index
    %5 = vector.load %arg4[%c0_5, %c0_6] : memref<1x128xf32, #tpu.memory_space<vmem>>, vector<1x128xf32>
    %6 = vector.broadcast %5 : vector<1x128xf32> to vector<80x128xf32>
    %7 = arith.addf %4, %6 : vector<80x128xf32>
    %cst = arith.constant 0.000000e+00 : f32
    %8 = vector.broadcast %cst : f32 to vector<80x128xf32>
    %9 = arith.maximumf %7, %8 : vector<80x128xf32>
    %c0_7 = arith.constant 0 : index
    %c0_8 = arith.constant 0 : index
    %c0_9 = arith.constant 0 : index
    %c0_10 = arith.constant 0 : index
    %10 = vector.load %arg5[%c0_7, %c0_8, %c0_9, %c0_10] : memref<1x1x80x128xf32, #tpu.memory_space<vmem>>, vector<1x1x80x128xf32>
    %11 = vector.shape_cast %10 : vector<1x1x80x128xf32> to vector<80x128xf32>
    %12 = vector.shape_cast %9 : vector<80x128xf32> to vector<1x1x80x128xf32>
    tpu.vector_store %arg5[%c0_7, %c0_8, %c0_9, %c0_10], %12 {strides = array<i32>} : memref<1x1x80x128xf32, #tpu.memory_space<vmem>>, vector<1x1x80x128xf32>,
    return
  }
  func.func @transform_0(%arg0: i32, %arg1: i32) -> (i32, i32, i32, i32) {
    %c0_i32 = arith.constant 0 : i32
    %c0_i32_0 = arith.constant 0 : i32
    %c0_i32_1 = arith.constant 0 : i32
    return %arg0, %arg1, %c0_i32, %c0_i32_0 : i32, i32, i32, i32
  }
  func.func @transform_1(%arg0: i32, %arg1: i32) -> (i32, i32) {
    %c0_i32 = arith.constant 0 : i32
    %c0_i32_0 = arith.constant 0 : i32
    %c0_i32_1 = arith.constant 0 : i32
    return %c0_i32, %c0_i32_0 : i32, i32
  }
  func.func @transform_2(%arg0: i32, %arg1: i32) -> (i32, i32) {
    %c0_i32 = arith.constant 0 : i32
    %c0_i32_0 = arith.constant 0 : i32
    %c0_i32_1 = arith.constant 0 : i32
    return %c0_i32, %c0_i32_0 : i32, i32
  }
  func.func @transform_3(%arg0: i32, %arg1: i32) -> (i32, i32, i32, i32) {
    %c0_i32 = arith.constant 0 : i32
    %c0_i32_0 = arith.constant 0 : i32
    %c0_i32_1 = arith.constant 0 : i32
    return %arg0, %arg1, %c0_i32, %c0_i32_0 : i32, i32, i32, i32
  }
}

module attributes {stable_mosaic.version = 11 : i64} {
  func.func @_conv_tap_kernel(%arg0: i32, %arg1: i32, %arg2: i32, %arg3: memref<1x1x110x128xf32, #tpu.memory_space<vmem>>, %arg4: memref<1x3x3x128x128xbf16, #tpu.memory_space<vmem>>, %arg5: memref<80x128xf32, #tpu.memory_space<vmem>>, %arg6: memref<1x1x80x128xf32, #tpu.memory_space<vmem>>, %arg7: memref<1x1x2x128xf32, #tpu.memory_space<vmem>>, %arg8: memref<80x128xf32, #tpu.memory_space<vmem>>) attributes {dimension_semantics = [#tpu.dimension_semantics<parallel>, #tpu.dimension_semantics<parallel>, #tpu.dimension_semantics<arbitrary>], iteration_bounds = array<i64: 2, 8, 3>, scalar_prefetch = 0 : i64, scratch_operands = 1 : i64, tpu.core_type = #tpu.core_type<tc>, window_params = [{transform_indices = @transform_0, window_bounds = array<i64: 1, 1, 110, 128>}, {transform_indices = @transform_1, window_bounds = array<i64: 1, 3, 3, 128, 128>}, {pipeline_mode = #tpu.pipeline_mode<synchronous>, transform_indices = @transform_2, window_bounds = array<i64: 80, 128>}, {transform_indices = @transform_3, window_bounds = array<i64: 1, 1, 80, 128>}, {transform_indices = @transform_4, window_bounds = array<i64: 1, 1, 2, 128>}]} {
    %c0_i32 = arith.constant 0 : i32
    %0 = arith.cmpi eq, %arg2, %c0_i32 : i32
    %1 = arith.extui %0 : i1 to i32
    %c0_i32_0 = arith.constant 0 : i32
    %2 = arith.cmpi ne, %1, %c0_i32_0 : i32
    scf.if %2 {
      %cst_86 = arith.constant 0.000000e+00 : f32
      %71 = vector.broadcast %cst_86 : f32 to vector<80x128xf32>
      %c0_87 = arith.constant 0 : index
      %c0_88 = arith.constant 0 : index
      %72 = vector.load %arg8[%c0_87, %c0_88] : memref<80x128xf32, #tpu.memory_space<vmem>>, vector<80x128xf32>
      tpu.vector_store %arg8[%c0_87, %c0_88], %71 {strides = array<i32>} : memref<80x128xf32, #tpu.memory_space<vmem>>, vector<80x128xf32>,
    } else {
    }
    %c0 = arith.constant 0 : index
    %c0_1 = arith.constant 0 : index
    %c0_2 = arith.constant 0 : index
    %c0_3 = arith.constant 0 : index
    %3 = vector.load %arg3[%c0, %c0_1, %c0_2, %c0_3] : memref<1x1x110x128xf32, #tpu.memory_space<vmem>>, vector<1x1x80x128xf32>
    %4 = vector.shape_cast %3 : vector<1x1x80x128xf32> to vector<80x128xf32>
    %5 = arith.truncf %4 : vector<80x128xf32> to vector<80x128xbf16>
    %c0_4 = arith.constant 0 : index
    %c0_5 = arith.constant 0 : index
    %c0_6 = arith.constant 0 : index
    %c0_7 = arith.constant 0 : index
    %c0_8 = arith.constant 0 : index
    %6 = vector.load %arg4[%c0_4, %c0_5, %c0_6, %c0_7, %c0_8] : memref<1x3x3x128x128xbf16, #tpu.memory_space<vmem>>, vector<1x1x1x128x128xbf16>
    %7 = vector.shape_cast %6 : vector<1x1x1x128x128xbf16> to vector<128x128xbf16>
    %cst = arith.constant dense<0.000000e+00> : vector<80x128xf32>
    %8 = tpu.matmul %5, %7, %cst {dimension_numbers = #tpu.dot_dimension_numbers<[1], [0], [0], [1], [0, 0, 1, 1], [], []>} : vector<80x128xbf16>, vector<128x128xbf16>, vector<80x128xf32> -> vector<80x128xf32>
    %c0_9 = arith.constant 0 : index
    %c0_10 = arith.constant 0 : index
    %c1 = arith.constant 1 : index
    %c0_11 = arith.constant 0 : index
    %9 = vector.load %arg3[%c0_9, %c0_10, %c1, %c0_11] : memref<1x1x110x128xf32, #tpu.memory_space<vmem>>, vector<1x1x80x128xf32>
    %10 = vector.shape_cast %9 : vector<1x1x80x128xf32> to vector<80x128xf32>
    %11 = arith.truncf %10 : vector<80x128xf32> to vector<80x128xbf16>
    %c0_12 = arith.constant 0 : index
    %c0_13 = arith.constant 0 : index
    %c1_14 = arith.constant 1 : index
    %c0_15 = arith.constant 0 : index
    %c0_16 = arith.constant 0 : index
    %12 = vector.load %arg4[%c0_12, %c0_13, %c1_14, %c0_15, %c0_16] : memref<1x3x3x128x128xbf16, #tpu.memory_space<vmem>>, vector<1x1x1x128x128xbf16>
    %13 = vector.shape_cast %12 : vector<1x1x1x128x128xbf16> to vector<128x128xbf16>
    %cst_17 = arith.constant dense<0.000000e+00> : vector<80x128xf32>
    %14 = tpu.matmul %11, %13, %cst_17 {dimension_numbers = #tpu.dot_dimension_numbers<[1], [0], [0], [1], [0, 0, 1, 1], [], []>} : vector<80x128xbf16>, vector<128x128xbf16>, vector<80x128xf32> -> vector<80x128xf32>
    %15 = arith.addf %8, %14 : vector<80x128xf32>
    %c0_18 = arith.constant 0 : index
    %c0_19 = arith.constant 0 : index
    %c2 = arith.constant 2 : index
    %c0_20 = arith.constant 0 : index
    %16 = vector.load %arg3[%c0_18, %c0_19, %c2, %c0_20] : memref<1x1x110x128xf32, #tpu.memory_space<vmem>>, vector<1x1x80x128xf32>
    %17 = vector.shape_cast %16 : vector<1x1x80x128xf32> to vector<80x128xf32>
    %18 = arith.truncf %17 : vector<80x128xf32> to vector<80x128xbf16>
    %c0_21 = arith.constant 0 : index
    %c0_22 = arith.constant 0 : index
    %c2_23 = arith.constant 2 : index
    %c0_24 = arith.constant 0 : index
    %c0_25 = arith.constant 0 : index
    %19 = vector.load %arg4[%c0_21, %c0_22, %c2_23, %c0_24, %c0_25] : memref<1x3x3x128x128xbf16, #tpu.memory_space<vmem>>, vector<1x1x1x128x128xbf16>
    %20 = vector.shape_cast %19 : vector<1x1x1x128x128xbf16> to vector<128x128xbf16>
    %cst_26 = arith.constant dense<0.000000e+00> : vector<80x128xf32>
    %21 = tpu.matmul %18, %20, %cst_26 {dimension_numbers = #tpu.dot_dimension_numbers<[1], [0], [0], [1], [0, 0, 1, 1], [], []>} : vector<80x128xbf16>, vector<128x128xbf16>, vector<80x128xf32> -> vector<80x128xf32>
    %22 = arith.addf %15, %21 : vector<80x128xf32>
    %c0_27 = arith.constant 0 : index
    %c0_28 = arith.constant 0 : index
    %c10 = arith.constant 10 : index
    %c0_29 = arith.constant 0 : index
    %23 = vector.load %arg3[%c0_27, %c0_28, %c10, %c0_29] : memref<1x1x110x128xf32, #tpu.memory_space<vmem>>, vector<1x1x80x128xf32>
    %24 = vector.shape_cast %23 : vector<1x1x80x128xf32> to vector<80x128xf32>
    %25 = arith.truncf %24 : vector<80x128xf32> to vector<80x128xbf16>
    %c0_30 = arith.constant 0 : index
    %c1_31 = arith.constant 1 : index
    %c0_32 = arith.constant 0 : index
    %c0_33 = arith.constant 0 : index
    %c0_34 = arith.constant 0 : index
    %26 = vector.load %arg4[%c0_30, %c1_31, %c0_32, %c0_33, %c0_34] : memref<1x3x3x128x128xbf16, #tpu.memory_space<vmem>>, vector<1x1x1x128x128xbf16>
    %27 = vector.shape_cast %26 : vector<1x1x1x128x128xbf16> to vector<128x128xbf16>
    %cst_35 = arith.constant dense<0.000000e+00> : vector<80x128xf32>
    %28 = tpu.matmul %25, %27, %cst_35 {dimension_numbers = #tpu.dot_dimension_numbers<[1], [0], [0], [1], [0, 0, 1, 1], [], []>} : vector<80x128xbf16>, vector<128x128xbf16>, vector<80x128xf32> -> vector<80x128xf32>
    %29 = arith.addf %22, %28 : vector<80x128xf32>
    %c0_36 = arith.constant 0 : index
    %c0_37 = arith.constant 0 : index
    %c11 = arith.constant 11 : index
    %c0_38 = arith.constant 0 : index
    %30 = vector.load %arg3[%c0_36, %c0_37, %c11, %c0_38] : memref<1x1x110x128xf32, #tpu.memory_space<vmem>>, vector<1x1x80x128xf32>
    %31 = vector.shape_cast %30 : vector<1x1x80x128xf32> to vector<80x128xf32>
    %32 = arith.truncf %31 : vector<80x128xf32> to vector<80x128xbf16>
    %c0_39 = arith.constant 0 : index
    %c1_40 = arith.constant 1 : index
    %c1_41 = arith.constant 1 : index
    %c0_42 = arith.constant 0 : index
    %c0_43 = arith.constant 0 : index
    %33 = vector.load %arg4[%c0_39, %c1_40, %c1_41, %c0_42, %c0_43] : memref<1x3x3x128x128xbf16, #tpu.memory_space<vmem>>, vector<1x1x1x128x128xbf16>
    %34 = vector.shape_cast %33 : vector<1x1x1x128x128xbf16> to vector<128x128xbf16>
    %cst_44 = arith.constant dense<0.000000e+00> : vector<80x128xf32>
    %35 = tpu.matmul %32, %34, %cst_44 {dimension_numbers = #tpu.dot_dimension_numbers<[1], [0], [0], [1], [0, 0, 1, 1], [], []>} : vector<80x128xbf16>, vector<128x128xbf16>, vector<80x128xf32> -> vector<80x128xf32>
    %36 = arith.addf %29, %35 : vector<80x128xf32>
    %c0_45 = arith.constant 0 : index
    %c0_46 = arith.constant 0 : index
    %c12 = arith.constant 12 : index
    %c0_47 = arith.constant 0 : index
    %37 = vector.load %arg3[%c0_45, %c0_46, %c12, %c0_47] : memref<1x1x110x128xf32, #tpu.memory_space<vmem>>, vector<1x1x80x128xf32>
    %38 = vector.shape_cast %37 : vector<1x1x80x128xf32> to vector<80x128xf32>
    %39 = arith.truncf %38 : vector<80x128xf32> to vector<80x128xbf16>
    %c0_48 = arith.constant 0 : index
    %c1_49 = arith.constant 1 : index
    %c2_50 = arith.constant 2 : index
    %c0_51 = arith.constant 0 : index
    %c0_52 = arith.constant 0 : index
    %40 = vector.load %arg4[%c0_48, %c1_49, %c2_50, %c0_51, %c0_52] : memref<1x3x3x128x128xbf16, #tpu.memory_space<vmem>>, vector<1x1x1x128x128xbf16>
    %41 = vector.shape_cast %40 : vector<1x1x1x128x128xbf16> to vector<128x128xbf16>
    %cst_53 = arith.constant dense<0.000000e+00> : vector<80x128xf32>
    %42 = tpu.matmul %39, %41, %cst_53 {dimension_numbers = #tpu.dot_dimension_numbers<[1], [0], [0], [1], [0, 0, 1, 1], [], []>} : vector<80x128xbf16>, vector<128x128xbf16>, vector<80x128xf32> -> vector<80x128xf32>
    %43 = arith.addf %36, %42 : vector<80x128xf32>
    %c0_54 = arith.constant 0 : index
    %c0_55 = arith.constant 0 : index
    %c20 = arith.constant 20 : index
    %c0_56 = arith.constant 0 : index
    %44 = vector.load %arg3[%c0_54, %c0_55, %c20, %c0_56] : memref<1x1x110x128xf32, #tpu.memory_space<vmem>>, vector<1x1x80x128xf32>
    %45 = vector.shape_cast %44 : vector<1x1x80x128xf32> to vector<80x128xf32>
    %46 = arith.truncf %45 : vector<80x128xf32> to vector<80x128xbf16>
    %c0_57 = arith.constant 0 : index
    %c2_58 = arith.constant 2 : index
    %c0_59 = arith.constant 0 : index
    %c0_60 = arith.constant 0 : index
    %c0_61 = arith.constant 0 : index
    %47 = vector.load %arg4[%c0_57, %c2_58, %c0_59, %c0_60, %c0_61] : memref<1x3x3x128x128xbf16, #tpu.memory_space<vmem>>, vector<1x1x1x128x128xbf16>
    %48 = vector.shape_cast %47 : vector<1x1x1x128x128xbf16> to vector<128x128xbf16>
    %cst_62 = arith.constant dense<0.000000e+00> : vector<80x128xf32>
    %49 = tpu.matmul %46, %48, %cst_62 {dimension_numbers = #tpu.dot_dimension_numbers<[1], [0], [0], [1], [0, 0, 1, 1], [], []>} : vector<80x128xbf16>, vector<128x128xbf16>, vector<80x128xf32> -> vector<80x128xf32>
    %50 = arith.addf %43, %49 : vector<80x128xf32>
    %c0_63 = arith.constant 0 : index
    %c0_64 = arith.constant 0 : index
    %c21 = arith.constant 21 : index
    %c0_65 = arith.constant 0 : index
    %51 = vector.load %arg3[%c0_63, %c0_64, %c21, %c0_65] : memref<1x1x110x128xf32, #tpu.memory_space<vmem>>, vector<1x1x80x128xf32>
    %52 = vector.shape_cast %51 : vector<1x1x80x128xf32> to vector<80x128xf32>
    %53 = arith.truncf %52 : vector<80x128xf32> to vector<80x128xbf16>
    %c0_66 = arith.constant 0 : index
    %c2_67 = arith.constant 2 : index
    %c1_68 = arith.constant 1 : index
    %c0_69 = arith.constant 0 : index
    %c0_70 = arith.constant 0 : index
    %54 = vector.load %arg4[%c0_66, %c2_67, %c1_68, %c0_69, %c0_70] : memref<1x3x3x128x128xbf16, #tpu.memory_space<vmem>>, vector<1x1x1x128x128xbf16>
    %55 = vector.shape_cast %54 : vector<1x1x1x128x128xbf16> to vector<128x128xbf16>
    %cst_71 = arith.constant dense<0.000000e+00> : vector<80x128xf32>
    %56 = tpu.matmul %53, %55, %cst_71 {dimension_numbers = #tpu.dot_dimension_numbers<[1], [0], [0], [1], [0, 0, 1, 1], [], []>} : vector<80x128xbf16>, vector<128x128xbf16>, vector<80x128xf32> -> vector<80x128xf32>
    %57 = arith.addf %50, %56 : vector<80x128xf32>
    %c0_72 = arith.constant 0 : index
    %c0_73 = arith.constant 0 : index
    %c22 = arith.constant 22 : index
    %c0_74 = arith.constant 0 : index
    %58 = vector.load %arg3[%c0_72, %c0_73, %c22, %c0_74] : memref<1x1x110x128xf32, #tpu.memory_space<vmem>>, vector<1x1x80x128xf32>
    %59 = vector.shape_cast %58 : vector<1x1x80x128xf32> to vector<80x128xf32>
    %60 = arith.truncf %59 : vector<80x128xf32> to vector<80x128xbf16>
    %c0_75 = arith.constant 0 : index
    %c2_76 = arith.constant 2 : index
    %c2_77 = arith.constant 2 : index
    %c0_78 = arith.constant 0 : index
    %c0_79 = arith.constant 0 : index
    %61 = vector.load %arg4[%c0_75, %c2_76, %c2_77, %c0_78, %c0_79] : memref<1x3x3x128x128xbf16, #tpu.memory_space<vmem>>, vector<1x1x1x128x128xbf16>
    %62 = vector.shape_cast %61 : vector<1x1x1x128x128xbf16> to vector<128x128xbf16>
    %cst_80 = arith.constant dense<0.000000e+00> : vector<80x128xf32>
    %63 = tpu.matmul %60, %62, %cst_80 {dimension_numbers = #tpu.dot_dimension_numbers<[1], [0], [0], [1], [0, 0, 1, 1], [], []>} : vector<80x128xbf16>, vector<128x128xbf16>, vector<80x128xf32> -> vector<80x128xf32>
    %64 = arith.addf %57, %63 : vector<80x128xf32>
    %c0_81 = arith.constant 0 : index
    %c0_82 = arith.constant 0 : index
    %65 = vector.load %arg8[%c0_81, %c0_82] : memref<80x128xf32, #tpu.memory_space<vmem>>, vector<80x128xf32>
    %66 = arith.addf %65, %64 : vector<80x128xf32>
    %c0_83 = arith.constant 0 : index
    %c0_84 = arith.constant 0 : index
    %67 = vector.load %arg8[%c0_83, %c0_84] : memref<80x128xf32, #tpu.memory_space<vmem>>, vector<80x128xf32>
    tpu.vector_store %arg8[%c0_83, %c0_84], %66 {strides = array<i32>} : memref<80x128xf32, #tpu.memory_space<vmem>>, vector<80x128xf32>,
    %c2_i32 = arith.constant 2 : i32
    %68 = arith.cmpi eq, %arg2, %c2_i32 : i32
    %69 = arith.extui %68 : i1 to i32
    %c0_i32_85 = arith.constant 0 : i32
    %70 = arith.cmpi ne, %69, %c0_i32_85 : i32
    scf.if %70 {
      %c0_86 = arith.constant 0 : index
      %c0_87 = arith.constant 0 : index
      %71 = vector.load %arg8[%c0_86, %c0_87] : memref<80x128xf32, #tpu.memory_space<vmem>>, vector<80x128xf32>
      %c0_88 = arith.constant 0 : index
      %c0_89 = arith.constant 0 : index
      %c0_90 = arith.constant 0 : index
      %c0_91 = arith.constant 0 : index
      %72 = vector.load %arg6[%c0_88, %c0_89, %c0_90, %c0_91] : memref<1x1x80x128xf32, #tpu.memory_space<vmem>>, vector<1x1x80x128xf32>
      %73 = vector.shape_cast %72 : vector<1x1x80x128xf32> to vector<80x128xf32>
      %74 = vector.shape_cast %71 : vector<80x128xf32> to vector<1x1x80x128xf32>
      tpu.vector_store %arg6[%c0_88, %c0_89, %c0_90, %c0_91], %74 {strides = array<i32>} : memref<1x1x80x128xf32, #tpu.memory_space<vmem>>, vector<1x1x80x128xf32>,
      %c0_92 = arith.constant 0 : index
      %c0_93 = arith.constant 0 : index
      %75 = vector.load %arg5[%c0_92, %c0_93] : memref<80x128xf32, #tpu.memory_space<vmem>>, vector<80x128xf32>
      %76 = arith.mulf %71, %75 : vector<80x128xf32>
      %cst_94 = arith.constant dense<0.000000e+00> : vector<128xf32>
      %77 = vector.multi_reduction <add>, %76, %cst_94 [0] : vector<80x128xf32> to vector<128xf32>
      %78 = vector.shape_cast %77 : vector<128xf32> to vector<1x128xf32>
      %c0_95 = arith.constant 0 : index
      %c0_96 = arith.constant 0 : index
      %c0_97 = arith.constant 0 : index
      %c0_98 = arith.constant 0 : index
      %79 = vector.load %arg7[%c0_95, %c0_96, %c0_97, %c0_98] : memref<1x1x2x128xf32, #tpu.memory_space<vmem>>, vector<1x1x1x128xf32>
      %80 = vector.shape_cast %79 : vector<1x1x1x128xf32> to vector<1x128xf32>
      %81 = vector.shape_cast %78 : vector<1x128xf32> to vector<1x1x1x128xf32>
      tpu.vector_store %arg7[%c0_95, %c0_96, %c0_97, %c0_98], %81 {strides = array<i32>} : memref<1x1x2x128xf32, #tpu.memory_space<vmem>>, vector<1x1x1x128xf32>,
      %82 = arith.mulf %76, %71 : vector<80x128xf32>
      %cst_99 = arith.constant dense<0.000000e+00> : vector<128xf32>
      %83 = vector.multi_reduction <add>, %82, %cst_99 [0] : vector<80x128xf32> to vector<128xf32>
      %84 = vector.shape_cast %83 : vector<128xf32> to vector<1x128xf32>
      %c0_100 = arith.constant 0 : index
      %c0_101 = arith.constant 0 : index
      %c1_102 = arith.constant 1 : index
      %c0_103 = arith.constant 0 : index
      %85 = vector.load %arg7[%c0_100, %c0_101, %c1_102, %c0_103] : memref<1x1x2x128xf32, #tpu.memory_space<vmem>>, vector<1x1x1x128xf32>
      %86 = vector.shape_cast %85 : vector<1x1x1x128xf32> to vector<1x128xf32>
      %87 = vector.shape_cast %84 : vector<1x128xf32> to vector<1x1x1x128xf32>
      tpu.vector_store %arg7[%c0_100, %c0_101, %c1_102, %c0_103], %87 {strides = array<i32>} : memref<1x1x2x128xf32, #tpu.memory_space<vmem>>, vector<1x1x1x128xf32>,
    } else {
    }
    return
  }
  func.func @transform_0(%arg0: i32, %arg1: i32, %arg2: i32) -> (i32, i32, i32, i32) {
    %0 = arith.addi %arg1, %arg2 : i32
    %c0_i32 = arith.constant 0 : i32
    %c0_i32_0 = arith.constant 0 : i32
    %c0_i32_1 = arith.constant 0 : i32
    return %arg0, %0, %c0_i32, %c0_i32_0 : i32, i32, i32, i32
  }
  func.func @transform_1(%arg0: i32, %arg1: i32, %arg2: i32) -> (i32, i32, i32, i32, i32) {
    %c0_i32 = arith.constant 0 : i32
    %c0_i32_0 = arith.constant 0 : i32
    %c0_i32_1 = arith.constant 0 : i32
    %c0_i32_2 = arith.constant 0 : i32
    %c0_i32_3 = arith.constant 0 : i32
    return %arg2, %c0_i32, %c0_i32_0, %c0_i32_1, %c0_i32_2 : i32, i32, i32, i32, i32
  }
  func.func @transform_2(%arg0: i32, %arg1: i32, %arg2: i32) -> (i32, i32) {
    %c0_i32 = arith.constant 0 : i32
    %c0_i32_0 = arith.constant 0 : i32
    %c0_i32_1 = arith.constant 0 : i32
    return %c0_i32, %c0_i32_0 : i32, i32
  }
  func.func @transform_3(%arg0: i32, %arg1: i32, %arg2: i32) -> (i32, i32, i32, i32) {
    %c0_i32 = arith.constant 0 : i32
    %c0_i32_0 = arith.constant 0 : i32
    %c0_i32_1 = arith.constant 0 : i32
    return %arg0, %arg1, %c0_i32, %c0_i32_0 : i32, i32, i32, i32
  }
  func.func @transform_4(%arg0: i32, %arg1: i32, %arg2: i32) -> (i32, i32, i32, i32) {
    %c0_i32 = arith.constant 0 : i32
    %c0_i32_0 = arith.constant 0 : i32
    %c0_i32_1 = arith.constant 0 : i32
    return %arg0, %arg1, %c0_i32, %c0_i32_0 : i32, i32, i32, i32
  }
}

module attributes {stable_mosaic.version = 11 : i64} {
  func.func @_finalize_kernel(%arg0: i32, %arg1: i32, %arg2: memref<1x1x80x128xf32, #tpu.memory_space<vmem>>, %arg3: memref<1x1x80x128xf32, #tpu.memory_space<vmem>>, %arg4: memref<128x128xbf16, #tpu.memory_space<vmem>>, %arg5: memref<1x128xf32, #tpu.memory_space<vmem>>, %arg6: memref<1x128xf32, #tpu.memory_space<vmem>>, %arg7: memref<1x128xf32, #tpu.memory_space<vmem>>, %arg8: memref<1x128xf32, #tpu.memory_space<vmem>>, %arg9: memref<1x1x80x128xf32, #tpu.memory_space<vmem>>) attributes {dimension_semantics = [#tpu.dimension_semantics<parallel>, #tpu.dimension_semantics<parallel>], iteration_bounds = array<i64: 2, 8>, scalar_prefetch = 0 : i64, scratch_operands = 0 : i64, tpu.core_type = #tpu.core_type<tc>, window_params = [{transform_indices = @transform_0, window_bounds = array<i64: 1, 1, 80, 128>}, {transform_indices = @transform_1, window_bounds = array<i64: 1, 1, 80, 128>}, {pipeline_mode = #tpu.pipeline_mode<synchronous>, transform_indices = @transform_2, window_bounds = array<i64: 128, 128>}, {pipeline_mode = #tpu.pipeline_mode<synchronous>, transform_indices = @transform_3, window_bounds = array<i64: 1, 128>}, {pipeline_mode = #tpu.pipeline_mode<synchronous>, transform_indices = @transform_4, window_bounds = array<i64: 1, 128>}, {pipeline_mode = #tpu.pipeline_mode<synchronous>, transform_indices = @transform_5, window_bounds = array<i64: 1, 128>}, {pipeline_mode = #tpu.pipeline_mode<synchronous>, transform_indices = @transform_6, window_bounds = array<i64: 1, 128>}, {transform_indices = @transform_7, window_bounds = array<i64: 1, 1, 80, 128>}]} {
    %c0 = arith.constant 0 : index
    %c0_0 = arith.constant 0 : index
    %c0_1 = arith.constant 0 : index
    %c0_2 = arith.constant 0 : index
    %0 = vector.load %arg3[%c0, %c0_0, %c0_1, %c0_2] : memref<1x1x80x128xf32, #tpu.memory_space<vmem>>, vector<1x1x80x128xf32>
    %1 = vector.shape_cast %0 : vector<1x1x80x128xf32> to vector<80x128xf32>
    %2 = arith.truncf %1 : vector<80x128xf32> to vector<80x128xbf16>
    %c0_3 = arith.constant 0 : index
    %c0_4 = arith.constant 0 : index
    %3 = vector.load %arg4[%c0_3, %c0_4] : memref<128x128xbf16, #tpu.memory_space<vmem>>, vector<128x128xbf16>
    %cst = arith.constant dense<0.000000e+00> : vector<80x128xf32>
    %4 = tpu.matmul %2, %3, %cst {dimension_numbers = #tpu.dot_dimension_numbers<[1], [0], [0], [1], [0, 0, 1, 1], [], []>} : vector<80x128xbf16>, vector<128x128xbf16>, vector<80x128xf32> -> vector<80x128xf32>
    %c0_5 = arith.constant 0 : index
    %c0_6 = arith.constant 0 : index
    %5 = vector.load %arg7[%c0_5, %c0_6] : memref<1x128xf32, #tpu.memory_space<vmem>>, vector<1x128xf32>
    %6 = vector.broadcast %5 : vector<1x128xf32> to vector<80x128xf32>
    %7 = arith.mulf %4, %6 : vector<80x128xf32>
    %c0_7 = arith.constant 0 : index
    %c0_8 = arith.constant 0 : index
    %8 = vector.load %arg8[%c0_7, %c0_8] : memref<1x128xf32, #tpu.memory_space<vmem>>, vector<1x128xf32>
    %9 = vector.broadcast %8 : vector<1x128xf32> to vector<80x128xf32>
    %10 = arith.addf %7, %9 : vector<80x128xf32>
    %c0_9 = arith.constant 0 : index
    %c0_10 = arith.constant 0 : index
    %c0_11 = arith.constant 0 : index
    %c0_12 = arith.constant 0 : index
    %11 = vector.load %arg2[%c0_9, %c0_10, %c0_11, %c0_12] : memref<1x1x80x128xf32, #tpu.memory_space<vmem>>, vector<1x1x80x128xf32>
    %12 = vector.shape_cast %11 : vector<1x1x80x128xf32> to vector<80x128xf32>
    %c0_13 = arith.constant 0 : index
    %c0_14 = arith.constant 0 : index
    %13 = vector.load %arg5[%c0_13, %c0_14] : memref<1x128xf32, #tpu.memory_space<vmem>>, vector<1x128xf32>
    %14 = vector.broadcast %13 : vector<1x128xf32> to vector<80x128xf32>
    %15 = arith.mulf %12, %14 : vector<80x128xf32>
    %c0_15 = arith.constant 0 : index
    %c0_16 = arith.constant 0 : index
    %16 = vector.load %arg6[%c0_15, %c0_16] : memref<1x128xf32, #tpu.memory_space<vmem>>, vector<1x128xf32>
    %17 = vector.broadcast %16 : vector<1x128xf32> to vector<80x128xf32>
    %18 = arith.addf %15, %17 : vector<80x128xf32>
    %19 = arith.addf %18, %10 : vector<80x128xf32>
    %cst_17 = arith.constant 0.000000e+00 : f32
    %20 = vector.broadcast %cst_17 : f32 to vector<80x128xf32>
    %21 = arith.maximumf %19, %20 : vector<80x128xf32>
    %c0_18 = arith.constant 0 : index
    %c0_19 = arith.constant 0 : index
    %c0_20 = arith.constant 0 : index
    %c0_21 = arith.constant 0 : index
    %22 = vector.load %arg9[%c0_18, %c0_19, %c0_20, %c0_21] : memref<1x1x80x128xf32, #tpu.memory_space<vmem>>, vector<1x1x80x128xf32>
    %23 = vector.shape_cast %22 : vector<1x1x80x128xf32> to vector<80x128xf32>
    %24 = vector.shape_cast %21 : vector<80x128xf32> to vector<1x1x80x128xf32>
    tpu.vector_store %arg9[%c0_18, %c0_19, %c0_20, %c0_21], %24 {strides = array<i32>} : memref<1x1x80x128xf32, #tpu.memory_space<vmem>>, vector<1x1x80x128xf32>,
    return
  }
  func.func @transform_0(%arg0: i32, %arg1: i32) -> (i32, i32, i32, i32) {
    %c0_i32 = arith.constant 0 : i32
    %c0_i32_0 = arith.constant 0 : i32
    %c0_i32_1 = arith.constant 0 : i32
    return %arg0, %arg1, %c0_i32, %c0_i32_0 : i32, i32, i32, i32
  }
  func.func @transform_1(%arg0: i32, %arg1: i32) -> (i32, i32, i32, i32) {
    %c0_i32 = arith.constant 0 : i32
    %c0_i32_0 = arith.constant 0 : i32
    %c0_i32_1 = arith.constant 0 : i32
    return %arg0, %arg1, %c0_i32, %c0_i32_0 : i32, i32, i32, i32
  }
  func.func @transform_2(%arg0: i32, %arg1: i32) -> (i32, i32) {
    %c0_i32 = arith.constant 0 : i32
    %c0_i32_0 = arith.constant 0 : i32
    %c0_i32_1 = arith.constant 0 : i32
    return %c0_i32, %c0_i32_0 : i32, i32
  }
  func.func @transform_3(%arg0: i32, %arg1: i32) -> (i32, i32) {
    %c0_i32 = arith.constant 0 : i32
    %c0_i32_0 = arith.constant 0 : i32
    %c0_i32_1 = arith.constant 0 : i32
    return %c0_i32, %c0_i32_0 : i32, i32
  }
  func.func @transform_4(%arg0: i32, %arg1: i32) -> (i32, i32) {
    %c0_i32 = arith.constant 0 : i32
    %c0_i32_0 = arith.constant 0 : i32
    %c0_i32_1 = arith.constant 0 : i32
    return %c0_i32, %c0_i32_0 : i32, i32
  }
  func.func @transform_5(%arg0: i32, %arg1: i32) -> (i32, i32) {
    %c0_i32 = arith.constant 0 : i32
    %c0_i32_0 = arith.constant 0 : i32
    %c0_i32_1 = arith.constant 0 : i32
    return %c0_i32, %c0_i32_0 : i32, i32
  }
  func.func @transform_6(%arg0: i32, %arg1: i32) -> (i32, i32) {
    %c0_i32 = arith.constant 0 : i32
    %c0_i32_0 = arith.constant 0 : i32
    %c0_i32_1 = arith.constant 0 : i32
    return %c0_i32, %c0_i32_0 : i32, i32
  }
  func.func @transform_7(%arg0: i32, %arg1: i32) -> (i32, i32, i32, i32) {
    %c0_i32 = arith.constant 0 : i32
    %c0_i32_0 = arith.constant 0 : i32
    %c0_i32_1 = arith.constant 0 : i32
    return %arg0, %arg1, %c0_i32, %c0_i32_0 : i32, i32, i32, i32
  }
}

</mosaic_0001>

<llo_original>
// kernel: residual_block_3d.5
$region0: #{residual_block_3d.5}
  #allocation0 [shape = 'u32[]', space=smem, size = 0x4, offset = 0x4, fixed_abs, tag = 'smem constant byte address 0x4 - core index']
  #allocation1 [shape = 'u32[144,128]{1,0:T(1,128)}', space=vmem, size = 0x12000, scoped, tag = 'internal scratch']
  %s0 = inlined_call_operand.vmem [shape: f32[2,8,80,128], index: 0, kind: input, shape index: {}]
  %s1 = inlined_call_operand.vmem [shape: f32[1,128], index: 1, kind: input, shape index: {}]
  %s2 = inlined_call_operand.vmem [shape: f32[1,128], index: 2, kind: input, shape index: {}]
  %s3 = inlined_call_operand.vmem [shape: f32[2,8,80,128], index: 3, kind: output, shape index: {}]
  %s4 = sld [smem:[#allocation0]]
  $region45: #{residual_block_3d.5} parent=0
    _
  %s6 = ssub.s32 1, %s4
  %s7 = scalar_select 0, %s6, %s4
  loop: start=0, step=1, limit=18
  $region2: #{residual_block_3d.5} parent=0 // loop_pre_header
    _
  $region3: #{residual_block_3d.5} parent=0 // loop_header
    %s9 = sphi 0, %s13
    %p10 = scmp.ge.s32.totalorder %s9, 18
    %s16 = sphi 0, %s28
    %s17 = sphi 0, %s24
    %s18 = sphi 0, %s16
    %s19 = sphi 0, %s17
    %s20 = sphi 0, %s18
    %s21 = sphi 0, %s19
    %s33 = sphi 0, %s35
    %s36 = sphi 0, %s33
    %s37 = sphi 0, %s36
    %s53 = sphi 0, %s37
    %s57 = sphi 0, %s57
    %s59 = sphi 0, %s57
    %s60 = sphi 0, %s59
    %s74 = sphi 0, %s60
    %s78 = sphi 0, %s78
    %s80 = sphi 0, %s78
    %s81 = sphi 0, %s80
    %s95 = sphi 0, %s81
    %s103 = sphi 0, %s105
    %s106 = sphi 0, %s103
    %s107 = sphi 0, %s106
    %s123 = sphi 0, %s107
  $region4: #{residual_block_3d.5} parent=0 // loop_header_branch
    %12 = sbr.rel (%p10) target = $region8
  $region5: #{residual_block_3d.5} parent=0 // loop_body
    %s14 = ssub.s32 %s9, 1
    %s15 = ssub.s32 %s9, 2
    %s22 = sadd.s32 1, %s17
    %p23 = scmp.ge.s32.totalorder %s22, 8
    %s24 = scalar_select %p23, 0, %s22
    %s25 = sadd.s32 1, %s16
    %s26 = scalar_select %p23, %s25, %s16
    %p27 = scmp.ge.s32.totalorder %s26, 2
    %s28 = scalar_select %p27, 0, %s26
    %s29 = ssub.s32 %s16, %s28
    %s30 = ssub.s32 %s17, %s24
    %s31 = sor.u32 %s29, %s30
    %p32 = scmp.eq.s32.totalorder %s31, 0
    %s34 = sadd.s32 %s33, 1
    %s35 = scalar_select %p32, %s33, %s34
    %p38 = pneg %p32
    %p39 = scmp.eq.s32.totalorder %s9, 15
    %p40 = por %p38, %p39
    %p41 = scmp.ne.s32.totalorder %s33, %s36
    %p42 = scmp.eq.s32.totalorder %s9, 0
    %p43 = por %p41, %p42
    %p44 = scmp.ne.s32.totalorder %s33, %s36
    %p45 = scmp.eq.s32.totalorder %s14, 15
    %p46 = por %p44, %p45
    %p47 = scmp.ne.s32.totalorder %s36, %s37
    %p48 = scmp.eq.s32.totalorder %s14, 0
    %p49 = por %p47, %p48
    %p50 = scmp.ne.s32.totalorder %s36, %s37
    %p51 = scmp.eq.s32.totalorder %s15, 15
    %p52 = por %p50, %p51
    %p54 = scmp.ne.s32.totalorder %s37, %s53
    %p55 = scmp.eq.s32.totalorder %s15, 0
    %p56 = por %p54, %p55
    %s58 = sadd.s32 %s57, 1
    %p61 = scmp.eq.s32.totalorder %s9, 15
    %p62 = scmp.ne.s32.totalorder %s57, %s59
    %p63 = scmp.eq.s32.totalorder %s9, 0
    %p64 = por %p62, %p63
    %p65 = scmp.ne.s32.totalorder %s57, %s59
    %p66 = scmp.eq.s32.totalorder %s14, 15
    %p67 = por %p65, %p66
    %p68 = scmp.ne.s32.totalorder %s59, %s60
    %p69 = scmp.eq.s32.totalorder %s14, 0
    %p70 = por %p68, %p69
    %p71 = scmp.ne.s32.totalorder %s59, %s60
    %p72 = scmp.eq.s32.totalorder %s15, 15
    %p73 = por %p71, %p72
    %p75 = scmp.ne.s32.totalorder %s60, %s74
    %p76 = scmp.eq.s32.totalorder %s15, 0
    %p77 = por %p75, %p76
    %s79 = sadd.s32 %s78, 1
    %p82 = scmp.eq.s32.totalorder %s9, 15
    %p83 = scmp.ne.s32.totalorder %s78, %s80
    %p84 = scmp.eq.s32.totalorder %s9, 0
    %p85 = por %p83, %p84
    %p86 = scmp.ne.s32.totalorder %s78, %s80
    %p87 = scmp.eq.s32.totalorder %s14, 15
    %p88 = por %p86, %p87
    %p89 = scmp.ne.s32.totalorder %s80, %s81
    %p90 = scmp.eq.s32.totalorder %s14, 0
    %p91 = por %p89, %p90
    %p92 = scmp.ne.s32.totalorder %s80, %s81
    %p93 = scmp.eq.s32.totalorder %s15, 15
    %p94 = por %p92, %p93
    %p96 = scmp.ne.s32.totalorder %s81, %s95
    %p97 = scmp.eq.s32.totalorder %s15, 0
    %p98 = por %p96, %p97
    %s99 = ssub.s32 %s16, %s28
    %s100 = ssub.s32 %s17, %s24
    %s101 = sor.u32 %s99, %s100
    %p102 = scmp.eq.s32.totalorder %s101, 0
    %s104 = sadd.s32 %s103, 1
    %s105 = scalar_select %p102, %s103, %s104
    %p108 = pneg %p102
    %p109 = scmp.eq.s32.totalorder %s9, 15
    %p110 = por %p108, %p109
    %p111 = scmp.ne.s32.totalorder %s103, %s106
    %p112 = scmp.eq.s32.totalorder %s9, 0
    %p113 = por %p111, %p112
    %p114 = scmp.ne.s32.totalorder %s103, %s106
    %p115 = scmp.eq.s32.totalorder %s14, 15
    %p116 = por %p114, %p115
    %p117 = scmp.ne.s32.totalorder %s106, %s107
    %p118 = scmp.eq.s32.totalorder %s14, 0
    %p119 = por %p117, %p118
    %p120 = scmp.ne.s32.totalorder %s106, %s107
    %p121 = scmp.eq.s32.totalorder %s15, 15
    %p122 = por %p120, %p121
    %p124 = scmp.ne.s32.totalorder %s107, %s123
    %p125 = scmp.eq.s32.totalorder %s15, 0
    %p126 = por %p124, %p125
    %p127 = scmp.le.s32.totalorder 1, %s9
    %p128 = scmp.lt.s32.totalorder %s9, 17
    %p129 = pnand %p127, %p128
    %p130 = pneg %p129
    // Predicated region
    $region9: #{residual_block_3d.5} parent=5 // pred_check
      _
    $region10: #{residual_block_3d.5} parent=5 // pred_check_branch
      %132 = sbr.rel (%p129) target = $region12
    $region11: #{residual_block_3d.5} parent=5 // pred_region
      %s133 = ssub.s32 %s9, 1
      // Predicated region
      $region13: #{residual_block_3d.5} parent=11 // pred_check
        %p134 = pneg %p70
      $region14: #{residual_block_3d.5} parent=11 // pred_check_branch
        %136 = sbr.rel (%p134) target = $region16
      $region15: #{residual_block_3d.5} parent=11 // pred_region
        _
      $region16: #{residual_block_3d.5} parent=11 // pred_fallthru
        _
      // Predicated region
      $region17: #{residual_block_3d.5} parent=11 // pred_check
        %p137 = pneg %p91
      $region18: #{residual_block_3d.5} parent=11 // pred_check_branch
        %139 = sbr.rel (%p137) target = $region20
      $region19: #{residual_block_3d.5} parent=11 // pred_region
        _
      $region20: #{residual_block_3d.5} parent=11 // pred_fallthru
        _
    $region12: #{residual_block_3d.5} parent=5 // pred_fallthru
      _
    %p140 = scmp.lt.s32.totalorder %s9, 16
    // Predicated region
    $region21: #{residual_block_3d.5} parent=5 // pred_check
      %p141 = pneg %p140
    $region22: #{residual_block_3d.5} parent=5 // pred_check_branch
      %143 = sbr.rel (%p141) target = $region24
    $region23: #{residual_block_3d.5} parent=5 // pred_region
      // Predicated region
      $region25: #{residual_block_3d.5} parent=23 // pred_check
        %p144 = pneg %p43
      $region26: #{residual_block_3d.5} parent=23 // pred_check_branch
        %146 = sbr.rel (%p144) target = $region28
      $region27: #{residual_block_3d.5} parent=23 // pred_region
        %p147 = scmp.lt.s32.totalorder %s16, 1
        %s148 = scalar_select %p147, %s16, 1
        %p149 = scmp.lt.s32.totalorder %s17, 7
        %s150 = scalar_select %p149, %s17, 7
        %s151 = smul.addr %s150, 10
        %s152 = smul.addr %s148, 80
        %s153 = sadd.s32 %s151, %s152
        %s154 = smul.addr %s153, 8
        %s155 = scalar_lea.vmem %s0, %s154
      $region28: #{residual_block_3d.5} parent=23 // pred_fallthru
        _
    $region24: #{residual_block_3d.5} parent=5 // pred_fallthru
      _
    %p156 = scmp.le.s32.totalorder 1, %s9
    %p157 = scmp.lt.s32.totalorder %s9, 17
    %p158 = pnand %p156, %p157
    %p159 = pneg %p158
    // Predicated region
    $region29: #{residual_block_3d.5} parent=5 // pred_check
      _
    $region30: #{residual_block_3d.5} parent=5 // pred_check_branch
      %161 = sbr.rel (%p158) target = $region32
    $region31: #{residual_block_3d.5} parent=5 // pred_region
      %s162 = ssub.s32 %s9, 1
      %p163 = scmp.lt.s32.totalorder %s18, 1
      %s164 = scalar_select %p163, %s18, 1
      %p165 = scmp.lt.s32.totalorder %s19, 7
      %s166 = scalar_select %p165, %s19, 7
      %s167 = smul.addr %s166, 10
      %s168 = smul.addr %s164, 80
      %s169 = sadd.s32 %s167, %s168
      %s170 = smul.addr %s169, 8
      %s171 = scalar_lea.vmem %s0, %s170
      %p172 = pneg %p49
      %p173 = pneg %p46
      %p174 = pneg %p70
      %p175 = pneg %p67
      %p176 = pneg %p91
      %p177 = pneg %p88
      %p178 = pneg %p119
      %p179 = pneg %p116
      %p180 = scmp.lt.s32.totalorder %s18, 1
      %s181 = scalar_select %p180, %s18, 1
      %p182 = scmp.lt.s32.totalorder %s19, 7
      %s183 = scalar_select %p182, %s19, 7
      %s184 = smul.addr %s183, 10
      %s185 = smul.addr %s181, 80
      %s186 = sadd.s32 %s184, %s185
      %s187 = smul.addr %s186, 8
      %s188 = scalar_lea.vmem %s3, %s187
      %p189 = scmp.lt.s32.totalorder %s18, 1
      %s190 = scalar_select %p189, %s18, 1
      %p191 = scmp.lt.s32.totalorder %s19, 7
      %s192 = scalar_select %p191, %s19, 7
      %s193 = smul.addr %s192, 10
      %s194 = smul.addr %s190, 80
      %s195 = sadd.s32 %s193, %s194
      %s196 = smul.addr %s195, 8
      %s197 = scalar_lea.vmem %s0, %s196
      %p198 = scmp.lt.s32.totalorder %s18, 1
      %s199 = scalar_select %p198, %s18, 1
      %p200 = scmp.lt.s32.totalorder %s19, 7
      %s201 = scalar_select %p200, %s19, 7
      %s202 = smul.addr %s201, 10
      %s203 = smul.addr %s199, 80
      %s204 = sadd.s32 %s202, %s203
      %s205 = smul.addr %s204, 8
      %s206 = scalar_lea.vmem %s3, %s205
      %v207 = vld [vmem:[%s197] sm:$0xff]
      %v208 = vld [vmem:[%s197 + $0x8] sm:$0xff]
      %v209 = vld [vmem:[%s197 + $0x10] sm:$0xff]
      %v210 = vld [vmem:[%s197 + $0x18] sm:$0xff]
      %v211 = vld [vmem:[%s197 + $0x20] sm:$0xff]
      %v212 = vld [vmem:[%s197 + $0x28] sm:$0xff]
      %v213 = vld [vmem:[%s197 + $0x30] sm:$0xff]
      %v214 = vld [vmem:[%s197 + $0x38] sm:$0xff]
      %v215 = vld [vmem:[%s197 + $0x40] sm:$0xff]
      %v216 = vld [vmem:[%s197 + $0x48] sm:$0xff]
      %v217 = vld [vmem:[%s1] sm:$0x1]
      %v219 = vlaneseq
      %v220 = vshrl.u32 %v219, 7
      %v221 = vsub.s32 0, %v220
      %v222 = vrot.slane %v217, %v221
      %v224 = vmul.f32 %v207, %v222
      %v225 = vmul.f32 %v208, %v222
      %v226 = vmul.f32 %v209, %v222
      %v227 = vmul.f32 %v210, %v222
      %v228 = vmul.f32 %v211, %v222
      %v229 = vmul.f32 %v212, %v222
      %v230 = vmul.f32 %v213, %v222
      %v231 = vmul.f32 %v214, %v222
      %v232 = vmul.f32 %v215, %v222
      %v233 = vmul.f32 %v216, %v222
      %v234 = vld [vmem:[%s2] sm:$0x1]
      %v236 = vlaneseq
      %v237 = vshrl.u32 %v236, 7
      %v238 = vsub.s32 0, %v237
      %v239 = vrot.slane %v234, %v238
      %v241 = vadd.f32 %v224, %v239
      %v242 = vadd.f32 %v225, %v239
      %v243 = vadd.f32 %v226, %v239
      %v244 = vadd.f32 %v227, %v239
      %v245 = vadd.f32 %v228, %v239
      %v246 = vadd.f32 %v229, %v239
      %v247 = vadd.f32 %v230, %v239
      %v248 = vadd.f32 %v231, %v239
      %v249 = vadd.f32 %v232, %v239
      %v250 = vadd.f32 %v233, %v239
      %v251 = vmax.f32 %v241, 0.0
      %v252 = vmax.f32 %v242, 0.0
      %v253 = vmax.f32 %v243, 0.0
      %v254 = vmax.f32 %v244, 0.0
      %v255 = vmax.f32 %v245, 0.0
      %v256 = vmax.f32 %v246, 0.0
      %v257 = vmax.f32 %v247, 0.0
      %v258 = vmax.f32 %v248, 0.0
      %v259 = vmax.f32 %v249, 0.0
      %v260 = vmax.f32 %v250, 0.0
      %261 = vst [vmem:[%s206] sm:$0xff] %v251
      %262 = vst [vmem:[%s206 + $0x8] sm:$0xff] %v252
      %263 = vst [vmem:[%s206 + $0x10] sm:$0xff] %v253
      %264 = vst [vmem:[%s206 + $0x18] sm:$0xff] %v254
      %265 = vst [vmem:[%s206 + $0x20] sm:$0xff] %v255
      %266 = vst [vmem:[%s206 + $0x28] sm:$0xff] %v256
      %267 = vst [vmem:[%s206 + $0x30] sm:$0xff] %v257
      %268 = vst [vmem:[%s206 + $0x38] sm:$0xff] %v258
      %269 = vst [vmem:[%s206 + $0x40] sm:$0xff] %v259
      %270 = vst [vmem:[%s206 + $0x48] sm:$0xff] %v260
      %p271 = scmp.lt.s32.totalorder %s18, 1
      %s272 = scalar_select %p271, %s18, 1
      %p273 = scmp.lt.s32.totalorder %s19, 7
      %s274 = scalar_select %p273, %s19, 7
      %s275 = smul.addr %s274, 10
      %s276 = smul.addr %s272, 80
      %s277 = sadd.s32 %s275, %s276
      %s278 = smul.addr %s277, 8
      %s279 = scalar_lea.vmem %s3, %s278
      // Predicated region
      $region33: #{residual_block_3d.5} parent=31 // pred_check
        %p280 = pneg %p116
      $region34: #{residual_block_3d.5} parent=31 // pred_check_branch
        %282 = sbr.rel (%p280) target = $region36
      $region35: #{residual_block_3d.5} parent=31 // pred_region
        _
      $region36: #{residual_block_3d.5} parent=31 // pred_fallthru
        _
    $region32: #{residual_block_3d.5} parent=5 // pred_fallthru
      _
    %p283 = scmp.le.s32.totalorder 2, %s9
    // Predicated region
    $region37: #{residual_block_3d.5} parent=5 // pred_check
      %p284 = pneg %p283
    $region38: #{residual_block_3d.5} parent=5 // pred_check_branch
      %286 = sbr.rel (%p284) target = $region40
    $region39: #{residual_block_3d.5} parent=5 // pred_region
      %s287 = ssub.s32 %s9, 2
      // Predicated region
      $region41: #{residual_block_3d.5} parent=39 // pred_check
        %p288 = pneg %p122
      $region42: #{residual_block_3d.5} parent=39 // pred_check_branch
        %290 = sbr.rel (%p288) target = $region44
      $region43: #{residual_block_3d.5} parent=39 // pred_region
        %p291 = scmp.lt.s32.totalorder %s20, 1
        %s292 = scalar_select %p291, %s20, 1
        %p293 = scmp.lt.s32.totalorder %s21, 7
        %s294 = scalar_select %p293, %s21, 7
        %s295 = smul.addr %s294, 10
        %s296 = smul.addr %s292, 80
        %s297 = sadd.s32 %s295, %s296
        %s298 = smul.addr %s297, 8
        %s299 = scalar_lea.vmem %s3, %s298
      $region44: #{residual_block_3d.5} parent=39 // pred_fallthru
        _
    $region40: #{residual_block_3d.5} parent=5 // pred_fallthru
      _
  $region6: #{residual_block_3d.5} parent=0 // loop_footer
    %s13 = sadd.s32 1, %s9
  $region7: #{residual_block_3d.5} parent=0 // loop_footer_branch
    %8 = sbr.rel target = $region3
  $region8: #{residual_block_3d.5} parent=0 // loop_exit
    _

// kernel: residual_block_3d.4
$region0: #{residual_block_3d.4}
  #allocation0 [shape = 'u32[]', space=smem, size = 0x4, offset = 0x4, fixed_abs, tag = 'smem constant byte address 0x4 - core index']
  #allocation1 [shape = 'u32[144,128]{1,0:T(1,128)}', space=vmem, size = 0x12000, scoped, tag = 'internal scratch']
  #allocation2 [shape = 'f32[80,128]{1,0:T(8,128)}', space=vmem, size = 0xa000, scoped, tag = 'scratch operand']
  %s0 = inlined_call_operand.vmem [shape: f32[2,10,110,128], index: 0, kind: input, shape index: {}]
  %s1 = inlined_call_operand.vmem [shape: bf16[3,3,3,128,128], index: 1, kind: input, shape index: {}]
  %s2 = inlined_call_operand.vmem [shape: f32[80,128], index: 2, kind: input, shape index: {}]
  %s3 = inlined_call_operand.vmem [shape: bf16[128,128], index: 3, kind: input, shape index: {}]
  %s4 = inlined_call_operand.vmem [shape: f32[2,8,80,128], index: 4, kind: output, shape index: {0}]
  %s5 = inlined_call_operand.vmem [shape: f32[2,8,2,128], index: 5, kind: output, shape index: {1}]
  %s6 = inlined_call_operand.vmem [shape: f32[2,8,2,128], index: 6, kind: output, shape index: {2}]
  %7 = xla_tuple %s4, %s5, %s6
  %s8 = sld [smem:[#allocation0]]
  $region77: #{residual_block_3d.4} parent=0
    _
  %s10 = ssub.s32 1, %s8
  %s11 = scalar_select 0, %s10, %s8
  loop: start=0, step=1, limit=50
  $region2: #{residual_block_3d.4} parent=0 // loop_pre_header
    _
  $region3: #{residual_block_3d.4} parent=0 // loop_header
    %s13 = sphi 0, %s17
    %p14 = scmp.ge.s32.totalorder %s13, 50
    %s20 = sphi 0, %s39
    %s21 = sphi 0, %s35
    %s22 = sphi 0, %s31
    %s23 = sphi 0, %s20
    %s24 = sphi 0, %s21
    %s25 = sphi 0, %s22
    %s26 = sphi 0, %s23
    %s27 = sphi 0, %s24
    %s28 = sphi 0, %s25
    %s46 = sphi 0, %s48
    %s49 = sphi 0, %s46
    %s50 = sphi 0, %s49
    %s66 = sphi 0, %s50
    %s72 = sphi 0, %s74
    %s75 = sphi 0, %s72
    %s76 = sphi 0, %s75
    %s92 = sphi 0, %s76
    %s96 = sphi 0, %s96
    %s98 = sphi 0, %s96
    %s99 = sphi 0, %s98
    %s113 = sphi 0, %s99
    %s117 = sphi 0, %s117
    %s119 = sphi 0, %s117
    %s120 = sphi 0, %s119
    %s134 = sphi 0, %s120
    %s142 = sphi 0, %s144
    %s145 = sphi 0, %s142
    %s146 = sphi 0, %s145
    %s162 = sphi 0, %s146
    %s170 = sphi 0, %s172
    %s173 = sphi 0, %s170
    %s174 = sphi 0, %s173
    %s190 = sphi 0, %s174
    %s198 = sphi 0, %s200
    %s201 = sphi 0, %s198
    %s202 = sphi 0, %s201
    %s218 = sphi 0, %s202
  $region4: #{residual_block_3d.4} parent=0 // loop_header_branch
    %16 = sbr.rel (%p14) target = $region8
  $region5: #{residual_block_3d.4} parent=0 // loop_body
    %s18 = ssub.s32 %s13, 1
    %s19 = ssub.s32 %s13, 2
    %s29 = sadd.s32 1, %s22
    %p30 = scmp.ge.s32.totalorder %s29, 3
    %s31 = scalar_select %p30, 0, %s29
    %s32 = sadd.s32 1, %s21
    %s33 = scalar_select %p30, %s32, %s21
    %p34 = scmp.ge.s32.totalorder %s33, 8
    %s35 = scalar_select %p34, 0, %s33
    %s36 = sadd.s32 1, %s20
    %s37 = scalar_select %p34, %s36, %s20
    %p38 = scmp.ge.s32.totalorder %s37, 2
    %s39 = scalar_select %p38, 0, %s37
    %s40 = sadd.s32 %s21, %s22
    %s41 = sadd.s32 %s35, %s31
    %s42 = ssub.s32 %s20, %s39
    %s43 = ssub.s32 %s40, %s41
    %s44 = sor.u32 %s42, %s43
    %p45 = scmp.eq.s32.totalorder %s44, 0
    %s47 = sadd.s32 %s46, 1
    %s48 = scalar_select %p45, %s46, %s47
    %p51 = pneg %p45
    %p52 = scmp.eq.s32.totalorder %s13, 47
    %p53 = por %p51, %p52
    %p54 = scmp.ne.s32.totalorder %s46, %s49
    %p55 = scmp.eq.s32.totalorder %s13, 0
    %p56 = por %p54, %p55
    %p57 = scmp.ne.s32.totalorder %s46, %s49
    %p58 = scmp.eq.s32.totalorder %s18, 47
    %p59 = por %p57, %p58
    %p60 = scmp.ne.s32.totalorder %s49, %s50
    %p61 = scmp.eq.s32.totalorder %s18, 0
    %p62 = por %p60, %p61
    %p63 = scmp.ne.s32.totalorder %s49, %s50
    %p64 = scmp.eq.s32.totalorder %s19, 47
    %p65 = por %p63, %p64
    %p67 = scmp.ne.s32.totalorder %s50, %s66
    %p68 = scmp.eq.s32.totalorder %s19, 0
    %p69 = por %p67, %p68
    %s70 = ssub.s32 %s22, %s31
    %p71 = scmp.eq.s32.totalorder %s70, 0
    %s73 = sadd.s32 %s72, 1
    %s74 = scalar_select %p71, %s72, %s73
    %p77 = pneg %p71
    %p78 = scmp.eq.s32.totalorder %s13, 47
    %p79 = por %p77, %p78
    %p80 = scmp.ne.s32.totalorder %s72, %s75
    %p81 = scmp.eq.s32.totalorder %s13, 0
    %p82 = por %p80, %p81
    %p83 = scmp.ne.s32.totalorder %s72, %s75
    %p84 = scmp.eq.s32.totalorder %s18, 47
    %p85 = por %p83, %p84
    %p86 = scmp.ne.s32.totalorder %s75, %s76
    %p87 = scmp.eq.s32.totalorder %s18, 0
    %p88 = por %p86, %p87
    %p89 = scmp.ne.s32.totalorder %s75, %s76
    %p90 = scmp.eq.s32.totalorder %s19, 47
    %p91 = por %p89, %p90
    %p93 = scmp.ne.s32.totalorder %s76, %s92
    %p94 = scmp.eq.s32.totalorder %s19, 0
    %p95 = por %p93, %p94
    %s97 = sadd.s32 %s96, 1
    %p100 = scmp.eq.s32.totalorder %s13, 47
    %p101 = scmp.ne.s32.totalorder %s96, %s98
    %p102 = scmp.eq.s32.totalorder %s13, 0
    %p103 = por %p101, %p102
    %p104 = scmp.ne.s32.totalorder %s96, %s98
    %p105 = scmp.eq.s32.totalorder %s18, 47
    %p106 = por %p104, %p105
    %p107 = scmp.ne.s32.totalorder %s98, %s99
    %p108 = scmp.eq.s32.totalorder %s18, 0
    %p109 = por %p107, %p108
    %p110 = scmp.ne.s32.totalorder %s98, %s99
    %p111 = scmp.eq.s32.totalorder %s19, 47
    %p112 = por %p110, %p111
    %p114 = scmp.ne.s32.totalorder %s99, %s113
    %p115 = scmp.eq.s32.totalorder %s19, 0
    %p116 = por %p114, %p115
    %s118 = sadd.s32 %s117, 1
    %p121 = scmp.eq.s32.totalorder %s13, 47
    %p122 = scmp.ne.s32.totalorder %s117, %s119
    %p123 = scmp.eq.s32.totalorder %s13, 0
    %p124 = por %p122, %p123
    %p125 = scmp.ne.s32.totalorder %s117, %s119
    %p126 = scmp.eq.s32.totalorder %s18, 47
    %p127 = por %p125, %p126
    %p128 = scmp.ne.s32.totalorder %s119, %s120
    %p129 = scmp.eq.s32.totalorder %s18, 0
    %p130 = por %p128, %p129
    %p131 = scmp.ne.s32.totalorder %s119, %s120
    %p132 = scmp.eq.s32.totalorder %s19, 47
    %p133 = por %p131, %p132
    %p135 = scmp.ne.s32.totalorder %s120, %s134
    %p136 = scmp.eq.s32.totalorder %s19, 0
    %p137 = por %p135, %p136
    %s138 = ssub.s32 %s20, %s39
    %s139 = ssub.s32 %s21, %s35
    %s140 = sor.u32 %s138, %s139
    %p141 = scmp.eq.s32.totalorder %s140, 0
    %s143 = sadd.s32 %s142, 1
    %s144 = scalar_select %p141, %s142, %s143
    %p147 = pneg %p141
    %p148 = scmp.eq.s32.totalorder %s13, 47
    %p149 = por %p147, %p148
    %p150 = scmp.ne.s32.totalorder %s142, %s145
    %p151 = scmp.eq.s32.totalorder %s13, 0
    %p152 = por %p150, %p151
    %p153 = scmp.ne.s32.totalorder %s142, %s145
    %p154 = scmp.eq.s32.totalorder %s18, 47
    %p155 = por %p153, %p154
    %p156 = scmp.ne.s32.totalorder %s145, %s146
    %p157 = scmp.eq.s32.totalorder %s18, 0
    %p158 = por %p156, %p157
    %p159 = scmp.ne.s32.totalorder %s145, %s146
    %p160 = scmp.eq.s32.totalorder %s19, 47
    %p161 = por %p159, %p160
    %p163 = scmp.ne.s32.totalorder %s146, %s162
    %p164 = scmp.eq.s32.totalorder %s19, 0
    %p165 = por %p163, %p164
    %s166 = ssub.s32 %s20, %s39
    %s167 = ssub.s32 %s21, %s35
    %s168 = sor.u32 %s166, %s167
    %p169 = scmp.eq.s32.totalorder %s168, 0
    %s171 = sadd.s32 %s170, 1
    %s172 = scalar_select %p169, %s170, %s171
    %p175 = pneg %p169
    %p176 = scmp.eq.s32.totalorder %s13, 47
    %p177 = por %p175, %p176
    %p178 = scmp.ne.s32.totalorder %s170, %s173
    %p179 = scmp.eq.s32.totalorder %s13, 0
    %p180 = por %p178, %p179
    %p181 = scmp.ne.s32.totalorder %s170, %s173
    %p182 = scmp.eq.s32.totalorder %s18, 47
    %p183 = por %p181, %p182
    %p184 = scmp.ne.s32.totalorder %s173, %s174
    %p185 = scmp.eq.s32.totalorder %s18, 0
    %p186 = por %p184, %p185
    %p187 = scmp.ne.s32.totalorder %s173, %s174
    %p188 = scmp.eq.s32.totalorder %s19, 47
    %p189 = por %p187, %p188
    %p191 = scmp.ne.s32.totalorder %s174, %s190
    %p192 = scmp.eq.s32.totalorder %s19, 0
    %p193 = por %p191, %p192
    %s194 = ssub.s32 %s20, %s39
    %s195 = ssub.s32 %s21, %s35
    %s196 = sor.u32 %s194, %s195
    %p197 = scmp.eq.s32.totalorder %s196, 0
    %s199 = sadd.s32 %s198, 1
    %s200 = scalar_select %p197, %s198, %s199
    %p203 = pneg %p197
    %p204 = scmp.eq.s32.totalorder %s13, 47
    %p205 = por %p203, %p204
    %p206 = scmp.ne.s32.totalorder %s198, %s201
    %p207 = scmp.eq.s32.totalorder %s13, 0
    %p208 = por %p206, %p207
    %p209 = scmp.ne.s32.totalorder %s198, %s201
    %p210 = scmp.eq.s32.totalorder %s18, 47
    %p211 = por %p209, %p210
    %p212 = scmp.ne.s32.totalorder %s201, %s202
    %p213 = scmp.eq.s32.totalorder %s18, 0
    %p214 = por %p212, %p213
    %p215 = scmp.ne.s32.totalorder %s201, %s202
    %p216 = scmp.eq.s32.totalorder %s19, 47
    %p217 = por %p215, %p216
    %p219 = scmp.ne.s32.totalorder %s202, %s218
    %p220 = scmp.eq.s32.totalorder %s19, 0
    %p221 = por %p219, %p220
    %p222 = scmp.le.s32.totalorder 1, %s13
    %p223 = scmp.lt.s32.totalorder %s13, 49
    %p224 = pnand %p222, %p223
    %p225 = pneg %p224
    // Predicated region
    $region9: #{residual_block_3d.4} parent=5 // pred_check
      _
    $region10: #{residual_block_3d.4} parent=5 // pred_check_branch
      %227 = sbr.rel (%p224) target = $region12
    $region11: #{residual_block_3d.4} parent=5 // pred_region
      %s228 = ssub.s32 %s13, 1
      // Predicated region
      $region13: #{residual_block_3d.4} parent=11 // pred_check
        %p229 = pneg %p109
      $region14: #{residual_block_3d.4} parent=11 // pred_check_branch
        %231 = sbr.rel (%p229) target = $region16
      $region15: #{residual_block_3d.4} parent=11 // pred_region
        _
      $region16: #{residual_block_3d.4} parent=11 // pred_fallthru
        _
      // Predicated region
      $region17: #{residual_block_3d.4} parent=11 // pred_check
        %p232 = pneg %p130
      $region18: #{residual_block_3d.4} parent=11 // pred_check_branch
        %234 = sbr.rel (%p232) target = $region20
      $region19: #{residual_block_3d.4} parent=11 // pred_region
        _
      $region20: #{residual_block_3d.4} parent=11 // pred_fallthru
        _
    $region12: #{residual_block_3d.4} parent=5 // pred_fallthru
      _
    %p235 = scmp.lt.s32.totalorder %s13, 48
    // Predicated region
    $region21: #{residual_block_3d.4} parent=5 // pred_check
      %p236 = pneg %p235
    $region22: #{residual_block_3d.4} parent=5 // pred_check_branch
      %238 = sbr.rel (%p236) target = $region24
    $region23: #{residual_block_3d.4} parent=5 // pred_region
      // Predicated region
      $region25: #{residual_block_3d.4} parent=23 // pred_check
        %p239 = pneg %p56
      $region26: #{residual_block_3d.4} parent=23 // pred_check_branch
        %241 = sbr.rel (%p239) target = $region28
      $region27: #{residual_block_3d.4} parent=23 // pred_region
        %s242 = sadd.s32 %s21, %s22
        %p243 = scmp.lt.s32.totalorder %s20, 1
        %s244 = scalar_select %p243, %s20, 1
        %p245 = scmp.lt.s32.totalorder %s242, 9
        %s246 = scalar_select %p245, %s242, 9
        %s247 = smul.addr %s246, 14
        %s248 = smul.addr %s244, 140
        %s249 = sadd.s32 %s247, %s248
        %s250 = smul.addr %s249, 8
        %s251 = scalar_lea.vmem %s0, %s250
        %s252 = sadd.s32 %s21, %s22
      $region28: #{residual_block_3d.4} parent=23 // pred_fallthru
        _
      // Predicated region
      $region29: #{residual_block_3d.4} parent=23 // pred_check
        %p253 = pneg %p82
      $region30: #{residual_block_3d.4} parent=23 // pred_check_branch
        %255 = sbr.rel (%p253) target = $region32
      $region31: #{residual_block_3d.4} parent=23 // pred_region
        %p256 = scmp.lt.s32.totalorder %s22, 2
        %s257 = scalar_select %p256, %s22, 2
        %s258 = smul.addr %s257, 144
        %s259 = smul.addr %s258, 4
        %s260 = scalar_lea.vmem %s1, %s259
      $region32: #{residual_block_3d.4} parent=23 // pred_fallthru
        _
    $region24: #{residual_block_3d.4} parent=5 // pred_fallthru
      _
    %p261 = scmp.le.s32.totalorder 1, %s13
    %p262 = scmp.lt.s32.totalorder %s13, 49
    %p263 = pnand %p261, %p262
    %p264 = pneg %p263
    // Predicated region
    $region33: #{residual_block_3d.4} parent=5 // pred_check
      _
    $region34: #{residual_block_3d.4} parent=5 // pred_check_branch
      %266 = sbr.rel (%p263) target = $region36
    $region35: #{residual_block_3d.4} parent=5 // pred_region
      %s267 = ssub.s32 %s13, 1
      %s268 = sadd.s32 %s24, %s25
      %p269 = scmp.lt.s32.totalorder %s23, 1
      %s270 = scalar_select %p269, %s23, 1
      %p271 = scmp.lt.s32.totalorder %s268, 9
      %s272 = scalar_select %p271, %s268, 9
      %s273 = smul.addr %s272, 14
      %s274 = smul.addr %s270, 140
      %s275 = sadd.s32 %s273, %s274
      %s276 = smul.addr %s275, 8
      %s277 = scalar_lea.vmem %s0, %s276
      %p278 = pneg %p62
      %p279 = pneg %p59
      %p280 = scmp.lt.s32.totalorder %s25, 2
      %s281 = scalar_select %p280, %s25, 2
      %s282 = smul.addr %s281, 144
      %s283 = smul.addr %s282, 4
      %s284 = scalar_lea.vmem %s1, %s283
      %p285 = pneg %p88
      %p286 = pneg %p85
      %p287 = pneg %p109
      %p288 = pneg %p106
      %p289 = pneg %p130
      %p290 = pneg %p127
      %p291 = pneg %p158
      %p292 = pneg %p155
      %p293 = scmp.lt.s32.totalorder %s23, 1
      %s294 = scalar_select %p293, %s23, 1
      %p295 = scmp.lt.s32.totalorder %s24, 7
      %s296 = scalar_select %p295, %s24, 7
      %s297 = smul.addr %s296, 10
      %s298 = smul.addr %s294, 80
      %s299 = sadd.s32 %s297, %s298
      %s300 = smul.addr %s299, 8
      %s301 = scalar_lea.vmem %s4, %s300
      %p302 = pneg %p186
      %p303 = pneg %p183
      %p304 = scmp.lt.s32.totalorder %s23, 1
      %s305 = scalar_select %p304, %s23, 1
      %p306 = scmp.lt.s32.totalorder %s24, 7
      %s307 = scalar_select %p306, %s24, 7
      %s308 = smul.addr %s305, 8
      %s309 = sadd.s32 %s307, %s308
      %s310 = smul.addr %s309, 2
      %s311 = scalar_lea.vmem %s5, %s310
      %p312 = pneg %p214
      %p313 = pneg %p211
      %p314 = scmp.lt.s32.totalorder %s23, 1
      %s315 = scalar_select %p314, %s23, 1
      %p316 = scmp.lt.s32.totalorder %s24, 7
      %s317 = scalar_select %p316, %s24, 7
      %s318 = smul.addr %s315, 8
      %s319 = sadd.s32 %s317, %s318
      %s320 = smul.addr %s319, 2
      %s321 = scalar_lea.vmem %s6, %s320
      %s322 = sadd.s32 %s24, %s25
      %p323 = scmp.lt.s32.totalorder %s23, 1
      %s324 = scalar_select %p323, %s23, 1
      %p325 = scmp.lt.s32.totalorder %s322, 9
      %s326 = scalar_select %p325, %s322, 9
      %s327 = smul.addr %s326, 14
      %s328 = smul.addr %s324, 140
      %s329 = sadd.s32 %s327, %s328
      %s330 = smul.addr %s329, 8
      %s331 = scalar_lea.vmem %s0, %s330
      %s332 = sadd.s32 %s24, %s25
      %p333 = scmp.lt.s32.totalorder %s25, 2
      %s334 = scalar_select %p333, %s25, 2
      %s335 = smul.addr %s334, 144
      %s336 = smul.addr %s335, 4
      %s337 = scalar_lea.vmem %s1, %s336
      %p338 = scmp.lt.s32.totalorder %s23, 1
      %s339 = scalar_select %p338, %s23, 1
      %p340 = scmp.lt.s32.totalorder %s24, 7
      %s341 = scalar_select %p340, %s24, 7
      %s342 = smul.addr %s341, 10
      %s343 = smul.addr %s339, 80
      %s344 = sadd.s32 %s342, %s343
      %s345 = smul.addr %s344, 8
      %s346 = scalar_lea.vmem %s4, %s345
      %p347 = scmp.lt.s32.totalorder %s23, 1
      %s348 = scalar_select %p347, %s23, 1
      %p349 = scmp.lt.s32.totalorder %s24, 7
      %s350 = scalar_select %p349, %s24, 7
      %s351 = smul.addr %s348, 8
      %s352 = sadd.s32 %s350, %s351
      %s353 = smul.addr %s352, 2
      %s354 = scalar_lea.vmem %s5, %s353
      %p355 = scmp.lt.s32.totalorder %s23, 1
      %s356 = scalar_select %p355, %s23, 1
      %p357 = scmp.lt.s32.totalorder %s24, 7
      %s358 = scalar_select %p357, %s24, 7
      %s359 = smul.addr %s356, 8
      %s360 = sadd.s32 %s358, %s359
      %s361 = smul.addr %s360, 2
      %s362 = scalar_lea.vmem %s6, %s361
      %p364 = scmp.eq.s32.totalorder %s25, 0
      // Predicated region
      $region37: #{residual_block_3d.4} parent=35 // pred_check
        %p365 = pneg %p364
      $region38: #{residual_block_3d.4} parent=35 // pred_check_branch
        %367 = sbr.rel (%p365) target = $region40
      $region39: #{residual_block_3d.4} parent=35 // pred_region
        %368 = vst [vmem:[#allocation2] sm:$0xff] 0.0
        %369 = vst [vmem:[#allocation2 + $0x8] sm:$0xff] 0.0
        %370 = vst [vmem:[#allocation2 + $0x10] sm:$0xff] 0.0
        %371 = vst [vmem:[#allocation2 + $0x18] sm:$0xff] 0.0
        %372 = vst [vmem:[#allocation2 + $0x20] sm:$0xff] 0.0
        %373 = vst [vmem:[#allocation2 + $0x28] sm:$0xff] 0.0
        %374 = vst [vmem:[#allocation2 + $0x30] sm:$0xff] 0.0
        %375 = vst [vmem:[#allocation2 + $0x38] sm:$0xff] 0.0
        %376 = vst [vmem:[#allocation2 + $0x40] sm:$0xff] 0.0
        %377 = vst [vmem:[#allocation2 + $0x48] sm:$0xff] 0.0
      $region40: #{residual_block_3d.4} parent=35 // pred_fallthru
        _
      %v378 = vld [vmem:[%s331] sm:$0xff]
      %v379 = vld [vmem:[%s331 + $0x8] sm:$0xff]
      %v380 = vld [vmem:[%s331 + $0x10] sm:$0xff]
      %v381 = vld [vmem:[%s331 + $0x18] sm:$0xff]
      %v382 = vld [vmem:[%s331 + $0x20] sm:$0xff]
      %v383 = vld [vmem:[%s331 + $0x28] sm:$0xff]
      %v384 = vld [vmem:[%s331 + $0x30] sm:$0xff]
      %v385 = vld [vmem:[%s331 + $0x38] sm:$0xff]
      %v386 = vld [vmem:[%s331 + $0x40] sm:$0xff]
      %v387 = vld [vmem:[%s331 + $0x48] sm:$0xff]
      %v388 = vpack.c.bf16 %v379, %v378
      %v389 = vpack.c.bf16 %v381, %v380
      %v390 = vpack.c.bf16 %v383, %v382
      %v391 = vpack.c.bf16 %v385, %v384
      %v392 = vpack.c.bf16 %v387, %v386
      %v393 = vld [vmem:[%s337] sm:$0xf]
      %v394 = vld [vmem:[%s337 + $0x4] sm:$0xf]
      %v395 = vld [vmem:[%s337 + $0x8] sm:$0xf]
      %v396 = vld [vmem:[%s337 + $0xc] sm:$0xf]
      %v397 = vld [vmem:[%s337 + $0x10] sm:$0xf]
      %v398 = vld [vmem:[%s337 + $0x14] sm:$0xf]
      %v399 = vld [vmem:[%s337 + $0x18] sm:$0xf]
      %v400 = vld [vmem:[%s337 + $0x1c] sm:$0xf]
      %v401 = vld [vmem:[%s337 + $0x20] sm:$0xf]
      %v402 = vld [vmem:[%s337 + $0x24] sm:$0xf]
      %v403 = vld [vmem:[%s337 + $0x28] sm:$0xf]
      %v404 = vld [vmem:[%s337 + $0x2c] sm:$0xf]
      %v405 = vld [vmem:[%s337 + $0x30] sm:$0xf]
      %v406 = vld [vmem:[%s337 + $0x34] sm:$0xf]
      %v407 = vld [vmem:[%s337 + $0x38] sm:$0xf]
      %v408 = vld [vmem:[%s337 + $0x3c] sm:$0xf]
      %v409 = vld [vmem:[%s331 + $0x1] sm:$0xff]
      %v410 = vld [vmem:[%s331 + $0x9] sm:$0xff]
      %v411 = vld [vmem:[%s331 + $0x11] sm:$0xff]
      %v412 = vld [vmem:[%s331 + $0x19] sm:$0xff]
      %v413 = vld [vmem:[%s331 + $0x21] sm:$0xff]
      %v414 = vld [vmem:[%s331 + $0x29] sm:$0xff]
      %v415 = vld [vmem:[%s331 + $0x31] sm:$0xff]
      %v416 = vld [vmem:[%s331 + $0x39] sm:$0xff]
      %v417 = vld [vmem:[%s331 + $0x41] sm:$0xff]
      %v418 = vld [vmem:[%s331 + $0x49] sm:$0xff]
      %v419 = vpack.c.bf16 %v410, %v409
      %v420 = vpack.c.bf16 %v412, %v411
      %v421 = vpack.c.bf16 %v414, %v413
      %v422 = vpack.c.bf16 %v416, %v415
      %v423 = vpack.c.bf16 %v418, %v417
      %s424 = scalar_lea.vmem %s337, 64
      %v425 = vld [vmem:[%s424] sm:$0xf]
      %v426 = vld [vmem:[%s424 + $0x4] sm:$0xf]
      %v427 = vld [vmem:[%s424 + $0x8] sm:$0xf]
      %v428 = vld [vmem:[%s424 + $0xc] sm:$0xf]
      %v429 = vld [vmem:[%s424 + $0x10] sm:$0xf]
      %v430 = vld [vmem:[%s424 + $0x14] sm:$0xf]
      %v431 = vld [vmem:[%s424 + $0x18] sm:$0xf]
      %v432 = vld [vmem:[%s424 + $0x1c] sm:$0xf]
      %v433 = vld [vmem:[%s424 + $0x20] sm:$0xf]
      %v434 = vld [vmem:[%s424 + $0x24] sm:$0xf]
      %v435 = vld [vmem:[%s424 + $0x28] sm:$0xf]
      %v436 = vld [vmem:[%s424 + $0x2c] sm:$0xf]
      %v437 = vld [vmem:[%s424 + $0x30] sm:$0xf]
      %v438 = vld [vmem:[%s424 + $0x34] sm:$0xf]
      %v439 = vld [vmem:[%s424 + $0x38] sm:$0xf]
      %v440 = vld [vmem:[%s424 + $0x3c] sm:$0xf]
      %v457 = vunpack.c.l.b16 %v425
      %v458 = vunpack.c.l.b16 %v426
      %v459 = vunpack.c.l.b16 %v427
      %v460 = vunpack.c.l.b16 %v428
      %v461 = vunpack.c.l.b16 %v429
      %v462 = vunpack.c.l.b16 %v430
      %v463 = vunpack.c.l.b16 %v431
      %v464 = vunpack.c.l.b16 %v432
      %v465 = vunpack.c.l.b16 %v433
      %v466 = vunpack.c.l.b16 %v434
      %v467 = vunpack.c.l.b16 %v435
      %v468 = vunpack.c.l.b16 %v436
      %v469 = vunpack.c.l.b16 %v437
      %v470 = vunpack.c.l.b16 %v438
      %v471 = vunpack.c.l.b16 %v439
      %v472 = vunpack.c.l.b16 %v440
      %v473 = vpack.c.b16 %v458, %v457
      %v474 = vpack.c.b16 %v460, %v459
      %v475 = vpack.c.b16 %v462, %v461
      %v476 = vpack.c.b16 %v464, %v463
      %v477 = vpack.c.b16 %v466, %v465
      %v478 = vpack.c.b16 %v468, %v467
      %v479 = vpack.c.b16 %v470, %v469
      %v480 = vpack.c.b16 %v472, %v471
      %489 = vmatprep.subr.bf16.mxu0 0
      %490 = vmatpush1.bf16.msra.mxu0 %v473
      %491 = vmatprep.subr.bf16.mxu0 0
      %492 = vmatpush1.bf16.msra.mxu0 %v474
      %493 = vmatprep.subr.bf16.mxu0 0
      %494 = vmatpush1.bf16.msra.mxu0 %v475
      %495 = vmatprep.subr.bf16.mxu0 0
      %496 = vmatpush1.bf16.msra.mxu0 %v476
      %497 = vmatprep.subr.bf16.mxu0 0
      %498 = vmatpush1.bf16.msra.mxu0 %v477
      %499 = vmatprep.subr.bf16.mxu0 0
      %500 = vmatpush1.bf16.msra.mxu0 %v478
      %501 = vmatprep.subr.bf16.mxu0 0
      %502 = vmatpush1.bf16.msra.mxu0 %v479
      %503 = vmatprep.subr.bf16.mxu0 0
      %504 = vmatpush1.bf16.msra.mxu0 %v480
      %505 = vmatprep.subr.bf16.mxu0 0
      %506 = vmatpush1.bf16.msra.mxu0 0
      %507 = vmatprep.subr.bf16.mxu0 0
      %508 = vmatpush1.bf16.msra.mxu0 0
      %509 = vmatprep.subr.bf16.mxu0 0
      %510 = vmatpush1.bf16.msra.mxu0 0
      %511 = vmatprep.subr.bf16.mxu0 0
      %512 = vmatpush1.bf16.msra.mxu0 0
      %513 = vmatprep.subr.bf16.mxu0 0
      %514 = vmatpush1.bf16.msra.mxu0 0
      %515 = vmatprep.subr.bf16.mxu0 0
      %516 = vmatpush1.bf16.msra.mxu0 0
      %517 = vmatprep.subr.bf16.mxu0 0
      %518 = vmatpush1.bf16.msra.mxu0 0
      %519 = vmatprep.subr.bf16.mxu0 0
      %520 = vmatpush1.bf16.msra.mxu0 0
      %521 = vmatprep.mubr.bf16.mxu0 0
      %522 = vmatmul.mubr.bf16.gmra.mrb[0].mxu0 %v419
      %v523 = vpop.f32.mrb[0].mxu0
      %v524 = vadd.f32 0.0, %v523
      %v525 = vpop.f32.mrb[0].mxu0
      %v526 = vpop.f32.mrb[0].mxu0
      %v527 = vadd.f32 0.0, %v526
      %v528 = vpop.f32.mrb[0].mxu0
      %529 = vmatprep.mubr.bf16.mxu0 0
      %530 = vmatmul.mubr.bf16.gmra.mrb[0].mxu0 %v420
      %v531 = vpop.f32.mrb[0].mxu0
      %v532 = vadd.f32 0.0, %v531
      %v533 = vpop.f32.mrb[0].mxu0
      %v534 = vpop.f32.mrb[0].mxu0
      %v535 = vadd.f32 0.0, %v534
      %v536 = vpop.f32.mrb[0].mxu0
      %537 = vmatprep.mubr.bf16.mxu0 0
      %538 = vmatmul.mubr.bf16.gmra.mrb[0].mxu0 %v421
      %v539 = vpop.f32.mrb[0].mxu0
      %v540 = vadd.f32 0.0, %v539
      %v541 = vpop.f32.mrb[0].mxu0
      %v542 = vpop.f32.mrb[0].mxu0
      %v543 = vadd.f32 0.0, %v542
      %v544 = vpop.f32.mrb[0].mxu0
      %545 = vmatprep.mubr.bf16.mxu0 0
      %546 = vmatmul.mubr.bf16.gmra.mrb[0].mxu0 %v422
      %v547 = vpop.f32.mrb[0].mxu0
      %v548 = vadd.f32 0.0, %v547
      %v549 = vpop.f32.mrb[0].mxu0
      %v550 = vpop.f32.mrb[0].mxu0
      %v551 = vadd.f32 0.0, %v550
      %v552 = vpop.f32.mrb[0].mxu0
      %553 = vmatprep.mubr.bf16.mxu0 0
      %554 = vmatmul.mubr.bf16.gmra.mrb[0].mxu0 %v423
      %v555 = vpop.f32.mrb[0].mxu0
      %v556 = vadd.f32 0.0, %v555
      %v557 = vpop.f32.mrb[0].mxu0
      %v558 = vpop.f32.mrb[0].mxu0
      %v559 = vadd.f32 0.0, %v558
      %v560 = vpop.f32.mrb[0].mxu0
      %561 = vdwg.mxu0
      %v578 = vunpack.c.l.b16 %v393
      %v579 = vunpack.c.l.b16 %v394
      %v580 = vunpack.c.l.b16 %v395
      %v581 = vunpack.c.l.b16 %v396
      %v582 = vunpack.c.l.b16 %v397
      %v583 = vunpack.c.l.b16 %v398
      %v584 = vunpack.c.l.b16 %v399
      %v585 = vunpack.c.l.b16 %v400
      %v586 = vunpack.c.l.b16 %v401
      %v587 = vunpack.c.l.b16 %v402
      %v588 = vunpack.c.l.b16 %v403
      %v589 = vunpack.c.l.b16 %v404
      %v590 = vunpack.c.l.b16 %v405
      %v591 = vunpack.c.l.b16 %v406
      %v592 = vunpack.c.l.b16 %v407
      %v593 = vunpack.c.l.b16 %v408
      %v594 = vpack.c.b16 %v579, %v578
      %v595 = vpack.c.b16 %v581, %v580
      %v596 = vpack.c.b16 %v583, %v582
      %v597 = vpack.c.b16 %v585, %v584
      %v598 = vpack.c.b16 %v587, %v586
      %v599 = vpack.c.b16 %v589, %v588
      %v600 = vpack.c.b16 %v591, %v590
      %v601 = vpack.c.b16 %v593, %v592
      %610 = vmatprep.subr.bf16.mxu0 0
      %611 = vmatpush1.bf16.msra.mxu0 %v594
      %612 = vmatprep.subr.bf16.mxu0 0
      %613 = vmatpush1.bf16.msra.mxu0 %v595
      %614 = vmatprep.subr.bf16.mxu0 0
      %615 = vmatpush1.bf16.msra.mxu0 %v596
      %616 = vmatprep.subr.bf16.mxu0 0
      %617 = vmatpush1.bf16.msra.mxu0 %v597
      %618 = vmatprep.subr.bf16.mxu0 0
      %619 = vmatpush1.bf16.msra.mxu0 %v598
      %620 = vmatprep.subr.bf16.mxu0 0
      %621 = vmatpush1.bf16.msra.mxu0 %v599
      %622 = vmatprep.subr.bf16.mxu0 0
      %623 = vmatpush1.bf16.msra.mxu0 %v600
      %624 = vmatprep.subr.bf16.mxu0 0
      %625 = vmatpush1.bf16.msra.mxu0 %v601
      %626 = vmatprep.subr.bf16.mxu0 0
      %627 = vmatpush1.bf16.msra.mxu0 0
      %628 = vmatprep.subr.bf16.mxu0 0
      %629 = vmatpush1.bf16.msra.mxu0 0
      %630 = vmatprep.subr.bf16.mxu0 0
      %631 = vmatpush1.bf16.msra.mxu0 0
      %632 = vmatprep.subr.bf16.mxu0 0
      %633 = vmatpush1.bf16.msra.mxu0 0
      %634 = vmatprep.subr.bf16.mxu0 0
      %635 = vmatpush1.bf16.msra.mxu0 0
      %636 = vmatprep.subr.bf16.mxu0 0
      %637 = vmatpush1.bf16.msra.mxu0 0
      %638 = vmatprep.subr.bf16.mxu0 0
      %639 = vmatpush1.bf16.msra.mxu0 0
      %640 = vmatprep.subr.bf16.mxu0 0
      %641 = vmatpush1.bf16.msra.mxu0 0
      %642 = vmatprep.mubr.bf16.mxu0 0
      %643 = vmatmul.mubr.bf16.gmra.mrb[0].mxu0 %v388
      %v644 = vpop.f32.mrb[0].mxu0
      %v645 = vadd.f32 %v524, %v644
      %v646 = vpop.f32.mrb[0].mxu0
      %v647 = vpop.f32.mrb[0].mxu0
      %v648 = vadd.f32 %v527, %v647
      %v649 = vpop.f32.mrb[0].mxu0
      %650 = vmatprep.mubr.bf16.mxu0 0
      %651 = vmatmul.mubr.bf16.gmra.mrb[0].mxu0 %v389
      %v652 = vpop.f32.mrb[0].mxu0
      %v653 = vadd.f32 %v532, %v652
      %v654 = vpop.f32.mrb[0].mxu0
      %v655 = vpop.f32.mrb[0].mxu0
      %v656 = vadd.f32 %v535, %v655
      %v657 = vpop.f32.mrb[0].mxu0
      %658 = vmatprep.mubr.bf16.mxu0 0
      %659 = vmatmul.mubr.bf16.gmra.mrb[0].mxu0 %v390
      %v660 = vpop.f32.mrb[0].mxu0
      %v661 = vadd.f32 %v540, %v660
      %v662 = vpop.f32.mrb[0].mxu0
      %v663 = vpop.f32.mrb[0].mxu0
      %v664 = vadd.f32 %v543, %v663
      %v665 = vpop.f32.mrb[0].mxu0
      %666 = vmatprep.mubr.bf16.mxu0 0
      %667 = vmatmul.mubr.bf16.gmra.mrb[0].mxu0 %v391
      %v668 = vpop.f32.mrb[0].mxu0
      %v669 = vadd.f32 %v548, %v668
      %v670 = vpop.f32.mrb[0].mxu0
      %v671 = vpop.f32.mrb[0].mxu0
      %v672 = vadd.f32 %v551, %v671
      %v673 = vpop.f32.mrb[0].mxu0
      %674 = vmatprep.mubr.bf16.mxu0 0
      %675 = vmatmul.mubr.bf16.gmra.mrb[0].mxu0 %v392
      %v676 = vpop.f32.mrb[0].mxu0
      %v677 = vadd.f32 %v556, %v676
      %v678 = vpop.f32.mrb[0].mxu0
      %v679 = vpop.f32.mrb[0].mxu0
      %v680 = vadd.f32 %v559, %v679
      %v681 = vpop.f32.mrb[0].mxu0
      %682 = vdwg.mxu0
      %v683 = vld [vmem:[%s331 + $0x2] sm:$0xff]
      %v684 = vld [vmem:[%s331 + $0xa] sm:$0xff]
      %v685 = vld [vmem:[%s331 + $0x12] sm:$0xff]
      %v686 = vld [vmem:[%s331 + $0x1a] sm:$0xff]
      %v687 = vld [vmem:[%s331 + $0x22] sm:$0xff]
      %v688 = vld [vmem:[%s331 + $0x2a] sm:$0xff]
      %v689 = vld [vmem:[%s331 + $0x32] sm:$0xff]
      %v690 = vld [vmem:[%s331 + $0x3a] sm:$0xff]
      %v691 = vld [vmem:[%s331 + $0x42] sm:$0xff]
      %v692 = vld [vmem:[%s331 + $0x4a] sm:$0xff]
      %v693 = vpack.c.bf16 %v684, %v683
      %v694 = vpack.c.bf16 %v686, %v685
      %v695 = vpack.c.bf16 %v688, %v687
      %v696 = vpack.c.bf16 %v690, %v689
      %v697 = vpack.c.bf16 %v692, %v691
      %s698 = scalar_lea.vmem %s337, 128
      %v699 = vld [vmem:[%s698] sm:$0xf]
      %v700 = vld [vmem:[%s698 + $0x4] sm:$0xf]
      %v701 = vld [vmem:[%s698 + $0x8] sm:$0xf]
      %v702 = vld [vmem:[%s698 + $0xc] sm:$0xf]
      %v703 = vld [vmem:[%s698 + $0x10] sm:$0xf]
      %v704 = vld [vmem:[%s698 + $0x14] sm:$0xf]
      %v705 = vld [vmem:[%s698 + $0x18] sm:$0xf]
      %v706 = vld [vmem:[%s698 + $0x1c] sm:$0xf]
      %v707 = vld [vmem:[%s698 + $0x20] sm:$0xf]
      %v708 = vld [vmem:[%s698 + $0x24] sm:$0xf]
      %v709 = vld [vmem:[%s698 + $0x28] sm:$0xf]
      %v710 = vld [vmem:[%s698 + $0x2c] sm:$0xf]
      %v711 = vld [vmem:[%s698 + $0x30] sm:$0xf]
      %v712 = vld [vmem:[%s698 + $0x34] sm:$0xf]
      %v713 = vld [vmem:[%s698 + $0x38] sm:$0xf]
      %v714 = vld [vmem:[%s698 + $0x3c] sm:$0xf]
      %v731 = vunpack.c.l.b16 %v699
      %v732 = vunpack.c.l.b16 %v700
      %v733 = vunpack.c.l.b16 %v701
      %v734 = vunpack.c.l.b16 %v702
      %v735 = vunpack.c.l.b16 %v703
      %v736 = vunpack.c.l.b16 %v704
      %v737 = vunpack.c.l.b16 %v705
      %v738 = vunpack.c.l.b16 %v706
      %v739 = vunpack.c.l.b16 %v707
      %v740 = vunpack.c.l.b16 %v708
      %v741 = vunpack.c.l.b16 %v709
      %v742 = vunpack.c.l.b16 %v710
      %v743 = vunpack.c.l.b16 %v711
      %v744 = vunpack.c.l.b16 %v712
      %v745 = vunpack.c.l.b16 %v713
      %v746 = vunpack.c.l.b16 %v714
      %v747 = vpack.c.b16 %v732, %v731
      %v748 = vpack.c.b16 %v734, %v733
      %v749 = vpack.c.b16 %v736, %v735
      %v750 = vpack.c.b16 %v738, %v737
      %v751 = vpack.c.b16 %v740, %v739
      %v752 = vpack.c.b16 %v742, %v741
      %v753 = vpack.c.b16 %v744, %v743
      %v754 = vpack.c.b16 %v746, %v745
      %763 = vmatprep.subr.bf16.mxu0 0
      %764 = vmatpush1.bf16.msra.mxu0 %v747
      %765 = vmatprep.subr.bf16.mxu0 0
      %766 = vmatpush1.bf16.msra.mxu0 %v748
      %767 = vmatprep.subr.bf16.mxu0 0
      %768 = vmatpush1.bf16.msra.mxu0 %v749
      %769 = vmatprep.subr.bf16.mxu0 0
      %770 = vmatpush1.bf16.msra.mxu0 %v750
      %771 = vmatprep.subr.bf16.mxu0 0
      %772 = vmatpush1.bf16.msra.mxu0 %v751
      %773 = vmatprep.subr.bf16.mxu0 0
      %774 = vmatpush1.bf16.msra.mxu0 %v752
      %775 = vmatprep.subr.bf16.mxu0 0
      %776 = vmatpush1.bf16.msra.mxu0 %v753
      %777 = vmatprep.subr.bf16.mxu0 0
      %778 = vmatpush1.bf16.msra.mxu0 %v754
      %779 = vmatprep.subr.bf16.mxu0 0
      %780 = vmatpush1.bf16.msra.mxu0 0
      %781 = vmatprep.subr.bf16.mxu0 0
      %782 = vmatpush1.bf16.msra.mxu0 0
      %783 = vmatprep.subr.bf16.mxu0 0
      %784 = vmatpush1.bf16.msra.mxu0 0
      %785 = vmatprep.subr.bf16.mxu0 0
      %786 = vmatpush1.bf16.msra.mxu0 0
      %787 = vmatprep.subr.bf16.mxu0 0
      %788 = vmatpush1.bf16.msra.mxu0 0
      %789 = vmatprep.subr.bf16.mxu0 0
      %790 = vmatpush1.bf16.msra.mxu0 0
      %791 = vmatprep.subr.bf16.mxu0 0
      %792 = vmatpush1.bf16.msra.mxu0 0
      %793 = vmatprep.subr.bf16.mxu0 0
      %794 = vmatpush1.bf16.msra.mxu0 0
      %795 = vmatprep.mubr.bf16.mxu0 0
      %796 = vmatmul.mubr.bf16.gmra.mrb[0].mxu0 %v693
      %v797 = vpop.f32.mrb[0].mxu0
      %v798 = vadd.f32 0.0, %v797
      %v799 = vpop.f32.mrb[0].mxu0
      %v800 = vpop.f32.mrb[0].mxu0
      %v801 = vadd.f32 0.0, %v800
      %v802 = vpop.f32.mrb[0].mxu0
      %803 = vmatprep.mubr.bf16.mxu0 0
      %804 = vmatmul.mubr.bf16.gmra.mrb[0].mxu0 %v694
      %v805 = vpop.f32.mrb[0].mxu0
      %v806 = vadd.f32 0.0, %v805
      %v807 = vpop.f32.mrb[0].mxu0
      %v808 = vpop.f32.mrb[0].mxu0
      %v809 = vadd.f32 0.0, %v808
      %v810 = vpop.f32.mrb[0].mxu0
      %811 = vmatprep.mubr.bf16.mxu0 0
      %812 = vmatmul.mubr.bf16.gmra.mrb[0].mxu0 %v695
      %v813 = vpop.f32.mrb[0].mxu0
      %v814 = vadd.f32 0.0, %v813
      %v815 = vpop.f32.mrb[0].mxu0
      %v816 = vpop.f32.mrb[0].mxu0
      %v817 = vadd.f32 0.0, %v816
      %v818 = vpop.f32.mrb[0].mxu0
      %819 = vmatprep.mubr.bf16.mxu0 0
      %820 = vmatmul.mubr.bf16.gmra.mrb[0].mxu0 %v696
      %v821 = vpop.f32.mrb[0].mxu0
      %v822 = vadd.f32 0.0, %v821
      %v823 = vpop.f32.mrb[0].mxu0
      %v824 = vpop.f32.mrb[0].mxu0
      %v825 = vadd.f32 0.0, %v824
      %v826 = vpop.f32.mrb[0].mxu0
      %827 = vmatprep.mubr.bf16.mxu0 0
      %828 = vmatmul.mubr.bf16.gmra.mrb[0].mxu0 %v697
      %v829 = vpop.f32.mrb[0].mxu0
      %v830 = vadd.f32 0.0, %v829
      %v831 = vpop.f32.mrb[0].mxu0
      %v832 = vpop.f32.mrb[0].mxu0
      %v833 = vadd.f32 0.0, %v832
      %v834 = vpop.f32.mrb[0].mxu0
      %835 = vdwg.mxu0
      %v836 = vadd.f32 %v645, %v798
      %v837 = vadd.f32 %v648, %v801
      %v838 = vadd.f32 %v653, %v806
      %v839 = vadd.f32 %v656, %v809
      %v840 = vadd.f32 %v661, %v814
      %v841 = vadd.f32 %v664, %v817
      %v842 = vadd.f32 %v669, %v822
      %v843 = vadd.f32 %v672, %v825
      %v844 = vadd.f32 %v677, %v830
      %v845 = vadd.f32 %v680, %v833
      %v846 = vld [vmem:[%s331 + $0xa] sm:$0xff]
      %v847 = vld [vmem:[%s331 + $0x12] sm:$0xff]
      %v848 = vld [vmem:[%s331 + $0x1a] sm:$0xff]
      %v849 = vld [vmem:[%s331 + $0x22] sm:$0xff]
      %v850 = vld [vmem:[%s331 + $0x2a] sm:$0xff]
      %v851 = vld [vmem:[%s331 + $0x32] sm:$0xff]
      %v852 = vld [vmem:[%s331 + $0x3a] sm:$0xff]
      %v853 = vld [vmem:[%s331 + $0x42] sm:$0xff]
      %v854 = vld [vmem:[%s331 + $0x4a] sm:$0xff]
      %v855 = vld [vmem:[%s331 + $0x52] sm:$0xff]
      %v856 = vpack.c.bf16 %v847, %v846
      %v857 = vpack.c.bf16 %v849, %v848
      %v858 = vpack.c.bf16 %v851, %v850
      %v859 = vpack.c.bf16 %v853, %v852
      %v860 = vpack.c.bf16 %v855, %v854
      %s861 = scalar_lea.vmem %s337, 192
      %v862 = vld [vmem:[%s861] sm:$0xf]
      %v863 = vld [vmem:[%s861 + $0x4] sm:$0xf]
      %v864 = vld [vmem:[%s861 + $0x8] sm:$0xf]
      %v865 = vld [vmem:[%s861 + $0xc] sm:$0xf]
      %v866 = vld [vmem:[%s861 + $0x10] sm:$0xf]
      %v867 = vld [vmem:[%s861 + $0x14] sm:$0xf]
      %v868 = vld [vmem:[%s861 + $0x18] sm:$0xf]
      %v869 = vld [vmem:[%s861 + $0x1c] sm:$0xf]
      %v870 = vld [vmem:[%s861 + $0x20] sm:$0xf]
      %v871 = vld [vmem:[%s861 + $0x24] sm:$0xf]
      %v872 = vld [vmem:[%s861 + $0x28] sm:$0xf]
      %v873 = vld [vmem:[%s861 + $0x2c] sm:$0xf]
      %v874 = vld [vmem:[%s861 + $0x30] sm:$0xf]
      %v875 = vld [vmem:[%s861 + $0x34] sm:$0xf]
      %v876 = vld [vmem:[%s861 + $0x38] sm:$0xf]
      %v877 = vld [vmem:[%s861 + $0x3c] sm:$0xf]
      %v894 = vunpack.c.l.b16 %v862
      %v895 = vunpack.c.l.b16 %v863
      %v896 = vunpack.c.l.b16 %v864
      %v897 = vunpack.c.l.b16 %v865
      %v898 = vunpack.c.l.b16 %v866
      %v899 = vunpack.c.l.b16 %v867
      %v900 = vunpack.c.l.b16 %v868
      %v901 = vunpack.c.l.b16 %v869
      %v902 = vunpack.c.l.b16 %v870
      %v903 = vunpack.c.l.b16 %v871
      %v904 = vunpack.c.l.b16 %v872
      %v905 = vunpack.c.l.b16 %v873
      %v906 = vunpack.c.l.b16 %v874
      %v907 = vunpack.c.l.b16 %v875
      %v908 = vunpack.c.l.b16 %v876
      %v909 = vunpack.c.l.b16 %v877
      %v910 = vpack.c.b16 %v895, %v894
      %v911 = vpack.c.b16 %v897, %v896
      %v912 = vpack.c.b16 %v899, %v898
      %v913 = vpack.c.b16 %v901, %v900
      %v914 = vpack.c.b16 %v903, %v902
      %v915 = vpack.c.b16 %v905, %v904
      %v916 = vpack.c.b16 %v907, %v906
      %v917 = vpack.c.b16 %v909, %v908
      %926 = vmatprep.subr.bf16.mxu0 0
      %927 = vmatpush1.bf16.msra.mxu0 %v910
      %928 = vmatprep.subr.bf16.mxu0 0
      %929 = vmatpush1.bf16.msra.mxu0 %v911
      %930 = vmatprep.subr.bf16.mxu0 0
      %931 = vmatpush1.bf16.msra.mxu0 %v912
      %932 = vmatprep.subr.bf16.mxu0 0
      %933 = vmatpush1.bf16.msra.mxu0 %v913
      %934 = vmatprep.subr.bf16.mxu0 0
      %935 = vmatpush1.bf16.msra.mxu0 %v914
      %936 = vmatprep.subr.bf16.mxu0 0
      %937 = vmatpush1.bf16.msra.mxu0 %v915
      %938 = vmatprep.subr.bf16.mxu0 0
      %939 = vmatpush1.bf16.msra.mxu0 %v916
      %940 = vmatprep.subr.bf16.mxu0 0
      %941 = vmatpush1.bf16.msra.mxu0 %v917
      %942 = vmatprep.subr.bf16.mxu0 0
      %943 = vmatpush1.bf16.msra.mxu0 0
      %944 = vmatprep.subr.bf16.mxu0 0
      %945 = vmatpush1.bf16.msra.mxu0 0
      %946 = vmatprep.subr.bf16.mxu0 0
      %947 = vmatpush1.bf16.msra.mxu0 0
      %948 = vmatprep.subr.bf16.mxu0 0
      %949 = vmatpush1.bf16.msra.mxu0 0
      %950 = vmatprep.subr.bf16.mxu0 0
      %951 = vmatpush1.bf16.msra.mxu0 0
      %952 = vmatprep.subr.bf16.mxu0 0
      %953 = vmatpush1.bf16.msra.mxu0 0
      %954 = vmatprep.subr.bf16.mxu0 0
      %955 = vmatpush1.bf16.msra.mxu0 0
      %956 = vmatprep.subr.bf16.mxu0 0
      %957 = vmatpush1.bf16.msra.mxu0 0
      %958 = vmatprep.mubr.bf16.mxu0 0
      %959 = vmatmul.mubr.bf16.gmra.mrb[0].mxu0 %v856
      %v960 = vpop.f32.mrb[0].mxu0
      %v961 = vadd.f32 0.0, %v960
      %v962 = vpop.f32.mrb[0].mxu0
      %v963 = vpop.f32.mrb[0].mxu0
      %v964 = vadd.f32 0.0, %v963
      %v965 = vpop.f32.mrb[0].mxu0
      %966 = vmatprep.mubr.bf16.mxu0 0
      %967 = vmatmul.mubr.bf16.gmra.mrb[0].mxu0 %v857
      %v968 = vpop.f32.mrb[0].mxu0
      %v969 = vadd.f32 0.0, %v968
      %v970 = vpop.f32.mrb[0].mxu0
      %v971 = vpop.f32.mrb[0].mxu0
      %v972 = vadd.f32 0.0, %v971
      %v973 = vpop.f32.mrb[0].mxu0
      %974 = vmatprep.mubr.bf16.mxu0 0
      %975 = vmatmul.mubr.bf16.gmra.mrb[0].mxu0 %v858
      %v976 = vpop.f32.mrb[0].mxu0
      %v977 = vadd.f32 0.0, %v976
      %v978 = vpop.f32.mrb[0].mxu0
      %v979 = vpop.f32.mrb[0].mxu0
      %v980 = vadd.f32 0.0, %v979
      %v981 = vpop.f32.mrb[0].mxu0
      %982 = vmatprep.mubr.bf16.mxu0 0
      %983 = vmatmul.mubr.bf16.gmra.mrb[0].mxu0 %v859
      %v984 = vpop.f32.mrb[0].mxu0
      %v985 = vadd.f32 0.0, %v984
      %v986 = vpop.f32.mrb[0].mxu0
      %v987 = vpop.f32.mrb[0].mxu0
      %v988 = vadd.f32 0.0, %v987
      %v989 = vpop.f32.mrb[0].mxu0
      %990 = vmatprep.mubr.bf16.mxu0 0
      %991 = vmatmul.mubr.bf16.gmra.mrb[0].mxu0 %v860
      %v992 = vpop.f32.mrb[0].mxu0
      %v993 = vadd.f32 0.0, %v992
      %v994 = vpop.f32.mrb[0].mxu0
      %v995 = vpop.f32.mrb[0].mxu0
      %v996 = vadd.f32 0.0, %v995
      %v997 = vpop.f32.mrb[0].mxu0
      %998 = vdwg.mxu0
      %v999 = vadd.f32 %v836, %v961
      %v1000 = vadd.f32 %v837, %v964
      %v1001 = vadd.f32 %v838, %v969
      %v1002 = vadd.f32 %v839, %v972
      %v1003 = vadd.f32 %v840, %v977
      %v1004 = vadd.f32 %v841, %v980
      %v1005 = vadd.f32 %v842, %v985
      %v1006 = vadd.f32 %v843, %v988
      %v1007 = vadd.f32 %v844, %v993
      %v1008 = vadd.f32 %v845, %v996
      %v1009 = vld [vmem:[%s331 + $0xb] sm:$0xff]
      %v1010 = vld [vmem:[%s331 + $0x13] sm:$0xff]
      %v1011 = vld [vmem:[%s331 + $0x1b] sm:$0xff]
      %v1012 = vld [vmem:[%s331 + $0x23] sm:$0xff]
      %v1013 = vld [vmem:[%s331 + $0x2b] sm:$0xff]
      %v1014 = vld [vmem:[%s331 + $0x33] sm:$0xff]
      %v1015 = vld [vmem:[%s331 + $0x3b] sm:$0xff]
      %v1016 = vld [vmem:[%s331 + $0x43] sm:$0xff]
      %v1017 = vld [vmem:[%s331 + $0x4b] sm:$0xff]
      %v1018 = vld [vmem:[%s331 + $0x53] sm:$0xff]
      %v1019 = vpack.c.bf16 %v1010, %v1009
      %v1020 = vpack.c.bf16 %v1012, %v1011
      %v1021 = vpack.c.bf16 %v1014, %v1013
      %v1022 = vpack.c.bf16 %v1016, %v1015
      %v1023 = vpack.c.bf16 %v1018, %v1017
      %s1024 = scalar_lea.vmem %s337, 256
      %v1025 = vld [vmem:[%s1024] sm:$0xf]
      %v1026 = vld [vmem:[%s1024 + $0x4] sm:$0xf]
      %v1027 = vld [vmem:[%s1024 + $0x8] sm:$0xf]
      %v1028 = vld [vmem:[%s1024 + $0xc] sm:$0xf]
      %v1029 = vld [vmem:[%s1024 + $0x10] sm:$0xf]
      %v1030 = vld [vmem:[%s1024 + $0x14] sm:$0xf]
      %v1031 = vld [vmem:[%s1024 + $0x18] sm:$0xf]
      %v1032 = vld [vmem:[%s1024 + $0x1c] sm:$0xf]
      %v1033 = vld [vmem:[%s1024 + $0x20] sm:$0xf]
      %v1034 = vld [vmem:[%s1024 + $0x24] sm:$0xf]
      %v1035 = vld [vmem:[%s1024 + $0x28] sm:$0xf]
      %v1036 = vld [vmem:[%s1024 + $0x2c] sm:$0xf]
      %v1037 = vld [vmem:[%s1024 + $0x30] sm:$0xf]
      %v1038 = vld [vmem:[%s1024 + $0x34] sm:$0xf]
      %v1039 = vld [vmem:[%s1024 + $0x38] sm:$0xf]
      %v1040 = vld [vmem:[%s1024 + $0x3c] sm:$0xf]
      %v1057 = vunpack.c.l.b16 %v1025
      %v1058 = vunpack.c.l.b16 %v1026
      %v1059 = vunpack.c.l.b16 %v1027
      %v1060 = vunpack.c.l.b16 %v1028
      %v1061 = vunpack.c.l.b16 %v1029
      %v1062 = vunpack.c.l.b16 %v1030
      %v1063 = vunpack.c.l.b16 %v1031
      %v1064 = vunpack.c.l.b16 %v1032
      %v1065 = vunpack.c.l.b16 %v1033
      %v1066 = vunpack.c.l.b16 %v1034
      %v1067 = vunpack.c.l.b16 %v1035
      %v1068 = vunpack.c.l.b16 %v1036
      %v1069 = vunpack.c.l.b16 %v1037
      %v1070 = vunpack.c.l.b16 %v1038
      %v1071 = vunpack.c.l.b16 %v1039
      %v1072 = vunpack.c.l.b16 %v1040
      %v1073 = vpack.c.b16 %v1058, %v1057
      %v1074 = vpack.c.b16 %v1060, %v1059
      %v1075 = vpack.c.b16 %v1062, %v1061
      %v1076 = vpack.c.b16 %v1064, %v1063
      %v1077 = vpack.c.b16 %v1066, %v1065
      %v1078 = vpack.c.b16 %v1068, %v1067
      %v1079 = vpack.c.b16 %v1070, %v1069
      %v1080 = vpack.c.b16 %v1072, %v1071
      %1089 = vmatprep.subr.bf16.mxu0 0
      %1090 = vmatpush1.bf16.msra.mxu0 %v1073
      %1091 = vmatprep.subr.bf16.mxu0 0
      %1092 = vmatpush1.bf16.msra.mxu0 %v1074
      %1093 = vmatprep.subr.bf16.mxu0 0
      %1094 = vmatpush1.bf16.msra.mxu0 %v1075
      %1095 = vmatprep.subr.bf16.mxu0 0
      %1096 = vmatpush1.bf16.msra.mxu0 %v1076
      %1097 = vmatprep.subr.bf16.mxu0 0
      %1098 = vmatpush1.bf16.msra.mxu0 %v1077
      %1099 = vmatprep.subr.bf16.mxu0 0
      %1100 = vmatpush1.bf16.msra.mxu0 %v1078
      %1101 = vmatprep.subr.bf16.mxu0 0
      %1102 = vmatpush1.bf16.msra.mxu0 %v1079
      %1103 = vmatprep.subr.bf16.mxu0 0
      %1104 = vmatpush1.bf16.msra.mxu0 %v1080
      %1105 = vmatprep.subr.bf16.mxu0 0
      %1106 = vmatpush1.bf16.msra.mxu0 0
      %1107 = vmatprep.subr.bf16.mxu0 0
      %1108 = vmatpush1.bf16.msra.mxu0 0
      %1109 = vmatprep.subr.bf16.mxu0 0
      %1110 = vmatpush1.bf16.msra.mxu0 0
      %1111 = vmatprep.subr.bf16.mxu0 0
      %1112 = vmatpush1.bf16.msra.mxu0 0
      %1113 = vmatprep.subr.bf16.mxu0 0
      %1114 = vmatpush1.bf16.msra.mxu0 0
      %1115 = vmatprep.subr.bf16.mxu0 0
      %1116 = vmatpush1.bf16.msra.mxu0 0
      %1117 = vmatprep.subr.bf16.mxu0 0
      %1118 = vmatpush1.bf16.msra.mxu0 0
      %1119 = vmatprep.subr.bf16.mxu0 0
      %1120 = vmatpush1.bf16.msra.mxu0 0
      %1121 = vmatprep.mubr.bf16.mxu0 0
      %1122 = vmatmul.mubr.bf16.gmra.mrb[0].mxu0 %v1019
      %v1123 = vpop.f32.mrb[0].mxu0
      %v1124 = vadd.f32 0.0, %v1123
      %v1125 = vpop.f32.mrb[0].mxu0
      %v1126 = vpop.f32.mrb[0].mxu0
      %v1127 = vadd.f32 0.0, %v1126
      %v1128 = vpop.f32.mrb[0].mxu0
      %1129 = vmatprep.mubr.bf16.mxu0 0
      %1130 = vmatmul.mubr.bf16.gmra.mrb[0].mxu0 %v1020
      %v1131 = vpop.f32.mrb[0].mxu0
      %v1132 = vadd.f32 0.0, %v1131
      %v1133 = vpop.f32.mrb[0].mxu0
      %v1134 = vpop.f32.mrb[0].mxu0
      %v1135 = vadd.f32 0.0, %v1134
      %v1136 = vpop.f32.mrb[0].mxu0
      %1137 = vmatprep.mubr.bf16.mxu0 0
      %1138 = vmatmul.mubr.bf16.gmra.mrb[0].mxu0 %v1021
      %v1139 = vpop.f32.mrb[0].mxu0
      %v1140 = vadd.f32 0.0, %v1139
      %v1141 = vpop.f32.mrb[0].mxu0
      %v1142 = vpop.f32.mrb[0].mxu0
      %v1143 = vadd.f32 0.0, %v1142
      %v1144 = vpop.f32.mrb[0].mxu0
      %1145 = vmatprep.mubr.bf16.mxu0 0
      %1146 = vmatmul.mubr.bf16.gmra.mrb[0].mxu0 %v1022
      %v1147 = vpop.f32.mrb[0].mxu0
      %v1148 = vadd.f32 0.0, %v1147
      %v1149 = vpop.f32.mrb[0].mxu0
      %v1150 = vpop.f32.mrb[0].mxu0
      %v1151 = vadd.f32 0.0, %v1150
      %v1152 = vpop.f32.mrb[0].mxu0
      %1153 = vmatprep.mubr.bf16.mxu0 0
      %1154 = vmatmul.mubr.bf16.gmra.mrb[0].mxu0 %v1023
      %v1155 = vpop.f32.mrb[0].mxu0
      %v1156 = vadd.f32 0.0, %v1155
      %v1157 = vpop.f32.mrb[0].mxu0
      %v1158 = vpop.f32.mrb[0].mxu0
      %v1159 = vadd.f32 0.0, %v1158
      %v1160 = vpop.f32.mrb[0].mxu0
      %1161 = vdwg.mxu0
      %v1162 = vadd.f32 %v999, %v1124
      %v1163 = vadd.f32 %v1000, %v1127
      %v1164 = vadd.f32 %v1001, %v1132
      %v1165 = vadd.f32 %v1002, %v1135
      %v1166 = vadd.f32 %v1003, %v1140
      %v1167 = vadd.f32 %v1004, %v1143
      %v1168 = vadd.f32 %v1005, %v1148
      %v1169 = vadd.f32 %v1006, %v1151
      %v1170 = vadd.f32 %v1007, %v1156
      %v1171 = vadd.f32 %v1008, %v1159
      %v1172 = vld [vmem:[%s331 + $0xc] sm:$0xff]
      %v1173 = vld [vmem:[%s331 + $0x14] sm:$0xff]
      %v1174 = vld [vmem:[%s331 + $0x1c] sm:$0xff]
      %v1175 = vld [vmem:[%s331 + $0x24] sm:$0xff]
      %v1176 = vld [vmem:[%s331 + $0x2c] sm:$0xff]
      %v1177 = vld [vmem:[%s331 + $0x34] sm:$0xff]
      %v1178 = vld [vmem:[%s331 + $0x3c] sm:$0xff]
      %v1179 = vld [vmem:[%s331 + $0x44] sm:$0xff]
      %v1180 = vld [vmem:[%s331 + $0x4c] sm:$0xff]
      %v1181 = vld [vmem:[%s331 + $0x54] sm:$0xff]
      %v1182 = vpack.c.bf16 %v1173, %v1172
      %v1183 = vpack.c.bf16 %v1175, %v1174
      %v1184 = vpack.c.bf16 %v1177, %v1176
      %v1185 = vpack.c.bf16 %v1179, %v1178
      %v1186 = vpack.c.bf16 %v1181, %v1180
      %s1187 = scalar_lea.vmem %s337, 320
      %v1188 = vld [vmem:[%s1187] sm:$0xf]
      %v1189 = vld [vmem:[%s1187 + $0x4] sm:$0xf]
      %v1190 = vld [vmem:[%s1187 + $0x8] sm:$0xf]
      %v1191 = vld [vmem:[%s1187 + $0xc] sm:$0xf]
      %v1192 = vld [vmem:[%s1187 + $0x10] sm:$0xf]
      %v1193 = vld [vmem:[%s1187 + $0x14] sm:$0xf]
      %v1194 = vld [vmem:[%s1187 + $0x18] sm:$0xf]
      %v1195 = vld [vmem:[%s1187 + $0x1c] sm:$0xf]
      %v1196 = vld [vmem:[%s1187 + $0x20] sm:$0xf]
      %v1197 = vld [vmem:[%s1187 + $0x24] sm:$0xf]
      %v1198 = vld [vmem:[%s1187 + $0x28] sm:$0xf]
      %v1199 = vld [vmem:[%s1187 + $0x2c] sm:$0xf]
      %v1200 = vld [vmem:[%s1187 + $0x30] sm:$0xf]
      %v1201 = vld [vmem:[%s1187 + $0x34] sm:$0xf]
      %v1202 = vld [vmem:[%s1187 + $0x38] sm:$0xf]
      %v1203 = vld [vmem:[%s1187 + $0x3c] sm:$0xf]
      %v1220 = vunpack.c.l.b16 %v1188
      %v1221 = vunpack.c.l.b16 %v1189
      %v1222 = vunpack.c.l.b16 %v1190
      %v1223 = vunpack.c.l.b16 %v1191
      %v1224 = vunpack.c.l.b16 %v1192
      %v1225 = vunpack.c.l.b16 %v1193
      %v1226 = vunpack.c.l.b16 %v1194
      %v1227 = vunpack.c.l.b16 %v1195
      %v1228 = vunpack.c.l.b16 %v1196
      %v1229 = vunpack.c.l.b16 %v1197
      %v1230 = vunpack.c.l.b16 %v1198
      %v1231 = vunpack.c.l.b16 %v1199
      %v1232 = vunpack.c.l.b16 %v1200
      %v1233 = vunpack.c.l.b16 %v1201
      %v1234 = vunpack.c.l.b16 %v1202
      %v1235 = vunpack.c.l.b16 %v1203
      %v1236 = vpack.c.b16 %v1221, %v1220
      %v1237 = vpack.c.b16 %v1223, %v1222
      %v1238 = vpack.c.b16 %v1225, %v1224
      %v1239 = vpack.c.b16 %v1227, %v1226
      %v1240 = vpack.c.b16 %v1229, %v1228
      %v1241 = vpack.c.b16 %v1231, %v1230
      %v1242 = vpack.c.b16 %v1233, %v1232
      %v1243 = vpack.c.b16 %v1235, %v1234
      %1252 = vmatprep.subr.bf16.mxu0 0
      %1253 = vmatpush1.bf16.msra.mxu0 %v1236
      %1254 = vmatprep.subr.bf16.mxu0 0
      %1255 = vmatpush1.bf16.msra.mxu0 %v1237
      %1256 = vmatprep.subr.bf16.mxu0 0
      %1257 = vmatpush1.bf16.msra.mxu0 %v1238
      %1258 = vmatprep.subr.bf16.mxu0 0
      %1259 = vmatpush1.bf16.msra.mxu0 %v1239
      %1260 = vmatprep.subr.bf16.mxu0 0
      %1261 = vmatpush1.bf16.msra.mxu0 %v1240
      %1262 = vmatprep.subr.bf16.mxu0 0
      %1263 = vmatpush1.bf16.msra.mxu0 %v1241
      %1264 = vmatprep.subr.bf16.mxu0 0
      %1265 = vmatpush1.bf16.msra.mxu0 %v1242
      %1266 = vmatprep.subr.bf16.mxu0 0
      %1267 = vmatpush1.bf16.msra.mxu0 %v1243
      %1268 = vmatprep.subr.bf16.mxu0 0
      %1269 = vmatpush1.bf16.msra.mxu0 0
      %1270 = vmatprep.subr.bf16.mxu0 0
      %1271 = vmatpush1.bf16.msra.mxu0 0
      %1272 = vmatprep.subr.bf16.mxu0 0
      %1273 = vmatpush1.bf16.msra.mxu0 0
      %1274 = vmatprep.subr.bf16.mxu0 0
      %1275 = vmatpush1.bf16.msra.mxu0 0
      %1276 = vmatprep.subr.bf16.mxu0 0
      %1277 = vmatpush1.bf16.msra.mxu0 0
      %1278 = vmatprep.subr.bf16.mxu0 0
      %1279 = vmatpush1.bf16.msra.mxu0 0
      %1280 = vmatprep.subr.bf16.mxu0 0
      %1281 = vmatpush1.bf16.msra.mxu0 0
      %1282 = vmatprep.subr.bf16.mxu0 0
      %1283 = vmatpush1.bf16.msra.mxu0 0
      %1284 = vmatprep.mubr.bf16.mxu0 0
      %1285 = vmatmul.mubr.bf16.gmra.mrb[0].mxu0 %v1182
      %v1286 = vpop.f32.mrb[0].mxu0
      %v1287 = vadd.f32 0.0, %v1286
      %v1288 = vpop.f32.mrb[0].mxu0
      %v1289 = vpop.f32.mrb[0].mxu0
      %v1290 = vadd.f32 0.0, %v1289
      %v1291 = vpop.f32.mrb[0].mxu0
      %1292 = vmatprep.mubr.bf16.mxu0 0
      %1293 = vmatmul.mubr.bf16.gmra.mrb[0].mxu0 %v1183
      %v1294 = vpop.f32.mrb[0].mxu0
      %v1295 = vadd.f32 0.0, %v1294
      %v1296 = vpop.f32.mrb[0].mxu0
      %v1297 = vpop.f32.mrb[0].mxu0
      %v1298 = vadd.f32 0.0, %v1297
      %v1299 = vpop.f32.mrb[0].mxu0
      %1300 = vmatprep.mubr.bf16.mxu0 0
      %1301 = vmatmul.mubr.bf16.gmra.mrb[0].mxu0 %v1184
      %v1302 = vpop.f32.mrb[0].mxu0
      %v1303 = vadd.f32 0.0, %v1302
      %v1304 = vpop.f32.mrb[0].mxu0
      %v1305 = vpop.f32.mrb[0].mxu0
      %v1306 = vadd.f32 0.0, %v1305
      %v1307 = vpop.f32.mrb[0].mxu0
      %1308 = vmatprep.mubr.bf16.mxu0 0
      %1309 = vmatmul.mubr.bf16.gmra.mrb[0].mxu0 %v1185
      %v1310 = vpop.f32.mrb[0].mxu0
      %v1311 = vadd.f32 0.0, %v1310
      %v1312 = vpop.f32.mrb[0].mxu0
      %v1313 = vpop.f32.mrb[0].mxu0
      %v1314 = vadd.f32 0.0, %v1313
      %v1315 = vpop.f32.mrb[0].mxu0
      %1316 = vmatprep.mubr.bf16.mxu0 0
      %1317 = vmatmul.mubr.bf16.gmra.mrb[0].mxu0 %v1186
      %v1318 = vpop.f32.mrb[0].mxu0
      %v1319 = vadd.f32 0.0, %v1318
      %v1320 = vpop.f32.mrb[0].mxu0
      %v1321 = vpop.f32.mrb[0].mxu0
      %v1322 = vadd.f32 0.0, %v1321
      %v1323 = vpop.f32.mrb[0].mxu0
      %1324 = vdwg.mxu0
      %v1325 = vadd.f32 %v1162, %v1287
      %v1326 = vadd.f32 %v1163, %v1290
      %v1327 = vadd.f32 %v1164, %v1295
      %v1328 = vadd.f32 %v1165, %v1298
      %v1329 = vadd.f32 %v1166, %v1303
      %v1330 = vadd.f32 %v1167, %v1306
      %v1331 = vadd.f32 %v1168, %v1311
      %v1332 = vadd.f32 %v1169, %v1314
      %v1333 = vadd.f32 %v1170, %v1319
      %v1334 = vadd.f32 %v1171, %v1322
      %v1335 = vld [vmem:[%s331 + $0x14] sm:$0xff]
      %v1336 = vld [vmem:[%s331 + $0x1c] sm:$0xff]
      %v1337 = vld [vmem:[%s331 + $0x24] sm:$0xff]
      %v1338 = vld [vmem:[%s331 + $0x2c] sm:$0xff]
      %v1339 = vld [vmem:[%s331 + $0x34] sm:$0xff]
      %v1340 = vld [vmem:[%s331 + $0x3c] sm:$0xff]
      %v1341 = vld [vmem:[%s331 + $0x44] sm:$0xff]
      %v1342 = vld [vmem:[%s331 + $0x4c] sm:$0xff]
      %v1343 = vld [vmem:[%s331 + $0x54] sm:$0xff]
      %v1344 = vld [vmem:[%s331 + $0x5c] sm:$0xff]
      %v1345 = vpack.c.bf16 %v1336, %v1335
      %v1346 = vpack.c.bf16 %v1338, %v1337
      %v1347 = vpack.c.bf16 %v1340, %v1339
      %v1348 = vpack.c.bf16 %v1342, %v1341
      %v1349 = vpack.c.bf16 %v1344, %v1343
      %s1350 = scalar_lea.vmem %s337, 384
      %v1351 = vld [vmem:[%s1350] sm:$0xf]
      %v1352 = vld [vmem:[%s1350 + $0x4] sm:$0xf]
      %v1353 = vld [vmem:[%s1350 + $0x8] sm:$0xf]
      %v1354 = vld [vmem:[%s1350 + $0xc] sm:$0xf]
      %v1355 = vld [vmem:[%s1350 + $0x10] sm:$0xf]
      %v1356 = vld [vmem:[%s1350 + $0x14] sm:$0xf]
      %v1357 = vld [vmem:[%s1350 + $0x18] sm:$0xf]
      %v1358 = vld [vmem:[%s1350 + $0x1c] sm:$0xf]
      %v1359 = vld [vmem:[%s1350 + $0x20] sm:$0xf]
      %v1360 = vld [vmem:[%s1350 + $0x24] sm:$0xf]
      %v1361 = vld [vmem:[%s1350 + $0x28] sm:$0xf]
      %v1362 = vld [vmem:[%s1350 + $0x2c] sm:$0xf]
      %v1363 = vld [vmem:[%s1350 + $0x30] sm:$0xf]
      %v1364 = vld [vmem:[%s1350 + $0x34] sm:$0xf]
      %v1365 = vld [vmem:[%s1350 + $0x38] sm:$0xf]
      %v1366 = vld [vmem:[%s1350 + $0x3c] sm:$0xf]
      %v1383 = vunpack.c.l.b16 %v1351
      %v1384 = vunpack.c.l.b16 %v1352
      %v1385 = vunpack.c.l.b16 %v1353
      %v1386 = vunpack.c.l.b16 %v1354
      %v1387 = vunpack.c.l.b16 %v1355
      %v1388 = vunpack.c.l.b16 %v1356
      %v1389 = vunpack.c.l.b16 %v1357
      %v1390 = vunpack.c.l.b16 %v1358
      %v1391 = vunpack.c.l.b16 %v1359
      %v1392 = vunpack.c.l.b16 %v1360
      %v1393 = vunpack.c.l.b16 %v1361
      %v1394 = vunpack.c.l.b16 %v1362
      %v1395 = vunpack.c.l.b16 %v1363
      %v1396 = vunpack.c.l.b16 %v1364
      %v1397 = vunpack.c.l.b16 %v1365
      %v1398 = vunpack.c.l.b16 %v1366
      %v1399 = vpack.c.b16 %v1384, %v1383
      %v1400 = vpack.c.b16 %v1386, %v1385
      %v1401 = vpack.c.b16 %v1388, %v1387
      %v1402 = vpack.c.b16 %v1390, %v1389
      %v1403 = vpack.c.b16 %v1392, %v1391
      %v1404 = vpack.c.b16 %v1394, %v1393
      %v1405 = vpack.c.b16 %v1396, %v1395
      %v1406 = vpack.c.b16 %v1398, %v1397
      %1415 = vmatprep.subr.bf16.mxu0 0
      %1416 = vmatpush1.bf16.msra.mxu0 %v1399
      %1417 = vmatprep.subr.bf16.mxu0 0
      %1418 = vmatpush1.bf16.msra.mxu0 %v1400
      %1419 = vmatprep.subr.bf16.mxu0 0
      %1420 = vmatpush1.bf16.msra.mxu0 %v1401
      %1421 = vmatprep.subr.bf16.mxu0 0
      %1422 = vmatpush1.bf16.msra.mxu0 %v1402
      %1423 = vmatprep.subr.bf16.mxu0 0
      %1424 = vmatpush1.bf16.msra.mxu0 %v1403
      %1425 = vmatprep.subr.bf16.mxu0 0
      %1426 = vmatpush1.bf16.msra.mxu0 %v1404
      %1427 = vmatprep.subr.bf16.mxu0 0
      %1428 = vmatpush1.bf16.msra.mxu0 %v1405
      %1429 = vmatprep.subr.bf16.mxu0 0
      %1430 = vmatpush1.bf16.msra.mxu0 %v1406
      %1431 = vmatprep.subr.bf16.mxu0 0
      %1432 = vmatpush1.bf16.msra.mxu0 0
      %1433 = vmatprep.subr.bf16.mxu0 0
      %1434 = vmatpush1.bf16.msra.mxu0 0
      %1435 = vmatprep.subr.bf16.mxu0 0
      %1436 = vmatpush1.bf16.msra.mxu0 0
      %1437 = vmatprep.subr.bf16.mxu0 0
      %1438 = vmatpush1.bf16.msra.mxu0 0
      %1439 = vmatprep.subr.bf16.mxu0 0
      %1440 = vmatpush1.bf16.msra.mxu0 0
      %1441 = vmatprep.subr.bf16.mxu0 0
      %1442 = vmatpush1.bf16.msra.mxu0 0
      %1443 = vmatprep.subr.bf16.mxu0 0
      %1444 = vmatpush1.bf16.msra.mxu0 0
      %1445 = vmatprep.subr.bf16.mxu0 0
      %1446 = vmatpush1.bf16.msra.mxu0 0
      %1447 = vmatprep.mubr.bf16.mxu0 0
      %1448 = vmatmul.mubr.bf16.gmra.mrb[0].mxu0 %v1345
      %v1449 = vpop.f32.mrb[0].mxu0
      %v1450 = vadd.f32 0.0, %v1449
      %v1451 = vpop.f32.mrb[0].mxu0
      %v1452 = vpop.f32.mrb[0].mxu0
      %v1453 = vadd.f32 0.0, %v1452
      %v1454 = vpop.f32.mrb[0].mxu0
      %1455 = vmatprep.mubr.bf16.mxu0 0
      %1456 = vmatmul.mubr.bf16.gmra.mrb[0].mxu0 %v1346
      %v1457 = vpop.f32.mrb[0].mxu0
      %v1458 = vadd.f32 0.0, %v1457
      %v1459 = vpop.f32.mrb[0].mxu0
      %v1460 = vpop.f32.mrb[0].mxu0
      %v1461 = vadd.f32 0.0, %v1460
      %v1462 = vpop.f32.mrb[0].mxu0
      %1463 = vmatprep.mubr.bf16.mxu0 0
      %1464 = vmatmul.mubr.bf16.gmra.mrb[0].mxu0 %v1347
      %v1465 = vpop.f32.mrb[0].mxu0
      %v1466 = vadd.f32 0.0, %v1465
      %v1467 = vpop.f32.mrb[0].mxu0
      %v1468 = vpop.f32.mrb[0].mxu0
      %v1469 = vadd.f32 0.0, %v1468
      %v1470 = vpop.f32.mrb[0].mxu0
      %1471 = vmatprep.mubr.bf16.mxu0 0
      %1472 = vmatmul.mubr.bf16.gmra.mrb[0].mxu0 %v1348
      %v1473 = vpop.f32.mrb[0].mxu0
      %v1474 = vadd.f32 0.0, %v1473
      %v1475 = vpop.f32.mrb[0].mxu0
      %v1476 = vpop.f32.mrb[0].mxu0
      %v1477 = vadd.f32 0.0, %v1476
      %v1478 = vpop.f32.mrb[0].mxu0
      %1479 = vmatprep.mubr.bf16.mxu0 0
      %1480 = vmatmul.mubr.bf16.gmra.mrb[0].mxu0 %v1349
      %v1481 = vpop.f32.mrb[0].mxu0
      %v1482 = vadd.f32 0.0, %v1481
      %v1483 = vpop.f32.mrb[0].mxu0
      %v1484 = vpop.f32.mrb[0].mxu0
      %v1485 = vadd.f32 0.0, %v1484
      %v1486 = vpop.f32.mrb[0].mxu0
      %1487 = vdwg.mxu0
      %v1488 = vadd.f32 %v1325, %v1450
      %v1489 = vadd.f32 %v1326, %v1453
      %v1490 = vadd.f32 %v1327, %v1458
      %v1491 = vadd.f32 %v1328, %v1461
      %v1492 = vadd.f32 %v1329, %v1466
      %v1493 = vadd.f32 %v1330, %v1469
      %v1494 = vadd.f32 %v1331, %v1474
      %v1495 = vadd.f32 %v1332, %v1477
      %v1496 = vadd.f32 %v1333, %v1482
      %v1497 = vadd.f32 %v1334, %v1485
      %v1498 = vld [vmem:[%s331 + $0x15] sm:$0xff]
      %v1499 = vld [vmem:[%s331 + $0x1d] sm:$0xff]
      %v1500 = vld [vmem:[%s331 + $0x25] sm:$0xff]
      %v1501 = vld [vmem:[%s331 + $0x2d] sm:$0xff]
      %v1502 = vld [vmem:[%s331 + $0x35] sm:$0xff]
      %v1503 = vld [vmem:[%s331 + $0x3d] sm:$0xff]
      %v1504 = vld [vmem:[%s331 + $0x45] sm:$0xff]
      %v1505 = vld [vmem:[%s331 + $0x4d] sm:$0xff]
      %v1506 = vld [vmem:[%s331 + $0x55] sm:$0xff]
      %v1507 = vld [vmem:[%s331 + $0x5d] sm:$0xff]
      %v1508 = vpack.c.bf16 %v1499, %v1498
      %v1509 = vpack.c.bf16 %v1501, %v1500
      %v1510 = vpack.c.bf16 %v1503, %v1502
      %v1511 = vpack.c.bf16 %v1505, %v1504
      %v1512 = vpack.c.bf16 %v1507, %v1506
      %s1513 = scalar_lea.vmem %s337, 448
      %v1514 = vld [vmem:[%s1513] sm:$0xf]
      %v1515 = vld [vmem:[%s1513 + $0x4] sm:$0xf]
      %v1516 = vld [vmem:[%s1513 + $0x8] sm:$0xf]
      %v1517 = vld [vmem:[%s1513 + $0xc] sm:$0xf]
      %v1518 = vld [vmem:[%s1513 + $0x10] sm:$0xf]
      %v1519 = vld [vmem:[%s1513 + $0x14] sm:$0xf]
      %v1520 = vld [vmem:[%s1513 + $0x18] sm:$0xf]
      %v1521 = vld [vmem:[%s1513 + $0x1c] sm:$0xf]
      %v1522 = vld [vmem:[%s1513 + $0x20] sm:$0xf]
      %v1523 = vld [vmem:[%s1513 + $0x24] sm:$0xf]
      %v1524 = vld [vmem:[%s1513 + $0x28] sm:$0xf]
      %v1525 = vld [vmem:[%s1513 + $0x2c] sm:$0xf]
      %v1526 = vld [vmem:[%s1513 + $0x30] sm:$0xf]
      %v1527 = vld [vmem:[%s1513 + $0x34] sm:$0xf]
      %v1528 = vld [vmem:[%s1513 + $0x38] sm:$0xf]
      %v1529 = vld [vmem:[%s1513 + $0x3c] sm:$0xf]
      %v1546 = vunpack.c.l.b16 %v1514
      %v1547 = vunpack.c.l.b16 %v1515
      %v1548 = vunpack.c.l.b16 %v1516
      %v1549 = vunpack.c.l.b16 %v1517
      %v1550 = vunpack.c.l.b16 %v1518
      %v1551 = vunpack.c.l.b16 %v1519
      %v1552 = vunpack.c.l.b16 %v1520
      %v1553 = vunpack.c.l.b16 %v1521
      %v1554 = vunpack.c.l.b16 %v1522
      %v1555 = vunpack.c.l.b16 %v1523
      %v1556 = vunpack.c.l.b16 %v1524
      %v1557 = vunpack.c.l.b16 %v1525
      %v1558 = vunpack.c.l.b16 %v1526
      %v1559 = vunpack.c.l.b16 %v1527
      %v1560 = vunpack.c.l.b16 %v1528
      %v1561 = vunpack.c.l.b16 %v1529
      %v1562 = vpack.c.b16 %v1547, %v1546
      %v1563 = vpack.c.b16 %v1549, %v1548
      %v1564 = vpack.c.b16 %v1551, %v1550
      %v1565 = vpack.c.b16 %v1553, %v1552
      %v1566 = vpack.c.b16 %v1555, %v1554
      %v1567 = vpack.c.b16 %v1557, %v1556
      %v1568 = vpack.c.b16 %v1559, %v1558
      %v1569 = vpack.c.b16 %v1561, %v1560
      %1578 = vmatprep.subr.bf16.mxu0 0
      %1579 = vmatpush1.bf16.msra.mxu0 %v1562
      %1580 = vmatprep.subr.bf16.mxu0 0
      %1581 = vmatpush1.bf16.msra.mxu0 %v1563
      %1582 = vmatprep.subr.bf16.mxu0 0
      %1583 = vmatpush1.bf16.msra.mxu0 %v1564
      %1584 = vmatprep.subr.bf16.mxu0 0
      %1585 = vmatpush1.bf16.msra.mxu0 %v1565
      %1586 = vmatprep.subr.bf16.mxu0 0
      %1587 = vmatpush1.bf16.msra.mxu0 %v1566
      %1588 = vmatprep.subr.bf16.mxu0 0
      %1589 = vmatpush1.bf16.msra.mxu0 %v1567
      %1590 = vmatprep.subr.bf16.mxu0 0
      %1591 = vmatpush1.bf16.msra.mxu0 %v1568
      %1592 = vmatprep.subr.bf16.mxu0 0
      %1593 = vmatpush1.bf16.msra.mxu0 %v1569
      %1594 = vmatprep.subr.bf16.mxu0 0
      %1595 = vmatpush1.bf16.msra.mxu0 0
      %1596 = vmatprep.subr.bf16.mxu0 0
      %1597 = vmatpush1.bf16.msra.mxu0 0
      %1598 = vmatprep.subr.bf16.mxu0 0
      %1599 = vmatpush1.bf16.msra.mxu0 0
      %1600 = vmatprep.subr.bf16.mxu0 0
      %1601 = vmatpush1.bf16.msra.mxu0 0
      %1602 = vmatprep.subr.bf16.mxu0 0
      %1603 = vmatpush1.bf16.msra.mxu0 0
      %1604 = vmatprep.subr.bf16.mxu0 0
      %1605 = vmatpush1.bf16.msra.mxu0 0
      %1606 = vmatprep.subr.bf16.mxu0 0
      %1607 = vmatpush1.bf16.msra.mxu0 0
      %1608 = vmatprep.subr.bf16.mxu0 0
      %1609 = vmatpush1.bf16.msra.mxu0 0
      %1610 = vmatprep.mubr.bf16.mxu0 0
      %1611 = vmatmul.mubr.bf16.gmra.mrb[0].mxu0 %v1508
      %v1612 = vpop.f32.mrb[0].mxu0
      %v1613 = vadd.f32 0.0, %v1612
      %v1614 = vpop.f32.mrb[0].mxu0
      %v1615 = vpop.f32.mrb[0].mxu0
      %v1616 = vadd.f32 0.0, %v1615
      %v1617 = vpop.f32.mrb[0].mxu0
      %1618 = vmatprep.mubr.bf16.mxu0 0
      %1619 = vmatmul.mubr.bf16.gmra.mrb[0].mxu0 %v1509
      %v1620 = vpop.f32.mrb[0].mxu0
      %v1621 = vadd.f32 0.0, %v1620
      %v1622 = vpop.f32.mrb[0].mxu0
      %v1623 = vpop.f32.mrb[0].mxu0
      %v1624 = vadd.f32 0.0, %v1623
      %v1625 = vpop.f32.mrb[0].mxu0
      %1626 = vmatprep.mubr.bf16.mxu0 0
      %1627 = vmatmul.mubr.bf16.gmra.mrb[0].mxu0 %v1510
      %v1628 = vpop.f32.mrb[0].mxu0
      %v1629 = vadd.f32 0.0, %v1628
      %v1630 = vpop.f32.mrb[0].mxu0
      %v1631 = vpop.f32.mrb[0].mxu0
      %v1632 = vadd.f32 0.0, %v1631
      %v1633 = vpop.f32.mrb[0].mxu0
      %1634 = vmatprep.mubr.bf16.mxu0 0
      %1635 = vmatmul.mubr.bf16.gmra.mrb[0].mxu0 %v1511
      %v1636 = vpop.f32.mrb[0].mxu0
      %v1637 = vadd.f32 0.0, %v1636
      %v1638 = vpop.f32.mrb[0].mxu0
      %v1639 = vpop.f32.mrb[0].mxu0
      %v1640 = vadd.f32 0.0, %v1639
      %v1641 = vpop.f32.mrb[0].mxu0
      %1642 = vmatprep.mubr.bf16.mxu0 0
      %1643 = vmatmul.mubr.bf16.gmra.mrb[0].mxu0 %v1512
      %v1644 = vpop.f32.mrb[0].mxu0
      %v1645 = vadd.f32 0.0, %v1644
      %v1646 = vpop.f32.mrb[0].mxu0
      %v1647 = vpop.f32.mrb[0].mxu0
      %v1648 = vadd.f32 0.0, %v1647
      %v1649 = vpop.f32.mrb[0].mxu0
      %1650 = vdwg.mxu0
      %v1651 = vadd.f32 %v1488, %v1613
      %v1652 = vadd.f32 %v1489, %v1616
      %v1653 = vadd.f32 %v1490, %v1621
      %v1654 = vadd.f32 %v1491, %v1624
      %v1655 = vadd.f32 %v1492, %v1629
      %v1656 = vadd.f32 %v1493, %v1632
      %v1657 = vadd.f32 %v1494, %v1637
      %v1658 = vadd.f32 %v1495, %v1640
      %v1659 = vadd.f32 %v1496, %v1645
      %v1660 = vadd.f32 %v1497, %v1648
      %v1661 = vld [vmem:[%s331 + $0x16] sm:$0xff]
      %v1662 = vld [vmem:[%s331 + $0x1e] sm:$0xff]
      %v1663 = vld [vmem:[%s331 + $0x26] sm:$0xff]
      %v1664 = vld [vmem:[%s331 + $0x2e] sm:$0xff]
      %v1665 = vld [vmem:[%s331 + $0x36] sm:$0xff]
      %v1666 = vld [vmem:[%s331 + $0x3e] sm:$0xff]
      %v1667 = vld [vmem:[%s331 + $0x46] sm:$0xff]
      %v1668 = vld [vmem:[%s331 + $0x4e] sm:$0xff]
      %v1669 = vld [vmem:[%s331 + $0x56] sm:$0xff]
      %v1670 = vld [vmem:[%s331 + $0x5e] sm:$0xff]
      %v1671 = vpack.c.bf16 %v1662, %v1661
      %v1672 = vpack.c.bf16 %v1664, %v1663
      %v1673 = vpack.c.bf16 %v1666, %v1665
      %v1674 = vpack.c.bf16 %v1668, %v1667
      %v1675 = vpack.c.bf16 %v1670, %v1669
      %s1676 = scalar_lea.vmem %s337, 512
      %v1677 = vld [vmem:[%s1676] sm:$0xf]
      %v1678 = vld [vmem:[%s1676 + $0x4] sm:$0xf]
      %v1679 = vld [vmem:[%s1676 + $0x8] sm:$0xf]
      %v1680 = vld [vmem:[%s1676 + $0xc] sm:$0xf]
      %v1681 = vld [vmem:[%s1676 + $0x10] sm:$0xf]
      %v1682 = vld [vmem:[%s1676 + $0x14] sm:$0xf]
      %v1683 = vld [vmem:[%s1676 + $0x18] sm:$0xf]
      %v1684 = vld [vmem:[%s1676 + $0x1c] sm:$0xf]
      %v1685 = vld [vmem:[%s1676 + $0x20] sm:$0xf]
      %v1686 = vld [vmem:[%s1676 + $0x24] sm:$0xf]
      %v1687 = vld [vmem:[%s1676 + $0x28] sm:$0xf]
      %v1688 = vld [vmem:[%s1676 + $0x2c] sm:$0xf]
      %v1689 = vld [vmem:[%s1676 + $0x30] sm:$0xf]
      %v1690 = vld [vmem:[%s1676 + $0x34] sm:$0xf]
      %v1691 = vld [vmem:[%s1676 + $0x38] sm:$0xf]
      %v1692 = vld [vmem:[%s1676 + $0x3c] sm:$0xf]
      %v1709 = vunpack.c.l.b16 %v1677
      %v1710 = vunpack.c.l.b16 %v1678
      %v1711 = vunpack.c.l.b16 %v1679
      %v1712 = vunpack.c.l.b16 %v1680
      %v1713 = vunpack.c.l.b16 %v1681
      %v1714 = vunpack.c.l.b16 %v1682
      %v1715 = vunpack.c.l.b16 %v1683
      %v1716 = vunpack.c.l.b16 %v1684
      %v1717 = vunpack.c.l.b16 %v1685
      %v1718 = vunpack.c.l.b16 %v1686
      %v1719 = vunpack.c.l.b16 %v1687
      %v1720 = vunpack.c.l.b16 %v1688
      %v1721 = vunpack.c.l.b16 %v1689
      %v1722 = vunpack.c.l.b16 %v1690
      %v1723 = vunpack.c.l.b16 %v1691
      %v1724 = vunpack.c.l.b16 %v1692
      %v1725 = vpack.c.b16 %v1710, %v1709
      %v1726 = vpack.c.b16 %v1712, %v1711
      %v1727 = vpack.c.b16 %v1714, %v1713
      %v1728 = vpack.c.b16 %v1716, %v1715
      %v1729 = vpack.c.b16 %v1718, %v1717
      %v1730 = vpack.c.b16 %v1720, %v1719
      %v1731 = vpack.c.b16 %v1722, %v1721
      %v1732 = vpack.c.b16 %v1724, %v1723
      %1741 = vmatprep.subr.bf16.mxu0 0
      %1742 = vmatpush1.bf16.msra.mxu0 %v1725
      %1743 = vmatprep.subr.bf16.mxu0 0
      %1744 = vmatpush1.bf16.msra.mxu0 %v1726
      %1745 = vmatprep.subr.bf16.mxu0 0
      %1746 = vmatpush1.bf16.msra.mxu0 %v1727
      %1747 = vmatprep.subr.bf16.mxu0 0
      %1748 = vmatpush1.bf16.msra.mxu0 %v1728
      %1749 = vmatprep.subr.bf16.mxu0 0
      %1750 = vmatpush1.bf16.msra.mxu0 %v1729
      %1751 = vmatprep.subr.bf16.mxu0 0
      %1752 = vmatpush1.bf16.msra.mxu0 %v1730
      %1753 = vmatprep.subr.bf16.mxu0 0
      %1754 = vmatpush1.bf16.msra.mxu0 %v1731
      %1755 = vmatprep.subr.bf16.mxu0 0
      %1756 = vmatpush1.bf16.msra.mxu0 %v1732
      %1757 = vmatprep.subr.bf16.mxu0 0
      %1758 = vmatpush1.bf16.msra.mxu0 0
      %1759 = vmatprep.subr.bf16.mxu0 0
      %1760 = vmatpush1.bf16.msra.mxu0 0
      %1761 = vmatprep.subr.bf16.mxu0 0
      %1762 = vmatpush1.bf16.msra.mxu0 0
      %1763 = vmatprep.subr.bf16.mxu0 0
      %1764 = vmatpush1.bf16.msra.mxu0 0
      %1765 = vmatprep.subr.bf16.mxu0 0
      %1766 = vmatpush1.bf16.msra.mxu0 0
      %1767 = vmatprep.subr.bf16.mxu0 0
      %1768 = vmatpush1.bf16.msra.mxu0 0
      %1769 = vmatprep.subr.bf16.mxu0 0
      %1770 = vmatpush1.bf16.msra.mxu0 0
      %1771 = vmatprep.subr.bf16.mxu0 0
      %1772 = vmatpush1.bf16.msra.mxu0 0
      %1773 = vmatprep.mubr.bf16.mxu0 0
      %1774 = vmatmul.mubr.bf16.gmra.mrb[0].mxu0 %v1671
      %v1775 = vpop.f32.mrb[0].mxu0
      %v1776 = vadd.f32 0.0, %v1775
      %v1777 = vpop.f32.mrb[0].mxu0
      %v1778 = vpop.f32.mrb[0].mxu0
      %v1779 = vadd.f32 0.0, %v1778
      %v1780 = vpop.f32.mrb[0].mxu0
      %1781 = vmatprep.mubr.bf16.mxu0 0
      %1782 = vmatmul.mubr.bf16.gmra.mrb[0].mxu0 %v1672
      %v1783 = vpop.f32.mrb[0].mxu0
      %v1784 = vadd.f32 0.0, %v1783
      %v1785 = vpop.f32.mrb[0].mxu0
      %v1786 = vpop.f32.mrb[0].mxu0
      %v1787 = vadd.f32 0.0, %v1786
      %v1788 = vpop.f32.mrb[0].mxu0
      %1789 = vmatprep.mubr.bf16.mxu0 0
      %1790 = vmatmul.mubr.bf16.gmra.mrb[0].mxu0 %v1673
      %v1791 = vpop.f32.mrb[0].mxu0
      %v1792 = vadd.f32 0.0, %v1791
      %v1793 = vpop.f32.mrb[0].mxu0
      %v1794 = vpop.f32.mrb[0].mxu0
      %v1795 = vadd.f32 0.0, %v1794
      %v1796 = vpop.f32.mrb[0].mxu0
      %1797 = vmatprep.mubr.bf16.mxu0 0
      %1798 = vmatmul.mubr.bf16.gmra.mrb[0].mxu0 %v1674
      %v1799 = vpop.f32.mrb[0].mxu0
      %v1800 = vadd.f32 0.0, %v1799
      %v1801 = vpop.f32.mrb[0].mxu0
      %v1802 = vpop.f32.mrb[0].mxu0
      %v1803 = vadd.f32 0.0, %v1802
      %v1804 = vpop.f32.mrb[0].mxu0
      %1805 = vmatprep.mubr.bf16.mxu0 0
      %1806 = vmatmul.mubr.bf16.gmra.mrb[0].mxu0 %v1675
      %v1807 = vpop.f32.mrb[0].mxu0
      %v1808 = vadd.f32 0.0, %v1807
      %v1809 = vpop.f32.mrb[0].mxu0
      %v1810 = vpop.f32.mrb[0].mxu0
      %v1811 = vadd.f32 0.0, %v1810
      %v1812 = vpop.f32.mrb[0].mxu0
      %1813 = vdwg.mxu0
      %v1814 = vadd.f32 %v1651, %v1776
      %v1815 = vadd.f32 %v1652, %v1779
      %v1816 = vadd.f32 %v1653, %v1784
      %v1817 = vadd.f32 %v1654, %v1787
      %v1818 = vadd.f32 %v1655, %v1792
      %v1819 = vadd.f32 %v1656, %v1795
      %v1820 = vadd.f32 %v1657, %v1800
      %v1821 = vadd.f32 %v1658, %v1803
      %v1822 = vadd.f32 %v1659, %v1808
      %v1823 = vadd.f32 %v1660, %v1811
      %v1824 = vld [vmem:[#allocation2] sm:$0xff]
      %v1825 = vld [vmem:[#allocation2 + $0x8] sm:$0xff]
      %v1826 = vld [vmem:[#allocation2 + $0x10] sm:$0xff]
      %v1827 = vld [vmem:[#allocation2 + $0x18] sm:$0xff]
      %v1828 = vld [vmem:[#allocation2 + $0x20] sm:$0xff]
      %v1829 = vld [vmem:[#allocation2 + $0x28] sm:$0xff]
      %v1830 = vld [vmem:[#allocation2 + $0x30] sm:$0xff]
      %v1831 = vld [vmem:[#allocation2 + $0x38] sm:$0xff]
      %v1832 = vld [vmem:[#allocation2 + $0x40] sm:$0xff]
      %v1833 = vld [vmem:[#allocation2 + $0x48] sm:$0xff]
      %v1834 = vadd.f32 %v1824, %v1814
      %v1835 = vadd.f32 %v1825, %v1815
      %v1836 = vadd.f32 %v1826, %v1816
      %v1837 = vadd.f32 %v1827, %v1817
      %v1838 = vadd.f32 %v1828, %v1818
      %v1839 = vadd.f32 %v1829, %v1819
      %v1840 = vadd.f32 %v1830, %v1820
      %v1841 = vadd.f32 %v1831, %v1821
      %v1842 = vadd.f32 %v1832, %v1822
      %v1843 = vadd.f32 %v1833, %v1823
      %1844 = vst [vmem:[#allocation2] sm:$0xff] %v1834
      %1845 = vst [vmem:[#allocation2 + $0x8] sm:$0xff] %v1835
      %1846 = vst [vmem:[#allocation2 + $0x10] sm:$0xff] %v1836
      %1847 = vst [vmem:[#allocation2 + $0x18] sm:$0xff] %v1837
      %1848 = vst [vmem:[#allocation2 + $0x20] sm:$0xff] %v1838
      %1849 = vst [vmem:[#allocation2 + $0x28] sm:$0xff] %v1839
      %1850 = vst [vmem:[#allocation2 + $0x30] sm:$0xff] %v1840
      %1851 = vst [vmem:[#allocation2 + $0x38] sm:$0xff] %v1841
      %1852 = vst [vmem:[#allocation2 + $0x40] sm:$0xff] %v1842
      %1853 = vst [vmem:[#allocation2 + $0x48] sm:$0xff] %v1843
      %p1854 = scmp.eq.s32.totalorder %s25, 1
      // Predicated region
      $region41: #{residual_block_3d.4} parent=35 // pred_check
        %p1855 = pneg %p1854
      $region42: #{residual_block_3d.4} parent=35 // pred_check_branch
        %1857 = sbr.rel (%p1855) target = $region44
      $region43: #{residual_block_3d.4} parent=35 // pred_region
        %v1858 = vld [vmem:[%s331 + $0xb] sm:$0xff]
        %v1859 = vld [vmem:[%s331 + $0x13] sm:$0xff]
        %v1860 = vld [vmem:[%s331 + $0x1b] sm:$0xff]
        %v1861 = vld [vmem:[%s331 + $0x23] sm:$0xff]
        %v1862 = vld [vmem:[%s331 + $0x2b] sm:$0xff]
        %v1863 = vld [vmem:[%s331 + $0x33] sm:$0xff]
        %v1864 = vld [vmem:[%s331 + $0x3b] sm:$0xff]
        %v1865 = vld [vmem:[%s331 + $0x43] sm:$0xff]
        %v1866 = vld [vmem:[%s331 + $0x4b] sm:$0xff]
        %v1867 = vld [vmem:[%s331 + $0x53] sm:$0xff]
        %v1868 = vpack.c.bf16 %v1859, %v1858
        %v1869 = vpack.c.bf16 %v1861, %v1860
        %v1870 = vpack.c.bf16 %v1863, %v1862
        %v1871 = vpack.c.bf16 %v1865, %v1864
        %v1872 = vpack.c.bf16 %v1867, %v1866
        %v1873 = vld [vmem:[%s3] sm:$0xf]
        %v1874 = vld [vmem:[%s3 + $0x4] sm:$0xf]
        %v1875 = vld [vmem:[%s3 + $0x8] sm:$0xf]
        %v1876 = vld [vmem:[%s3 + $0xc] sm:$0xf]
        %v1877 = vld [vmem:[%s3 + $0x10] sm:$0xf]
        %v1878 = vld [vmem:[%s3 + $0x14] sm:$0xf]
        %v1879 = vld [vmem:[%s3 + $0x18] sm:$0xf]
        %v1880 = vld [vmem:[%s3 + $0x1c] sm:$0xf]
        %v1881 = vld [vmem:[%s3 + $0x20] sm:$0xf]
        %v1882 = vld [vmem:[%s3 + $0x24] sm:$0xf]
        %v1883 = vld [vmem:[%s3 + $0x28] sm:$0xf]
        %v1884 = vld [vmem:[%s3 + $0x2c] sm:$0xf]
        %v1885 = vld [vmem:[%s3 + $0x30] sm:$0xf]
        %v1886 = vld [vmem:[%s3 + $0x34] sm:$0xf]
        %v1887 = vld [vmem:[%s3 + $0x38] sm:$0xf]
        %v1888 = vld [vmem:[%s3 + $0x3c] sm:$0xf]
        %v1905 = vunpack.c.l.b16 %v1873
        %v1906 = vunpack.c.l.b16 %v1874
        %v1907 = vunpack.c.l.b16 %v1875
        %v1908 = vunpack.c.l.b16 %v1876
        %v1909 = vunpack.c.l.b16 %v1877
        %v1910 = vunpack.c.l.b16 %v1878
        %v1911 = vunpack.c.l.b16 %v1879
        %v1912 = vunpack.c.l.b16 %v1880
        %v1913 = vunpack.c.l.b16 %v1881
        %v1914 = vunpack.c.l.b16 %v1882
        %v1915 = vunpack.c.l.b16 %v1883
        %v1916 = vunpack.c.l.b16 %v1884
        %v1917 = vunpack.c.l.b16 %v1885
        %v1918 = vunpack.c.l.b16 %v1886
        %v1919 = vunpack.c.l.b16 %v1887
        %v1920 = vunpack.c.l.b16 %v1888
        %v1921 = vpack.c.b16 %v1906, %v1905
        %v1922 = vpack.c.b16 %v1908, %v1907
        %v1923 = vpack.c.b16 %v1910, %v1909
        %v1924 = vpack.c.b16 %v1912, %v1911
        %v1925 = vpack.c.b16 %v1914, %v1913
        %v1926 = vpack.c.b16 %v1916, %v1915
        %v1927 = vpack.c.b16 %v1918, %v1917
        %v1928 = vpack.c.b16 %v1920, %v1919
        %1937 = vmatprep.subr.bf16.mxu0 0
        %1938 = vmatpush1.bf16.msra.mxu0 %v1921
        %1939 = vmatprep.subr.bf16.mxu0 0
        %1940 = vmatpush1.bf16.msra.mxu0 %v1922
        %1941 = vmatprep.subr.bf16.mxu0 0
        %1942 = vmatpush1.bf16.msra.mxu0 %v1923
        %1943 = vmatprep.subr.bf16.mxu0 0
        %1944 = vmatpush1.bf16.msra.mxu0 %v1924
        %1945 = vmatprep.subr.bf16.mxu0 0
        %1946 = vmatpush1.bf16.msra.mxu0 %v1925
        %1947 = vmatprep.subr.bf16.mxu0 0
        %1948 = vmatpush1.bf16.msra.mxu0 %v1926
        %1949 = vmatprep.subr.bf16.mxu0 0
        %1950 = vmatpush1.bf16.msra.mxu0 %v1927
        %1951 = vmatprep.subr.bf16.mxu0 0
        %1952 = vmatpush1.bf16.msra.mxu0 %v1928
        %1953 = vmatprep.subr.bf16.mxu0 0
        %1954 = vmatpush1.bf16.msra.mxu0 0
        %1955 = vmatprep.subr.bf16.mxu0 0
        %1956 = vmatpush1.bf16.msra.mxu0 0
        %1957 = vmatprep.subr.bf16.mxu0 0
        %1958 = vmatpush1.bf16.msra.mxu0 0
        %1959 = vmatprep.subr.bf16.mxu0 0
        %1960 = vmatpush1.bf16.msra.mxu0 0
        %1961 = vmatprep.subr.bf16.mxu0 0
        %1962 = vmatpush1.bf16.msra.mxu0 0
        %1963 = vmatprep.subr.bf16.mxu0 0
        %1964 = vmatpush1.bf16.msra.mxu0 0
        %1965 = vmatprep.subr.bf16.mxu0 0
        %1966 = vmatpush1.bf16.msra.mxu0 0
        %1967 = vmatprep.subr.bf16.mxu0 0
        %1968 = vmatpush1.bf16.msra.mxu0 0
        %1969 = vmatprep.mubr.bf16.mxu0 0
        %1970 = vmatmul.mubr.bf16.gmra.mrb[0].mxu0 %v1868
        %v1971 = vpop.f32.mrb[0].mxu0
        %v1972 = vadd.f32 0.0, %v1971
        %v1973 = vpop.f32.mrb[0].mxu0
        %v1974 = vpop.f32.mrb[0].mxu0
        %v1975 = vadd.f32 0.0, %v1974
        %v1976 = vpop.f32.mrb[0].mxu0
        %1977 = vmatprep.mubr.bf16.mxu0 0
        %1978 = vmatmul.mubr.bf16.gmra.mrb[0].mxu0 %v1869
        %v1979 = vpop.f32.mrb[0].mxu0
        %v1980 = vadd.f32 0.0, %v1979
        %v1981 = vpop.f32.mrb[0].mxu0
        %v1982 = vpop.f32.mrb[0].mxu0
        %v1983 = vadd.f32 0.0, %v1982
        %v1984 = vpop.f32.mrb[0].mxu0
        %1985 = vmatprep.mubr.bf16.mxu0 0
        %1986 = vmatmul.mubr.bf16.gmra.mrb[0].mxu0 %v1870
        %v1987 = vpop.f32.mrb[0].mxu0
        %v1988 = vadd.f32 0.0, %v1987
        %v1989 = vpop.f32.mrb[0].mxu0
        %v1990 = vpop.f32.mrb[0].mxu0
        %v1991 = vadd.f32 0.0, %v1990
        %v1992 = vpop.f32.mrb[0].mxu0
        %1993 = vmatprep.mubr.bf16.mxu0 0
        %1994 = vmatmul.mubr.bf16.gmra.mrb[0].mxu0 %v1871
        %v1995 = vpop.f32.mrb[0].mxu0
        %v1996 = vadd.f32 0.0, %v1995
        %v1997 = vpop.f32.mrb[0].mxu0
        %v1998 = vpop.f32.mrb[0].mxu0
        %v1999 = vadd.f32 0.0, %v1998
        %v2000 = vpop.f32.mrb[0].mxu0
        %2001 = vmatprep.mubr.bf16.mxu0 0
        %2002 = vmatmul.mubr.bf16.gmra.mrb[0].mxu0 %v1872
        %v2003 = vpop.f32.mrb[0].mxu0
        %v2004 = vadd.f32 0.0, %v2003
        %v2005 = vpop.f32.mrb[0].mxu0
        %v2006 = vpop.f32.mrb[0].mxu0
        %v2007 = vadd.f32 0.0, %v2006
        %v2008 = vpop.f32.mrb[0].mxu0
        %2009 = vdwg.mxu0
        %v2010 = vld [vmem:[%s2] sm:$0xff]
        %v2011 = vld [vmem:[%s2 + $0x8] sm:$0xff]
        %v2012 = vld [vmem:[%s2 + $0x10] sm:$0xff]
        %v2013 = vld [vmem:[%s2 + $0x18] sm:$0xff]
        %v2014 = vld [vmem:[%s2 + $0x20] sm:$0xff]
        %v2015 = vld [vmem:[%s2 + $0x28] sm:$0xff]
        %v2016 = vld [vmem:[%s2 + $0x30] sm:$0xff]
        %v2017 = vld [vmem:[%s2 + $0x38] sm:$0xff]
        %v2018 = vld [vmem:[%s2 + $0x40] sm:$0xff]
        %v2019 = vld [vmem:[%s2 + $0x48] sm:$0xff]
        %v2020 = vmul.f32 %v1972, %v2010
        %v2021 = vmul.f32 %v1975, %v2011
        %v2022 = vmul.f32 %v1980, %v2012
        %v2023 = vmul.f32 %v1983, %v2013
        %v2024 = vmul.f32 %v1988, %v2014
        %v2025 = vmul.f32 %v1991, %v2015
        %v2026 = vmul.f32 %v1996, %v2016
        %v2027 = vmul.f32 %v1999, %v2017
        %v2028 = vmul.f32 %v2004, %v2018
        %v2029 = vmul.f32 %v2007, %v2019
        %v2030 = vadd.f32 %v2020, %v2021
        %v2031 = vadd.f32 %v2030, %v2022
        %v2032 = vadd.f32 %v2031, %v2023
        %v2033 = vadd.f32 %v2032, %v2024
        %v2034 = vadd.f32 %v2033, %v2025
        %v2035 = vadd.f32 %v2034, %v2026
        %v2036 = vadd.f32 %v2035, %v2027
        %v2037 = vadd.f32 %v2036, %v2028
        %v2038 = vadd.f32 %v2037, %v2029
        %v2039 = vrot.slane %v2038, 4
        %v2040 = vadd.f32 %v2038, %v2039
        %v2041 = vrot.slane %v2040, 2
        %v2042 = vadd.f32 %v2040, %v2041
        %v2043 = vrot.slane %v2042, 1
        %v2044 = vadd.f32 %v2042, %v2043
        %2045 = vst [vmem:[%s362] sm:$0x1] %v2044
        %v2046 = vmul.f32 %v2020, %v1972
        %v2047 = vmul.f32 %v2021, %v1975
        %v2048 = vmul.f32 %v2022, %v1980
        %v2049 = vmul.f32 %v2023, %v1983
        %v2050 = vmul.f32 %v2024, %v1988
        %v2051 = vmul.f32 %v2025, %v1991
        %v2052 = vmul.f32 %v2026, %v1996
        %v2053 = vmul.f32 %v2027, %v1999
        %v2054 = vmul.f32 %v2028, %v2004
        %v2055 = vmul.f32 %v2029, %v2007
        %v2056 = vadd.f32 %v2046, %v2047
        %v2057 = vadd.f32 %v2056, %v2048
        %v2058 = vadd.f32 %v2057, %v2049
        %v2059 = vadd.f32 %v2058, %v2050
        %v2060 = vadd.f32 %v2059, %v2051
        %v2061 = vadd.f32 %v2060, %v2052
        %v2062 = vadd.f32 %v2061, %v2053
        %v2063 = vadd.f32 %v2062, %v2054
        %v2064 = vadd.f32 %v2063, %v2055
        %v2065 = vrot.slane %v2064, 4
        %v2066 = vadd.f32 %v2064, %v2065
        %v2067 = vrot.slane %v2066, 2
        %v2068 = vadd.f32 %v2066, %v2067
        %v2069 = vrot.slane %v2068, 1
        %v2070 = vadd.f32 %v2068, %v2069
        %2071 = vst [vmem:[%s362 + $0x1] sm:$0x1] %v2070
      $region44: #{residual_block_3d.4} parent=35 // pred_fallthru
        _
      %p2072 = scmp.eq.s32.totalorder %s25, 2
      // Predicated region
      $region45: #{residual_block_3d.4} parent=35 // pred_check
        %p2073 = pneg %p2072
      $region46: #{residual_block_3d.4} parent=35 // pred_check_branch
        %2075 = sbr.rel (%p2073) target = $region48
      $region47: #{residual_block_3d.4} parent=35 // pred_region
        %v2076 = vld [vmem:[#allocation2] sm:$0xff]
        %v2077 = vld [vmem:[#allocation2 + $0x8] sm:$0xff]
        %v2078 = vld [vmem:[#allocation2 + $0x10] sm:$0xff]
        %v2079 = vld [vmem:[#allocation2 + $0x18] sm:$0xff]
        %v2080 = vld [vmem:[#allocation2 + $0x20] sm:$0xff]
        %v2081 = vld [vmem:[#allocation2 + $0x28] sm:$0xff]
        %v2082 = vld [vmem:[#allocation2 + $0x30] sm:$0xff]
        %v2083 = vld [vmem:[#allocation2 + $0x38] sm:$0xff]
        %v2084 = vld [vmem:[#allocation2 + $0x40] sm:$0xff]
        %v2085 = vld [vmem:[#allocation2 + $0x48] sm:$0xff]
        %2086 = vst [vmem:[%s346] sm:$0xff] %v2076
        %2087 = vst [vmem:[%s346 + $0x8] sm:$0xff] %v2077
        %2088 = vst [vmem:[%s346 + $0x10] sm:$0xff] %v2078
        %2089 = vst [vmem:[%s346 + $0x18] sm:$0xff] %v2079
        %2090 = vst [vmem:[%s346 + $0x20] sm:$0xff] %v2080
        %2091 = vst [vmem:[%s346 + $0x28] sm:$0xff] %v2081
        %2092 = vst [vmem:[%s346 + $0x30] sm:$0xff] %v2082
        %2093 = vst [vmem:[%s346 + $0x38] sm:$0xff] %v2083
        %2094 = vst [vmem:[%s346 + $0x40] sm:$0xff] %v2084
        %2095 = vst [vmem:[%s346 + $0x48] sm:$0xff] %v2085
        %v2096 = vld [vmem:[%s2] sm:$0xff]
        %v2097 = vld [vmem:[%s2 + $0x8] sm:$0xff]
        %v2098 = vld [vmem:[%s2 + $0x10] sm:$0xff]
        %v2099 = vld [vmem:[%s2 + $0x18] sm:$0xff]
        %v2100 = vld [vmem:[%s2 + $0x20] sm:$0xff]
        %v2101 = vld [vmem:[%s2 + $0x28] sm:$0xff]
        %v2102 = vld [vmem:[%s2 + $0x30] sm:$0xff]
        %v2103 = vld [vmem:[%s2 + $0x38] sm:$0xff]
        %v2104 = vld [vmem:[%s2 + $0x40] sm:$0xff]
        %v2105 = vld [vmem:[%s2 + $0x48] sm:$0xff]
        %v2106 = vmul.f32 %v2076, %v2096
        %v2107 = vmul.f32 %v2077, %v2097
        %v2108 = vmul.f32 %v2078, %v2098
        %v2109 = vmul.f32 %v2079, %v2099
        %v2110 = vmul.f32 %v2080, %v2100
        %v2111 = vmul.f32 %v2081, %v2101
        %v2112 = vmul.f32 %v2082, %v2102
        %v2113 = vmul.f32 %v2083, %v2103
        %v2114 = vmul.f32 %v2084, %v2104
        %v2115 = vmul.f32 %v2085, %v2105
        %v2116 = vadd.f32 %v2106, %v2107
        %v2117 = vadd.f32 %v2116, %v2108
        %v2118 = vadd.f32 %v2117, %v2109
        %v2119 = vadd.f32 %v2118, %v2110
        %v2120 = vadd.f32 %v2119, %v2111
        %v2121 = vadd.f32 %v2120, %v2112
        %v2122 = vadd.f32 %v2121, %v2113
        %v2123 = vadd.f32 %v2122, %v2114
        %v2124 = vadd.f32 %v2123, %v2115
        %v2125 = vrot.slane %v2124, 4
        %v2126 = vadd.f32 %v2124, %v2125
        %v2127 = vrot.slane %v2126, 2
        %v2128 = vadd.f32 %v2126, %v2127
        %v2129 = vrot.slane %v2128, 1
        %v2130 = vadd.f32 %v2128, %v2129
        %2131 = vst [vmem:[%s354] sm:$0x1] %v2130
        %v2132 = vmul.f32 %v2106, %v2076
        %v2133 = vmul.f32 %v2107, %v2077
        %v2134 = vmul.f32 %v2108, %v2078
        %v2135 = vmul.f32 %v2109, %v2079
        %v2136 = vmul.f32 %v2110, %v2080
        %v2137 = vmul.f32 %v2111, %v2081
        %v2138 = vmul.f32 %v2112, %v2082
        %v2139 = vmul.f32 %v2113, %v2083
        %v2140 = vmul.f32 %v2114, %v2084
        %v2141 = vmul.f32 %v2115, %v2085
        %v2142 = vadd.f32 %v2132, %v2133
        %v2143 = vadd.f32 %v2142, %v2134
        %v2144 = vadd.f32 %v2143, %v2135
        %v2145 = vadd.f32 %v2144, %v2136
        %v2146 = vadd.f32 %v2145, %v2137
        %v2147 = vadd.f32 %v2146, %v2138
        %v2148 = vadd.f32 %v2147, %v2139
        %v2149 = vadd.f32 %v2148, %v2140
        %v2150 = vadd.f32 %v2149, %v2141
        %v2151 = vrot.slane %v2150, 4
        %v2152 = vadd.f32 %v2150, %v2151
        %v2153 = vrot.slane %v2152, 2
        %v2154 = vadd.f32 %v2152, %v2153
        %v2155 = vrot.slane %v2154, 1
        %v2156 = vadd.f32 %v2154, %v2155
        %2157 = vst [vmem:[%s354 + $0x1] sm:$0x1] %v2156
      $region48: #{residual_block_3d.4} parent=35 // pred_fallthru
        _
      %p2158 = scmp.lt.s32.totalorder %s23, 1
      %s2159 = scalar_select %p2158, %s23, 1
      %p2160 = scmp.lt.s32.totalorder %s24, 7
      %s2161 = scalar_select %p2160, %s24, 7
      %s2162 = smul.addr %s2161, 10
      %s2163 = smul.addr %s2159, 80
      %s2164 = sadd.s32 %s2162, %s2163
      %s2165 = smul.addr %s2164, 8
      %s2166 = scalar_lea.vmem %s4, %s2165
      %p2167 = scmp.lt.s32.totalorder %s23, 1
      %s2168 = scalar_select %p2167, %s23, 1
      %p2169 = scmp.lt.s32.totalorder %s24, 7
      %s2170 = scalar_select %p2169, %s24, 7
      %s2171 = smul.addr %s2168, 8
      %s2172 = sadd.s32 %s2170, %s2171
      %s2173 = smul.addr %s2172, 2
      %s2174 = scalar_lea.vmem %s5, %s2173
      %p2175 = scmp.lt.s32.totalorder %s23, 1
      %s2176 = scalar_select %p2175, %s23, 1
      %p2177 = scmp.lt.s32.totalorder %s24, 7
      %s2178 = scalar_select %p2177, %s24, 7
      %s2179 = smul.addr %s2176, 8
      %s2180 = sadd.s32 %s2178, %s2179
      %s2181 = smul.addr %s2180, 2
      %s2182 = scalar_lea.vmem %s6, %s2181
      // Predicated region
      $region49: #{residual_block_3d.4} parent=35 // pred_check
        %p2183 = pneg %p155
      $region50: #{residual_block_3d.4} parent=35 // pred_check_branch
        %2185 = sbr.rel (%p2183) target = $region52
      $region51: #{residual_block_3d.4} parent=35 // pred_region
        _
      $region52: #{residual_block_3d.4} parent=35 // pred_fallthru
        _
      // Predicated region
      $region53: #{residual_block_3d.4} parent=35 // pred_check
        %p2186 = pneg %p183
      $region54: #{residual_block_3d.4} parent=35 // pred_check_branch
        %2188 = sbr.rel (%p2186) target = $region56
      $region55: #{residual_block_3d.4} parent=35 // pred_region
        _
      $region56: #{residual_block_3d.4} parent=35 // pred_fallthru
        _
      // Predicated region
      $region57: #{residual_block_3d.4} parent=35 // pred_check
        %p2189 = pneg %p211
      $region58: #{residual_block_3d.4} parent=35 // pred_check_branch
        %2191 = sbr.rel (%p2189) target = $region60
      $region59: #{residual_block_3d.4} parent=35 // pred_region
        _
      $region60: #{residual_block_3d.4} parent=35 // pred_fallthru
        _
    $region36: #{residual_block_3d.4} parent=5 // pred_fallthru
      _
    %p2192 = scmp.le.s32.totalorder 2, %s13
    // Predicated region
    $region61: #{residual_block_3d.4} parent=5 // pred_check
      %p2193 = pneg %p2192
    $region62: #{residual_block_3d.4} parent=5 // pred_check_branch
      %2195 = sbr.rel (%p2193) target = $region64
    $region63: #{residual_block_3d.4} parent=5 // pred_region
      %s2196 = ssub.s32 %s13, 2
      // Predicated region
      $region65: #{residual_block_3d.4} parent=63 // pred_check
        %p2197 = pneg %p161
      $region66: #{residual_block_3d.4} parent=63 // pred_check_branch
        %2199 = sbr.rel (%p2197) target = $region68
      $region67: #{residual_block_3d.4} parent=63 // pred_region
        %p2200 = scmp.lt.s32.totalorder %s26, 1
        %s2201 = scalar_select %p2200, %s26, 1
        %p2202 = scmp.lt.s32.totalorder %s27, 7
        %s2203 = scalar_select %p2202, %s27, 7
        %s2204 = smul.addr %s2203, 10
        %s2205 = smul.addr %s2201, 80
        %s2206 = sadd.s32 %s2204, %s2205
        %s2207 = smul.addr %s2206, 8
        %s2208 = scalar_lea.vmem %s4, %s2207
      $region68: #{residual_block_3d.4} parent=63 // pred_fallthru
        _
      // Predicated region
      $region69: #{residual_block_3d.4} parent=63 // pred_check
        %p2209 = pneg %p189
      $region70: #{residual_block_3d.4} parent=63 // pred_check_branch
        %2211 = sbr.rel (%p2209) target = $region72
      $region71: #{residual_block_3d.4} parent=63 // pred_region
        %p2212 = scmp.lt.s32.totalorder %s26, 1
        %s2213 = scalar_select %p2212, %s26, 1
        %p2214 = scmp.lt.s32.totalorder %s27, 7
        %s2215 = scalar_select %p2214, %s27, 7
        %s2216 = smul.addr %s2213, 8
        %s2217 = sadd.s32 %s2215, %s2216
        %s2218 = smul.addr %s2217, 2
        %s2219 = scalar_lea.vmem %s5, %s2218
      $region72: #{residual_block_3d.4} parent=63 // pred_fallthru
        _
      // Predicated region
      $region73: #{residual_block_3d.4} parent=63 // pred_check
        %p2220 = pneg %p217
      $region74: #{residual_block_3d.4} parent=63 // pred_check_branch
        %2222 = sbr.rel (%p2220) target = $region76
      $region75: #{residual_block_3d.4} parent=63 // pred_region
        %p2223 = scmp.lt.s32.totalorder %s26, 1
        %s2224 = scalar_select %p2223, %s26, 1
        %p2225 = scmp.lt.s32.totalorder %s27, 7
        %s2226 = scalar_select %p2225, %s27, 7
        %s2227 = smul.addr %s2224, 8
        %s2228 = sadd.s32 %s2226, %s2227
        %s2229 = smul.addr %s2228, 2
        %s2230 = scalar_lea.vmem %s6, %s2229
      $region76: #{residual_block_3d.4} parent=63 // pred_fallthru
        _
    $region64: #{residual_block_3d.4} parent=5 // pred_fallthru
      _
  $region6: #{residual_block_3d.4} parent=0 // loop_footer
    %s17 = sadd.s32 1, %s13
  $region7: #{residual_block_3d.4} parent=0 // loop_footer_branch
    %12 = sbr.rel target = $region3
  $region8: #{residual_block_3d.4} parent=0 // loop_exit
    _

// kernel: residual_block_3d.6
$region0: #{residual_block_3d.6}
  #allocation0 [shape = 'u32[]', space=smem, size = 0x4, offset = 0x4, fixed_abs, tag = 'smem constant byte address 0x4 - core index']
  #allocation1 [shape = 'u32[144,128]{1,0:T(1,128)}', space=vmem, size = 0x12000, scoped, tag = 'internal scratch']
  #allocation2 [shape = 'f32[80,128]{1,0:T(8,128)}', space=vmem, size = 0xa000, scoped, tag = 'scratch operand']
  %s0 = inlined_call_operand.vmem [shape: f32[2,10,110,128], index: 0, kind: input, shape index: {}]
  %s1 = inlined_call_operand.vmem [shape: bf16[3,3,3,128,128], index: 1, kind: input, shape index: {}]
  %s2 = inlined_call_operand.vmem [shape: f32[80,128], index: 2, kind: input, shape index: {}]
  %s3 = inlined_call_operand.vmem [shape: f32[2,8,80,128], index: 3, kind: output, shape index: {0}]
  %s4 = inlined_call_operand.vmem [shape: f32[2,8,2,128], index: 4, kind: output, shape index: {1}]
  %5 = xla_tuple %s3, %s4
  %s6 = sld [smem:[#allocation0]]
  $region61: #{residual_block_3d.6} parent=0
    _
  %s8 = ssub.s32 1, %s6
  %s9 = scalar_select 0, %s8, %s6
  loop: start=0, step=1, limit=50
  $region2: #{residual_block_3d.6} parent=0 // loop_pre_header
    _
  $region3: #{residual_block_3d.6} parent=0 // loop_header
    %s11 = sphi 0, %s15
    %p12 = scmp.ge.s32.totalorder %s11, 50
    %s18 = sphi 0, %s37
    %s19 = sphi 0, %s33
    %s20 = sphi 0, %s29
    %s21 = sphi 0, %s18
    %s22 = sphi 0, %s19
    %s23 = sphi 0, %s20
    %s24 = sphi 0, %s21
    %s25 = sphi 0, %s22
    %s26 = sphi 0, %s23
    %s44 = sphi 0, %s46
    %s47 = sphi 0, %s44
    %s48 = sphi 0, %s47
    %s64 = sphi 0, %s48
    %s70 = sphi 0, %s72
    %s73 = sphi 0, %s70
    %s74 = sphi 0, %s73
    %s90 = sphi 0, %s74
    %s94 = sphi 0, %s94
    %s96 = sphi 0, %s94
    %s97 = sphi 0, %s96
    %s111 = sphi 0, %s97
    %s119 = sphi 0, %s121
    %s122 = sphi 0, %s119
    %s123 = sphi 0, %s122
    %s139 = sphi 0, %s123
    %s147 = sphi 0, %s149
    %s150 = sphi 0, %s147
    %s151 = sphi 0, %s150
    %s167 = sphi 0, %s151
  $region4: #{residual_block_3d.6} parent=0 // loop_header_branch
    %14 = sbr.rel (%p12) target = $region8
  $region5: #{residual_block_3d.6} parent=0 // loop_body
    %s16 = ssub.s32 %s11, 1
    %s17 = ssub.s32 %s11, 2
    %s27 = sadd.s32 1, %s20
    %p28 = scmp.ge.s32.totalorder %s27, 3
    %s29 = scalar_select %p28, 0, %s27
    %s30 = sadd.s32 1, %s19
    %s31 = scalar_select %p28, %s30, %s19
    %p32 = scmp.ge.s32.totalorder %s31, 8
    %s33 = scalar_select %p32, 0, %s31
    %s34 = sadd.s32 1, %s18
    %s35 = scalar_select %p32, %s34, %s18
    %p36 = scmp.ge.s32.totalorder %s35, 2
    %s37 = scalar_select %p36, 0, %s35
    %s38 = sadd.s32 %s19, %s20
    %s39 = sadd.s32 %s33, %s29
    %s40 = ssub.s32 %s18, %s37
    %s41 = ssub.s32 %s38, %s39
    %s42 = sor.u32 %s40, %s41
    %p43 = scmp.eq.s32.totalorder %s42, 0
    %s45 = sadd.s32 %s44, 1
    %s46 = scalar_select %p43, %s44, %s45
    %p49 = pneg %p43
    %p50 = scmp.eq.s32.totalorder %s11, 47
    %p51 = por %p49, %p50
    %p52 = scmp.ne.s32.totalorder %s44, %s47
    %p53 = scmp.eq.s32.totalorder %s11, 0
    %p54 = por %p52, %p53
    %p55 = scmp.ne.s32.totalorder %s44, %s47
    %p56 = scmp.eq.s32.totalorder %s16, 47
    %p57 = por %p55, %p56
    %p58 = scmp.ne.s32.totalorder %s47, %s48
    %p59 = scmp.eq.s32.totalorder %s16, 0
    %p60 = por %p58, %p59
    %p61 = scmp.ne.s32.totalorder %s47, %s48
    %p62 = scmp.eq.s32.totalorder %s17, 47
    %p63 = por %p61, %p62
    %p65 = scmp.ne.s32.totalorder %s48, %s64
    %p66 = scmp.eq.s32.totalorder %s17, 0
    %p67 = por %p65, %p66
    %s68 = ssub.s32 %s20, %s29
    %p69 = scmp.eq.s32.totalorder %s68, 0
    %s71 = sadd.s32 %s70, 1
    %s72 = scalar_select %p69, %s70, %s71
    %p75 = pneg %p69
    %p76 = scmp.eq.s32.totalorder %s11, 47
    %p77 = por %p75, %p76
    %p78 = scmp.ne.s32.totalorder %s70, %s73
    %p79 = scmp.eq.s32.totalorder %s11, 0
    %p80 = por %p78, %p79
    %p81 = scmp.ne.s32.totalorder %s70, %s73
    %p82 = scmp.eq.s32.totalorder %s16, 47
    %p83 = por %p81, %p82
    %p84 = scmp.ne.s32.totalorder %s73, %s74
    %p85 = scmp.eq.s32.totalorder %s16, 0
    %p86 = por %p84, %p85
    %p87 = scmp.ne.s32.totalorder %s73, %s74
    %p88 = scmp.eq.s32.totalorder %s17, 47
    %p89 = por %p87, %p88
    %p91 = scmp.ne.s32.totalorder %s74, %s90
    %p92 = scmp.eq.s32.totalorder %s17, 0
    %p93 = por %p91, %p92
    %s95 = sadd.s32 %s94, 1
    %p98 = scmp.eq.s32.totalorder %s11, 47
    %p99 = scmp.ne.s32.totalorder %s94, %s96
    %p100 = scmp.eq.s32.totalorder %s11, 0
    %p101 = por %p99, %p100
    %p102 = scmp.ne.s32.totalorder %s94, %s96
    %p103 = scmp.eq.s32.totalorder %s16, 47
    %p104 = por %p102, %p103
    %p105 = scmp.ne.s32.totalorder %s96, %s97
    %p106 = scmp.eq.s32.totalorder %s16, 0
    %p107 = por %p105, %p106
    %p108 = scmp.ne.s32.totalorder %s96, %s97
    %p109 = scmp.eq.s32.totalorder %s17, 47
    %p110 = por %p108, %p109
    %p112 = scmp.ne.s32.totalorder %s97, %s111
    %p113 = scmp.eq.s32.totalorder %s17, 0
    %p114 = por %p112, %p113
    %s115 = ssub.s32 %s18, %s37
    %s116 = ssub.s32 %s19, %s33
    %s117 = sor.u32 %s115, %s116
    %p118 = scmp.eq.s32.totalorder %s117, 0
    %s120 = sadd.s32 %s119, 1
    %s121 = scalar_select %p118, %s119, %s120
    %p124 = pneg %p118
    %p125 = scmp.eq.s32.totalorder %s11, 47
    %p126 = por %p124, %p125
    %p127 = scmp.ne.s32.totalorder %s119, %s122
    %p128 = scmp.eq.s32.totalorder %s11, 0
    %p129 = por %p127, %p128
    %p130 = scmp.ne.s32.totalorder %s119, %s122
    %p131 = scmp.eq.s32.totalorder %s16, 47
    %p132 = por %p130, %p131
    %p133 = scmp.ne.s32.totalorder %s122, %s123
    %p134 = scmp.eq.s32.totalorder %s16, 0
    %p135 = por %p133, %p134
    %p136 = scmp.ne.s32.totalorder %s122, %s123
    %p137 = scmp.eq.s32.totalorder %s17, 47
    %p138 = por %p136, %p137
    %p140 = scmp.ne.s32.totalorder %s123, %s139
    %p141 = scmp.eq.s32.totalorder %s17, 0
    %p142 = por %p140, %p141
    %s143 = ssub.s32 %s18, %s37
    %s144 = ssub.s32 %s19, %s33
    %s145 = sor.u32 %s143, %s144
    %p146 = scmp.eq.s32.totalorder %s145, 0
    %s148 = sadd.s32 %s147, 1
    %s149 = scalar_select %p146, %s147, %s148
    %p152 = pneg %p146
    %p153 = scmp.eq.s32.totalorder %s11, 47
    %p154 = por %p152, %p153
    %p155 = scmp.ne.s32.totalorder %s147, %s150
    %p156 = scmp.eq.s32.totalorder %s11, 0
    %p157 = por %p155, %p156
    %p158 = scmp.ne.s32.totalorder %s147, %s150
    %p159 = scmp.eq.s32.totalorder %s16, 47
    %p160 = por %p158, %p159
    %p161 = scmp.ne.s32.totalorder %s150, %s151
    %p162 = scmp.eq.s32.totalorder %s16, 0
    %p163 = por %p161, %p162
    %p164 = scmp.ne.s32.totalorder %s150, %s151
    %p165 = scmp.eq.s32.totalorder %s17, 47
    %p166 = por %p164, %p165
    %p168 = scmp.ne.s32.totalorder %s151, %s167
    %p169 = scmp.eq.s32.totalorder %s17, 0
    %p170 = por %p168, %p169
    %p171 = scmp.le.s32.totalorder 1, %s11
    %p172 = scmp.lt.s32.totalorder %s11, 49
    %p173 = pnand %p171, %p172
    %p174 = pneg %p173
    // Predicated region
    $region9: #{residual_block_3d.6} parent=5 // pred_check
      _
    $region10: #{residual_block_3d.6} parent=5 // pred_check_branch
      %176 = sbr.rel (%p173) target = $region12
    $region11: #{residual_block_3d.6} parent=5 // pred_region
      %s177 = ssub.s32 %s11, 1
      // Predicated region
      $region13: #{residual_block_3d.6} parent=11 // pred_check
        %p178 = pneg %p107
      $region14: #{residual_block_3d.6} parent=11 // pred_check_branch
        %180 = sbr.rel (%p178) target = $region16
      $region15: #{residual_block_3d.6} parent=11 // pred_region
        _
      $region16: #{residual_block_3d.6} parent=11 // pred_fallthru
        _
    $region12: #{residual_block_3d.6} parent=5 // pred_fallthru
      _
    %p181 = scmp.lt.s32.totalorder %s11, 48
    // Predicated region
    $region17: #{residual_block_3d.6} parent=5 // pred_check
      %p182 = pneg %p181
    $region18: #{residual_block_3d.6} parent=5 // pred_check_branch
      %184 = sbr.rel (%p182) target = $region20
    $region19: #{residual_block_3d.6} parent=5 // pred_region
      // Predicated region
      $region21: #{residual_block_3d.6} parent=19 // pred_check
        %p185 = pneg %p54
      $region22: #{residual_block_3d.6} parent=19 // pred_check_branch
        %187 = sbr.rel (%p185) target = $region24
      $region23: #{residual_block_3d.6} parent=19 // pred_region
        %s188 = sadd.s32 %s19, %s20
        %p189 = scmp.lt.s32.totalorder %s18, 1
        %s190 = scalar_select %p189, %s18, 1
        %p191 = scmp.lt.s32.totalorder %s188, 9
        %s192 = scalar_select %p191, %s188, 9
        %s193 = smul.addr %s192, 14
        %s194 = smul.addr %s190, 140
        %s195 = sadd.s32 %s193, %s194
        %s196 = smul.addr %s195, 8
        %s197 = scalar_lea.vmem %s0, %s196
        %s198 = sadd.s32 %s19, %s20
      $region24: #{residual_block_3d.6} parent=19 // pred_fallthru
        _
      // Predicated region
      $region25: #{residual_block_3d.6} parent=19 // pred_check
        %p199 = pneg %p80
      $region26: #{residual_block_3d.6} parent=19 // pred_check_branch
        %201 = sbr.rel (%p199) target = $region28
      $region27: #{residual_block_3d.6} parent=19 // pred_region
        %p202 = scmp.lt.s32.totalorder %s20, 2
        %s203 = scalar_select %p202, %s20, 2
        %s204 = smul.addr %s203, 144
        %s205 = smul.addr %s204, 4
        %s206 = scalar_lea.vmem %s1, %s205
      $region28: #{residual_block_3d.6} parent=19 // pred_fallthru
        _
    $region20: #{residual_block_3d.6} parent=5 // pred_fallthru
      _
    %p207 = scmp.le.s32.totalorder 1, %s11
    %p208 = scmp.lt.s32.totalorder %s11, 49
    %p209 = pnand %p207, %p208
    %p210 = pneg %p209
    // Predicated region
    $region29: #{residual_block_3d.6} parent=5 // pred_check
      _
    $region30: #{residual_block_3d.6} parent=5 // pred_check_branch
      %212 = sbr.rel (%p209) target = $region32
    $region31: #{residual_block_3d.6} parent=5 // pred_region
      %s213 = ssub.s32 %s11, 1
      %s214 = sadd.s32 %s22, %s23
      %p215 = scmp.lt.s32.totalorder %s21, 1
      %s216 = scalar_select %p215, %s21, 1
      %p217 = scmp.lt.s32.totalorder %s214, 9
      %s218 = scalar_select %p217, %s214, 9
      %s219 = smul.addr %s218, 14
      %s220 = smul.addr %s216, 140
      %s221 = sadd.s32 %s219, %s220
      %s222 = smul.addr %s221, 8
      %s223 = scalar_lea.vmem %s0, %s222
      %p224 = pneg %p60
      %p225 = pneg %p57
      %p226 = scmp.lt.s32.totalorder %s23, 2
      %s227 = scalar_select %p226, %s23, 2
      %s228 = smul.addr %s227, 144
      %s229 = smul.addr %s228, 4
      %s230 = scalar_lea.vmem %s1, %s229
      %p231 = pneg %p86
      %p232 = pneg %p83
      %p233 = pneg %p107
      %p234 = pneg %p104
      %p235 = pneg %p135
      %p236 = pneg %p132
      %p237 = scmp.lt.s32.totalorder %s21, 1
      %s238 = scalar_select %p237, %s21, 1
      %p239 = scmp.lt.s32.totalorder %s22, 7
      %s240 = scalar_select %p239, %s22, 7
      %s241 = smul.addr %s240, 10
      %s242 = smul.addr %s238, 80
      %s243 = sadd.s32 %s241, %s242
      %s244 = smul.addr %s243, 8
      %s245 = scalar_lea.vmem %s3, %s244
      %p246 = pneg %p163
      %p247 = pneg %p160
      %p248 = scmp.lt.s32.totalorder %s21, 1
      %s249 = scalar_select %p248, %s21, 1
      %p250 = scmp.lt.s32.totalorder %s22, 7
      %s251 = scalar_select %p250, %s22, 7
      %s252 = smul.addr %s249, 8
      %s253 = sadd.s32 %s251, %s252
      %s254 = smul.addr %s253, 2
      %s255 = scalar_lea.vmem %s4, %s254
      %s256 = sadd.s32 %s22, %s23
      %p257 = scmp.lt.s32.totalorder %s21, 1
      %s258 = scalar_select %p257, %s21, 1
      %p259 = scmp.lt.s32.totalorder %s256, 9
      %s260 = scalar_select %p259, %s256, 9
      %s261 = smul.addr %s260, 14
      %s262 = smul.addr %s258, 140
      %s263 = sadd.s32 %s261, %s262
      %s264 = smul.addr %s263, 8
      %s265 = scalar_lea.vmem %s0, %s264
      %s266 = sadd.s32 %s22, %s23
      %p267 = scmp.lt.s32.totalorder %s23, 2
      %s268 = scalar_select %p267, %s23, 2
      %s269 = smul.addr %s268, 144
      %s270 = smul.addr %s269, 4
      %s271 = scalar_lea.vmem %s1, %s270
      %p272 = scmp.lt.s32.totalorder %s21, 1
      %s273 = scalar_select %p272, %s21, 1
      %p274 = scmp.lt.s32.totalorder %s22, 7
      %s275 = scalar_select %p274, %s22, 7
      %s276 = smul.addr %s275, 10
      %s277 = smul.addr %s273, 80
      %s278 = sadd.s32 %s276, %s277
      %s279 = smul.addr %s278, 8
      %s280 = scalar_lea.vmem %s3, %s279
      %p281 = scmp.lt.s32.totalorder %s21, 1
      %s282 = scalar_select %p281, %s21, 1
      %p283 = scmp.lt.s32.totalorder %s22, 7
      %s284 = scalar_select %p283, %s22, 7
      %s285 = smul.addr %s282, 8
      %s286 = sadd.s32 %s284, %s285
      %s287 = smul.addr %s286, 2
      %s288 = scalar_lea.vmem %s4, %s287
      %p290 = scmp.eq.s32.totalorder %s23, 0
      // Predicated region
      $region33: #{residual_block_3d.6} parent=31 // pred_check
        %p291 = pneg %p290
      $region34: #{residual_block_3d.6} parent=31 // pred_check_branch
        %293 = sbr.rel (%p291) target = $region36
      $region35: #{residual_block_3d.6} parent=31 // pred_region
        %294 = vst [vmem:[#allocation2] sm:$0xff] 0.0
        %295 = vst [vmem:[#allocation2 + $0x8] sm:$0xff] 0.0
        %296 = vst [vmem:[#allocation2 + $0x10] sm:$0xff] 0.0
        %297 = vst [vmem:[#allocation2 + $0x18] sm:$0xff] 0.0
        %298 = vst [vmem:[#allocation2 + $0x20] sm:$0xff] 0.0
        %299 = vst [vmem:[#allocation2 + $0x28] sm:$0xff] 0.0
        %300 = vst [vmem:[#allocation2 + $0x30] sm:$0xff] 0.0
        %301 = vst [vmem:[#allocation2 + $0x38] sm:$0xff] 0.0
        %302 = vst [vmem:[#allocation2 + $0x40] sm:$0xff] 0.0
        %303 = vst [vmem:[#allocation2 + $0x48] sm:$0xff] 0.0
      $region36: #{residual_block_3d.6} parent=31 // pred_fallthru
        _
      %v304 = vld [vmem:[%s265] sm:$0xff]
      %v305 = vld [vmem:[%s265 + $0x8] sm:$0xff]
      %v306 = vld [vmem:[%s265 + $0x10] sm:$0xff]
      %v307 = vld [vmem:[%s265 + $0x18] sm:$0xff]
      %v308 = vld [vmem:[%s265 + $0x20] sm:$0xff]
      %v309 = vld [vmem:[%s265 + $0x28] sm:$0xff]
      %v310 = vld [vmem:[%s265 + $0x30] sm:$0xff]
      %v311 = vld [vmem:[%s265 + $0x38] sm:$0xff]
      %v312 = vld [vmem:[%s265 + $0x40] sm:$0xff]
      %v313 = vld [vmem:[%s265 + $0x48] sm:$0xff]
      %v314 = vpack.c.bf16 %v305, %v304
      %v315 = vpack.c.bf16 %v307, %v306
      %v316 = vpack.c.bf16 %v309, %v308
      %v317 = vpack.c.bf16 %v311, %v310
      %v318 = vpack.c.bf16 %v313, %v312
      %v319 = vld [vmem:[%s271] sm:$0xf]
      %v320 = vld [vmem:[%s271 + $0x4] sm:$0xf]
      %v321 = vld [vmem:[%s271 + $0x8] sm:$0xf]
      %v322 = vld [vmem:[%s271 + $0xc] sm:$0xf]
      %v323 = vld [vmem:[%s271 + $0x10] sm:$0xf]
      %v324 = vld [vmem:[%s271 + $0x14] sm:$0xf]
      %v325 = vld [vmem:[%s271 + $0x18] sm:$0xf]
      %v326 = vld [vmem:[%s271 + $0x1c] sm:$0xf]
      %v327 = vld [vmem:[%s271 + $0x20] sm:$0xf]
      %v328 = vld [vmem:[%s271 + $0x24] sm:$0xf]
      %v329 = vld [vmem:[%s271 + $0x28] sm:$0xf]
      %v330 = vld [vmem:[%s271 + $0x2c] sm:$0xf]
      %v331 = vld [vmem:[%s271 + $0x30] sm:$0xf]
      %v332 = vld [vmem:[%s271 + $0x34] sm:$0xf]
      %v333 = vld [vmem:[%s271 + $0x38] sm:$0xf]
      %v334 = vld [vmem:[%s271 + $0x3c] sm:$0xf]
      %v335 = vld [vmem:[%s265 + $0x1] sm:$0xff]
      %v336 = vld [vmem:[%s265 + $0x9] sm:$0xff]
      %v337 = vld [vmem:[%s265 + $0x11] sm:$0xff]
      %v338 = vld [vmem:[%s265 + $0x19] sm:$0xff]
      %v339 = vld [vmem:[%s265 + $0x21] sm:$0xff]
      %v340 = vld [vmem:[%s265 + $0x29] sm:$0xff]
      %v341 = vld [vmem:[%s265 + $0x31] sm:$0xff]
      %v342 = vld [vmem:[%s265 + $0x39] sm:$0xff]
      %v343 = vld [vmem:[%s265 + $0x41] sm:$0xff]
      %v344 = vld [vmem:[%s265 + $0x49] sm:$0xff]
      %v345 = vpack.c.bf16 %v336, %v335
      %v346 = vpack.c.bf16 %v338, %v337
      %v347 = vpack.c.bf16 %v340, %v339
      %v348 = vpack.c.bf16 %v342, %v341
      %v349 = vpack.c.bf16 %v344, %v343
      %s350 = scalar_lea.vmem %s271, 64
      %v351 = vld [vmem:[%s350] sm:$0xf]
      %v352 = vld [vmem:[%s350 + $0x4] sm:$0xf]
      %v353 = vld [vmem:[%s350 + $0x8] sm:$0xf]
      %v354 = vld [vmem:[%s350 + $0xc] sm:$0xf]
      %v355 = vld [vmem:[%s350 + $0x10] sm:$0xf]
      %v356 = vld [vmem:[%s350 + $0x14] sm:$0xf]
      %v357 = vld [vmem:[%s350 + $0x18] sm:$0xf]
      %v358 = vld [vmem:[%s350 + $0x1c] sm:$0xf]
      %v359 = vld [vmem:[%s350 + $0x20] sm:$0xf]
      %v360 = vld [vmem:[%s350 + $0x24] sm:$0xf]
      %v361 = vld [vmem:[%s350 + $0x28] sm:$0xf]
      %v362 = vld [vmem:[%s350 + $0x2c] sm:$0xf]
      %v363 = vld [vmem:[%s350 + $0x30] sm:$0xf]
      %v364 = vld [vmem:[%s350 + $0x34] sm:$0xf]
      %v365 = vld [vmem:[%s350 + $0x38] sm:$0xf]
      %v366 = vld [vmem:[%s350 + $0x3c] sm:$0xf]
      %v383 = vunpack.c.l.b16 %v351
      %v384 = vunpack.c.l.b16 %v352
      %v385 = vunpack.c.l.b16 %v353
      %v386 = vunpack.c.l.b16 %v354
      %v387 = vunpack.c.l.b16 %v355
      %v388 = vunpack.c.l.b16 %v356
      %v389 = vunpack.c.l.b16 %v357
      %v390 = vunpack.c.l.b16 %v358
      %v391 = vunpack.c.l.b16 %v359
      %v392 = vunpack.c.l.b16 %v360
      %v393 = vunpack.c.l.b16 %v361
      %v394 = vunpack.c.l.b16 %v362
      %v395 = vunpack.c.l.b16 %v363
      %v396 = vunpack.c.l.b16 %v364
      %v397 = vunpack.c.l.b16 %v365
      %v398 = vunpack.c.l.b16 %v366
      %v399 = vpack.c.b16 %v384, %v383
      %v400 = vpack.c.b16 %v386, %v385
      %v401 = vpack.c.b16 %v388, %v387
      %v402 = vpack.c.b16 %v390, %v389
      %v403 = vpack.c.b16 %v392, %v391
      %v404 = vpack.c.b16 %v394, %v393
      %v405 = vpack.c.b16 %v396, %v395
      %v406 = vpack.c.b16 %v398, %v397
      %415 = vmatprep.subr.bf16.mxu0 0
      %416 = vmatpush1.bf16.msra.mxu0 %v399
      %417 = vmatprep.subr.bf16.mxu0 0
      %418 = vmatpush1.bf16.msra.mxu0 %v400
      %419 = vmatprep.subr.bf16.mxu0 0
      %420 = vmatpush1.bf16.msra.mxu0 %v401
      %421 = vmatprep.subr.bf16.mxu0 0
      %422 = vmatpush1.bf16.msra.mxu0 %v402
      %423 = vmatprep.subr.bf16.mxu0 0
      %424 = vmatpush1.bf16.msra.mxu0 %v403
      %425 = vmatprep.subr.bf16.mxu0 0
      %426 = vmatpush1.bf16.msra.mxu0 %v404
      %427 = vmatprep.subr.bf16.mxu0 0
      %428 = vmatpush1.bf16.msra.mxu0 %v405
      %429 = vmatprep.subr.bf16.mxu0 0
      %430 = vmatpush1.bf16.msra.mxu0 %v406
      %431 = vmatprep.subr.bf16.mxu0 0
      %432 = vmatpush1.bf16.msra.mxu0 0
      %433 = vmatprep.subr.bf16.mxu0 0
      %434 = vmatpush1.bf16.msra.mxu0 0
      %435 = vmatprep.subr.bf16.mxu0 0
      %436 = vmatpush1.bf16.msra.mxu0 0
      %437 = vmatprep.subr.bf16.mxu0 0
      %438 = vmatpush1.bf16.msra.mxu0 0
      %439 = vmatprep.subr.bf16.mxu0 0
      %440 = vmatpush1.bf16.msra.mxu0 0
      %441 = vmatprep.subr.bf16.mxu0 0
      %442 = vmatpush1.bf16.msra.mxu0 0
      %443 = vmatprep.subr.bf16.mxu0 0
      %444 = vmatpush1.bf16.msra.mxu0 0
      %445 = vmatprep.subr.bf16.mxu0 0
      %446 = vmatpush1.bf16.msra.mxu0 0
      %447 = vmatprep.mubr.bf16.mxu0 0
      %448 = vmatmul.mubr.bf16.gmra.mrb[0].mxu0 %v345
      %v449 = vpop.f32.mrb[0].mxu0
      %v450 = vadd.f32 0.0, %v449
      %v451 = vpop.f32.mrb[0].mxu0
      %v452 = vpop.f32.mrb[0].mxu0
      %v453 = vadd.f32 0.0, %v452
      %v454 = vpop.f32.mrb[0].mxu0
      %455 = vmatprep.mubr.bf16.mxu0 0
      %456 = vmatmul.mubr.bf16.gmra.mrb[0].mxu0 %v346
      %v457 = vpop.f32.mrb[0].mxu0
      %v458 = vadd.f32 0.0, %v457
      %v459 = vpop.f32.mrb[0].mxu0
      %v460 = vpop.f32.mrb[0].mxu0
      %v461 = vadd.f32 0.0, %v460
      %v462 = vpop.f32.mrb[0].mxu0
      %463 = vmatprep.mubr.bf16.mxu0 0
      %464 = vmatmul.mubr.bf16.gmra.mrb[0].mxu0 %v347
      %v465 = vpop.f32.mrb[0].mxu0
      %v466 = vadd.f32 0.0, %v465
      %v467 = vpop.f32.mrb[0].mxu0
      %v468 = vpop.f32.mrb[0].mxu0
      %v469 = vadd.f32 0.0, %v468
      %v470 = vpop.f32.mrb[0].mxu0
      %471 = vmatprep.mubr.bf16.mxu0 0
      %472 = vmatmul.mubr.bf16.gmra.mrb[0].mxu0 %v348
      %v473 = vpop.f32.mrb[0].mxu0
      %v474 = vadd.f32 0.0, %v473
      %v475 = vpop.f32.mrb[0].mxu0
      %v476 = vpop.f32.mrb[0].mxu0
      %v477 = vadd.f32 0.0, %v476
      %v478 = vpop.f32.mrb[0].mxu0
      %479 = vmatprep.mubr.bf16.mxu0 0
      %480 = vmatmul.mubr.bf16.gmra.mrb[0].mxu0 %v349
      %v481 = vpop.f32.mrb[0].mxu0
      %v482 = vadd.f32 0.0, %v481
      %v483 = vpop.f32.mrb[0].mxu0
      %v484 = vpop.f32.mrb[0].mxu0
      %v485 = vadd.f32 0.0, %v484
      %v486 = vpop.f32.mrb[0].mxu0
      %487 = vdwg.mxu0
      %v504 = vunpack.c.l.b16 %v319
      %v505 = vunpack.c.l.b16 %v320
      %v506 = vunpack.c.l.b16 %v321
      %v507 = vunpack.c.l.b16 %v322
      %v508 = vunpack.c.l.b16 %v323
      %v509 = vunpack.c.l.b16 %v324
      %v510 = vunpack.c.l.b16 %v325
      %v511 = vunpack.c.l.b16 %v326
      %v512 = vunpack.c.l.b16 %v327
      %v513 = vunpack.c.l.b16 %v328
      %v514 = vunpack.c.l.b16 %v329
      %v515 = vunpack.c.l.b16 %v330
      %v516 = vunpack.c.l.b16 %v331
      %v517 = vunpack.c.l.b16 %v332
      %v518 = vunpack.c.l.b16 %v333
      %v519 = vunpack.c.l.b16 %v334
      %v520 = vpack.c.b16 %v505, %v504
      %v521 = vpack.c.b16 %v507, %v506
      %v522 = vpack.c.b16 %v509, %v508
      %v523 = vpack.c.b16 %v511, %v510
      %v524 = vpack.c.b16 %v513, %v512
      %v525 = vpack.c.b16 %v515, %v514
      %v526 = vpack.c.b16 %v517, %v516
      %v527 = vpack.c.b16 %v519, %v518
      %536 = vmatprep.subr.bf16.mxu0 0
      %537 = vmatpush1.bf16.msra.mxu0 %v520
      %538 = vmatprep.subr.bf16.mxu0 0
      %539 = vmatpush1.bf16.msra.mxu0 %v521
      %540 = vmatprep.subr.bf16.mxu0 0
      %541 = vmatpush1.bf16.msra.mxu0 %v522
      %542 = vmatprep.subr.bf16.mxu0 0
      %543 = vmatpush1.bf16.msra.mxu0 %v523
      %544 = vmatprep.subr.bf16.mxu0 0
      %545 = vmatpush1.bf16.msra.mxu0 %v524
      %546 = vmatprep.subr.bf16.mxu0 0
      %547 = vmatpush1.bf16.msra.mxu0 %v525
      %548 = vmatprep.subr.bf16.mxu0 0
      %549 = vmatpush1.bf16.msra.mxu0 %v526
      %550 = vmatprep.subr.bf16.mxu0 0
      %551 = vmatpush1.bf16.msra.mxu0 %v527
      %552 = vmatprep.subr.bf16.mxu0 0
      %553 = vmatpush1.bf16.msra.mxu0 0
      %554 = vmatprep.subr.bf16.mxu0 0
      %555 = vmatpush1.bf16.msra.mxu0 0
      %556 = vmatprep.subr.bf16.mxu0 0
      %557 = vmatpush1.bf16.msra.mxu0 0
      %558 = vmatprep.subr.bf16.mxu0 0
      %559 = vmatpush1.bf16.msra.mxu0 0
      %560 = vmatprep.subr.bf16.mxu0 0
      %561 = vmatpush1.bf16.msra.mxu0 0
      %562 = vmatprep.subr.bf16.mxu0 0
      %563 = vmatpush1.bf16.msra.mxu0 0
      %564 = vmatprep.subr.bf16.mxu0 0
      %565 = vmatpush1.bf16.msra.mxu0 0
      %566 = vmatprep.subr.bf16.mxu0 0
      %567 = vmatpush1.bf16.msra.mxu0 0
      %568 = vmatprep.mubr.bf16.mxu0 0
      %569 = vmatmul.mubr.bf16.gmra.mrb[0].mxu0 %v314
      %v570 = vpop.f32.mrb[0].mxu0
      %v571 = vadd.f32 %v450, %v570
      %v572 = vpop.f32.mrb[0].mxu0
      %v573 = vpop.f32.mrb[0].mxu0
      %v574 = vadd.f32 %v453, %v573
      %v575 = vpop.f32.mrb[0].mxu0
      %576 = vmatprep.mubr.bf16.mxu0 0
      %577 = vmatmul.mubr.bf16.gmra.mrb[0].mxu0 %v315
      %v578 = vpop.f32.mrb[0].mxu0
      %v579 = vadd.f32 %v458, %v578
      %v580 = vpop.f32.mrb[0].mxu0
      %v581 = vpop.f32.mrb[0].mxu0
      %v582 = vadd.f32 %v461, %v581
      %v583 = vpop.f32.mrb[0].mxu0
      %584 = vmatprep.mubr.bf16.mxu0 0
      %585 = vmatmul.mubr.bf16.gmra.mrb[0].mxu0 %v316
      %v586 = vpop.f32.mrb[0].mxu0
      %v587 = vadd.f32 %v466, %v586
      %v588 = vpop.f32.mrb[0].mxu0
      %v589 = vpop.f32.mrb[0].mxu0
      %v590 = vadd.f32 %v469, %v589
      %v591 = vpop.f32.mrb[0].mxu0
      %592 = vmatprep.mubr.bf16.mxu0 0
      %593 = vmatmul.mubr.bf16.gmra.mrb[0].mxu0 %v317
      %v594 = vpop.f32.mrb[0].mxu0
      %v595 = vadd.f32 %v474, %v594
      %v596 = vpop.f32.mrb[0].mxu0
      %v597 = vpop.f32.mrb[0].mxu0
      %v598 = vadd.f32 %v477, %v597
      %v599 = vpop.f32.mrb[0].mxu0
      %600 = vmatprep.mubr.bf16.mxu0 0
      %601 = vmatmul.mubr.bf16.gmra.mrb[0].mxu0 %v318
      %v602 = vpop.f32.mrb[0].mxu0
      %v603 = vadd.f32 %v482, %v602
      %v604 = vpop.f32.mrb[0].mxu0
      %v605 = vpop.f32.mrb[0].mxu0
      %v606 = vadd.f32 %v485, %v605
      %v607 = vpop.f32.mrb[0].mxu0
      %608 = vdwg.mxu0
      %v609 = vld [vmem:[%s265 + $0x2] sm:$0xff]
      %v610 = vld [vmem:[%s265 + $0xa] sm:$0xff]
      %v611 = vld [vmem:[%s265 + $0x12] sm:$0xff]
      %v612 = vld [vmem:[%s265 + $0x1a] sm:$0xff]
      %v613 = vld [vmem:[%s265 + $0x22] sm:$0xff]
      %v614 = vld [vmem:[%s265 + $0x2a] sm:$0xff]
      %v615 = vld [vmem:[%s265 + $0x32] sm:$0xff]
      %v616 = vld [vmem:[%s265 + $0x3a] sm:$0xff]
      %v617 = vld [vmem:[%s265 + $0x42] sm:$0xff]
      %v618 = vld [vmem:[%s265 + $0x4a] sm:$0xff]
      %v619 = vpack.c.bf16 %v610, %v609
      %v620 = vpack.c.bf16 %v612, %v611
      %v621 = vpack.c.bf16 %v614, %v613
      %v622 = vpack.c.bf16 %v616, %v615
      %v623 = vpack.c.bf16 %v618, %v617
      %s624 = scalar_lea.vmem %s271, 128
      %v625 = vld [vmem:[%s624] sm:$0xf]
      %v626 = vld [vmem:[%s624 + $0x4] sm:$0xf]
      %v627 = vld [vmem:[%s624 + $0x8] sm:$0xf]
      %v628 = vld [vmem:[%s624 + $0xc] sm:$0xf]
      %v629 = vld [vmem:[%s624 + $0x10] sm:$0xf]
      %v630 = vld [vmem:[%s624 + $0x14] sm:$0xf]
      %v631 = vld [vmem:[%s624 + $0x18] sm:$0xf]
      %v632 = vld [vmem:[%s624 + $0x1c] sm:$0xf]
      %v633 = vld [vmem:[%s624 + $0x20] sm:$0xf]
      %v634 = vld [vmem:[%s624 + $0x24] sm:$0xf]
      %v635 = vld [vmem:[%s624 + $0x28] sm:$0xf]
      %v636 = vld [vmem:[%s624 + $0x2c] sm:$0xf]
      %v637 = vld [vmem:[%s624 + $0x30] sm:$0xf]
      %v638 = vld [vmem:[%s624 + $0x34] sm:$0xf]
      %v639 = vld [vmem:[%s624 + $0x38] sm:$0xf]
      %v640 = vld [vmem:[%s624 + $0x3c] sm:$0xf]
      %v657 = vunpack.c.l.b16 %v625
      %v658 = vunpack.c.l.b16 %v626
      %v659 = vunpack.c.l.b16 %v627
      %v660 = vunpack.c.l.b16 %v628
      %v661 = vunpack.c.l.b16 %v629
      %v662 = vunpack.c.l.b16 %v630
      %v663 = vunpack.c.l.b16 %v631
      %v664 = vunpack.c.l.b16 %v632
      %v665 = vunpack.c.l.b16 %v633
      %v666 = vunpack.c.l.b16 %v634
      %v667 = vunpack.c.l.b16 %v635
      %v668 = vunpack.c.l.b16 %v636
      %v669 = vunpack.c.l.b16 %v637
      %v670 = vunpack.c.l.b16 %v638
      %v671 = vunpack.c.l.b16 %v639
      %v672 = vunpack.c.l.b16 %v640
      %v673 = vpack.c.b16 %v658, %v657
      %v674 = vpack.c.b16 %v660, %v659
      %v675 = vpack.c.b16 %v662, %v661
      %v676 = vpack.c.b16 %v664, %v663
      %v677 = vpack.c.b16 %v666, %v665
      %v678 = vpack.c.b16 %v668, %v667
      %v679 = vpack.c.b16 %v670, %v669
      %v680 = vpack.c.b16 %v672, %v671
      %689 = vmatprep.subr.bf16.mxu0 0
      %690 = vmatpush1.bf16.msra.mxu0 %v673
      %691 = vmatprep.subr.bf16.mxu0 0
      %692 = vmatpush1.bf16.msra.mxu0 %v674
      %693 = vmatprep.subr.bf16.mxu0 0
      %694 = vmatpush1.bf16.msra.mxu0 %v675
      %695 = vmatprep.subr.bf16.mxu0 0
      %696 = vmatpush1.bf16.msra.mxu0 %v676
      %697 = vmatprep.subr.bf16.mxu0 0
      %698 = vmatpush1.bf16.msra.mxu0 %v677
      %699 = vmatprep.subr.bf16.mxu0 0
      %700 = vmatpush1.bf16.msra.mxu0 %v678
      %701 = vmatprep.subr.bf16.mxu0 0
      %702 = vmatpush1.bf16.msra.mxu0 %v679
      %703 = vmatprep.subr.bf16.mxu0 0
      %704 = vmatpush1.bf16.msra.mxu0 %v680
      %705 = vmatprep.subr.bf16.mxu0 0
      %706 = vmatpush1.bf16.msra.mxu0 0
      %707 = vmatprep.subr.bf16.mxu0 0
      %708 = vmatpush1.bf16.msra.mxu0 0
      %709 = vmatprep.subr.bf16.mxu0 0
      %710 = vmatpush1.bf16.msra.mxu0 0
      %711 = vmatprep.subr.bf16.mxu0 0
      %712 = vmatpush1.bf16.msra.mxu0 0
      %713 = vmatprep.subr.bf16.mxu0 0
      %714 = vmatpush1.bf16.msra.mxu0 0
      %715 = vmatprep.subr.bf16.mxu0 0
      %716 = vmatpush1.bf16.msra.mxu0 0
      %717 = vmatprep.subr.bf16.mxu0 0
      %718 = vmatpush1.bf16.msra.mxu0 0
      %719 = vmatprep.subr.bf16.mxu0 0
      %720 = vmatpush1.bf16.msra.mxu0 0
      %721 = vmatprep.mubr.bf16.mxu0 0
      %722 = vmatmul.mubr.bf16.gmra.mrb[0].mxu0 %v619
      %v723 = vpop.f32.mrb[0].mxu0
      %v724 = vadd.f32 0.0, %v723
      %v725 = vpop.f32.mrb[0].mxu0
      %v726 = vpop.f32.mrb[0].mxu0
      %v727 = vadd.f32 0.0, %v726
      %v728 = vpop.f32.mrb[0].mxu0
      %729 = vmatprep.mubr.bf16.mxu0 0
      %730 = vmatmul.mubr.bf16.gmra.mrb[0].mxu0 %v620
      %v731 = vpop.f32.mrb[0].mxu0
      %v732 = vadd.f32 0.0, %v731
      %v733 = vpop.f32.mrb[0].mxu0
      %v734 = vpop.f32.mrb[0].mxu0
      %v735 = vadd.f32 0.0, %v734
      %v736 = vpop.f32.mrb[0].mxu0
      %737 = vmatprep.mubr.bf16.mxu0 0
      %738 = vmatmul.mubr.bf16.gmra.mrb[0].mxu0 %v621
      %v739 = vpop.f32.mrb[0].mxu0
      %v740 = vadd.f32 0.0, %v739
      %v741 = vpop.f32.mrb[0].mxu0
      %v742 = vpop.f32.mrb[0].mxu0
      %v743 = vadd.f32 0.0, %v742
      %v744 = vpop.f32.mrb[0].mxu0
      %745 = vmatprep.mubr.bf16.mxu0 0
      %746 = vmatmul.mubr.bf16.gmra.mrb[0].mxu0 %v622
      %v747 = vpop.f32.mrb[0].mxu0
      %v748 = vadd.f32 0.0, %v747
      %v749 = vpop.f32.mrb[0].mxu0
      %v750 = vpop.f32.mrb[0].mxu0
      %v751 = vadd.f32 0.0, %v750
      %v752 = vpop.f32.mrb[0].mxu0
      %753 = vmatprep.mubr.bf16.mxu0 0
      %754 = vmatmul.mubr.bf16.gmra.mrb[0].mxu0 %v623
      %v755 = vpop.f32.mrb[0].mxu0
      %v756 = vadd.f32 0.0, %v755
      %v757 = vpop.f32.mrb[0].mxu0
      %v758 = vpop.f32.mrb[0].mxu0
      %v759 = vadd.f32 0.0, %v758
      %v760 = vpop.f32.mrb[0].mxu0
      %761 = vdwg.mxu0
      %v762 = vadd.f32 %v571, %v724
      %v763 = vadd.f32 %v574, %v727
      %v764 = vadd.f32 %v579, %v732
      %v765 = vadd.f32 %v582, %v735
      %v766 = vadd.f32 %v587, %v740
      %v767 = vadd.f32 %v590, %v743
      %v768 = vadd.f32 %v595, %v748
      %v769 = vadd.f32 %v598, %v751
      %v770 = vadd.f32 %v603, %v756
      %v771 = vadd.f32 %v606, %v759
      %v772 = vld [vmem:[%s265 + $0xa] sm:$0xff]
      %v773 = vld [vmem:[%s265 + $0x12] sm:$0xff]
      %v774 = vld [vmem:[%s265 + $0x1a] sm:$0xff]
      %v775 = vld [vmem:[%s265 + $0x22] sm:$0xff]
      %v776 = vld [vmem:[%s265 + $0x2a] sm:$0xff]
      %v777 = vld [vmem:[%s265 + $0x32] sm:$0xff]
      %v778 = vld [vmem:[%s265 + $0x3a] sm:$0xff]
      %v779 = vld [vmem:[%s265 + $0x42] sm:$0xff]
      %v780 = vld [vmem:[%s265 + $0x4a] sm:$0xff]
      %v781 = vld [vmem:[%s265 + $0x52] sm:$0xff]
      %v782 = vpack.c.bf16 %v773, %v772
      %v783 = vpack.c.bf16 %v775, %v774
      %v784 = vpack.c.bf16 %v777, %v776
      %v785 = vpack.c.bf16 %v779, %v778
      %v786 = vpack.c.bf16 %v781, %v780
      %s787 = scalar_lea.vmem %s271, 192
      %v788 = vld [vmem:[%s787] sm:$0xf]
      %v789 = vld [vmem:[%s787 + $0x4] sm:$0xf]
      %v790 = vld [vmem:[%s787 + $0x8] sm:$0xf]
      %v791 = vld [vmem:[%s787 + $0xc] sm:$0xf]
      %v792 = vld [vmem:[%s787 + $0x10] sm:$0xf]
      %v793 = vld [vmem:[%s787 + $0x14] sm:$0xf]
      %v794 = vld [vmem:[%s787 + $0x18] sm:$0xf]
      %v795 = vld [vmem:[%s787 + $0x1c] sm:$0xf]
      %v796 = vld [vmem:[%s787 + $0x20] sm:$0xf]
      %v797 = vld [vmem:[%s787 + $0x24] sm:$0xf]
      %v798 = vld [vmem:[%s787 + $0x28] sm:$0xf]
      %v799 = vld [vmem:[%s787 + $0x2c] sm:$0xf]
      %v800 = vld [vmem:[%s787 + $0x30] sm:$0xf]
      %v801 = vld [vmem:[%s787 + $0x34] sm:$0xf]
      %v802 = vld [vmem:[%s787 + $0x38] sm:$0xf]
      %v803 = vld [vmem:[%s787 + $0x3c] sm:$0xf]
      %v820 = vunpack.c.l.b16 %v788
      %v821 = vunpack.c.l.b16 %v789
      %v822 = vunpack.c.l.b16 %v790
      %v823 = vunpack.c.l.b16 %v791
      %v824 = vunpack.c.l.b16 %v792
      %v825 = vunpack.c.l.b16 %v793
      %v826 = vunpack.c.l.b16 %v794
      %v827 = vunpack.c.l.b16 %v795
      %v828 = vunpack.c.l.b16 %v796
      %v829 = vunpack.c.l.b16 %v797
      %v830 = vunpack.c.l.b16 %v798
      %v831 = vunpack.c.l.b16 %v799
      %v832 = vunpack.c.l.b16 %v800
      %v833 = vunpack.c.l.b16 %v801
      %v834 = vunpack.c.l.b16 %v802
      %v835 = vunpack.c.l.b16 %v803
      %v836 = vpack.c.b16 %v821, %v820
      %v837 = vpack.c.b16 %v823, %v822
      %v838 = vpack.c.b16 %v825, %v824
      %v839 = vpack.c.b16 %v827, %v826
      %v840 = vpack.c.b16 %v829, %v828
      %v841 = vpack.c.b16 %v831, %v830
      %v842 = vpack.c.b16 %v833, %v832
      %v843 = vpack.c.b16 %v835, %v834
      %852 = vmatprep.subr.bf16.mxu0 0
      %853 = vmatpush1.bf16.msra.mxu0 %v836
      %854 = vmatprep.subr.bf16.mxu0 0
      %855 = vmatpush1.bf16.msra.mxu0 %v837
      %856 = vmatprep.subr.bf16.mxu0 0
      %857 = vmatpush1.bf16.msra.mxu0 %v838
      %858 = vmatprep.subr.bf16.mxu0 0
      %859 = vmatpush1.bf16.msra.mxu0 %v839
      %860 = vmatprep.subr.bf16.mxu0 0
      %861 = vmatpush1.bf16.msra.mxu0 %v840
      %862 = vmatprep.subr.bf16.mxu0 0
      %863 = vmatpush1.bf16.msra.mxu0 %v841
      %864 = vmatprep.subr.bf16.mxu0 0
      %865 = vmatpush1.bf16.msra.mxu0 %v842
      %866 = vmatprep.subr.bf16.mxu0 0
      %867 = vmatpush1.bf16.msra.mxu0 %v843
      %868 = vmatprep.subr.bf16.mxu0 0
      %869 = vmatpush1.bf16.msra.mxu0 0
      %870 = vmatprep.subr.bf16.mxu0 0
      %871 = vmatpush1.bf16.msra.mxu0 0
      %872 = vmatprep.subr.bf16.mxu0 0
      %873 = vmatpush1.bf16.msra.mxu0 0
      %874 = vmatprep.subr.bf16.mxu0 0
      %875 = vmatpush1.bf16.msra.mxu0 0
      %876 = vmatprep.subr.bf16.mxu0 0
      %877 = vmatpush1.bf16.msra.mxu0 0
      %878 = vmatprep.subr.bf16.mxu0 0
      %879 = vmatpush1.bf16.msra.mxu0 0
      %880 = vmatprep.subr.bf16.mxu0 0
      %881 = vmatpush1.bf16.msra.mxu0 0
      %882 = vmatprep.subr.bf16.mxu0 0
      %883 = vmatpush1.bf16.msra.mxu0 0
      %884 = vmatprep.mubr.bf16.mxu0 0
      %885 = vmatmul.mubr.bf16.gmra.mrb[0].mxu0 %v782
      %v886 = vpop.f32.mrb[0].mxu0
      %v887 = vadd.f32 0.0, %v886
      %v888 = vpop.f32.mrb[0].mxu0
      %v889 = vpop.f32.mrb[0].mxu0
      %v890 = vadd.f32 0.0, %v889
      %v891 = vpop.f32.mrb[0].mxu0
      %892 = vmatprep.mubr.bf16.mxu0 0
      %893 = vmatmul.mubr.bf16.gmra.mrb[0].mxu0 %v783
      %v894 = vpop.f32.mrb[0].mxu0
      %v895 = vadd.f32 0.0, %v894
      %v896 = vpop.f32.mrb[0].mxu0
      %v897 = vpop.f32.mrb[0].mxu0
      %v898 = vadd.f32 0.0, %v897
      %v899 = vpop.f32.mrb[0].mxu0
      %900 = vmatprep.mubr.bf16.mxu0 0
      %901 = vmatmul.mubr.bf16.gmra.mrb[0].mxu0 %v784
      %v902 = vpop.f32.mrb[0].mxu0
      %v903 = vadd.f32 0.0, %v902
      %v904 = vpop.f32.mrb[0].mxu0
      %v905 = vpop.f32.mrb[0].mxu0
      %v906 = vadd.f32 0.0, %v905
      %v907 = vpop.f32.mrb[0].mxu0
      %908 = vmatprep.mubr.bf16.mxu0 0
      %909 = vmatmul.mubr.bf16.gmra.mrb[0].mxu0 %v785
      %v910 = vpop.f32.mrb[0].mxu0
      %v911 = vadd.f32 0.0, %v910
      %v912 = vpop.f32.mrb[0].mxu0
      %v913 = vpop.f32.mrb[0].mxu0
      %v914 = vadd.f32 0.0, %v913
      %v915 = vpop.f32.mrb[0].mxu0
      %916 = vmatprep.mubr.bf16.mxu0 0
      %917 = vmatmul.mubr.bf16.gmra.mrb[0].mxu0 %v786
      %v918 = vpop.f32.mrb[0].mxu0
      %v919 = vadd.f32 0.0, %v918
      %v920 = vpop.f32.mrb[0].mxu0
      %v921 = vpop.f32.mrb[0].mxu0
      %v922 = vadd.f32 0.0, %v921
      %v923 = vpop.f32.mrb[0].mxu0
      %924 = vdwg.mxu0
      %v925 = vadd.f32 %v762, %v887
      %v926 = vadd.f32 %v763, %v890
      %v927 = vadd.f32 %v764, %v895
      %v928 = vadd.f32 %v765, %v898
      %v929 = vadd.f32 %v766, %v903
      %v930 = vadd.f32 %v767, %v906
      %v931 = vadd.f32 %v768, %v911
      %v932 = vadd.f32 %v769, %v914
      %v933 = vadd.f32 %v770, %v919
      %v934 = vadd.f32 %v771, %v922
      %v935 = vld [vmem:[%s265 + $0xb] sm:$0xff]
      %v936 = vld [vmem:[%s265 + $0x13] sm:$0xff]
      %v937 = vld [vmem:[%s265 + $0x1b] sm:$0xff]
      %v938 = vld [vmem:[%s265 + $0x23] sm:$0xff]
      %v939 = vld [vmem:[%s265 + $0x2b] sm:$0xff]
      %v940 = vld [vmem:[%s265 + $0x33] sm:$0xff]
      %v941 = vld [vmem:[%s265 + $0x3b] sm:$0xff]
      %v942 = vld [vmem:[%s265 + $0x43] sm:$0xff]
      %v943 = vld [vmem:[%s265 + $0x4b] sm:$0xff]
      %v944 = vld [vmem:[%s265 + $0x53] sm:$0xff]
      %v945 = vpack.c.bf16 %v936, %v935
      %v946 = vpack.c.bf16 %v938, %v937
      %v947 = vpack.c.bf16 %v940, %v939
      %v948 = vpack.c.bf16 %v942, %v941
      %v949 = vpack.c.bf16 %v944, %v943
      %s950 = scalar_lea.vmem %s271, 256
      %v951 = vld [vmem:[%s950] sm:$0xf]
      %v952 = vld [vmem:[%s950 + $0x4] sm:$0xf]
      %v953 = vld [vmem:[%s950 + $0x8] sm:$0xf]
      %v954 = vld [vmem:[%s950 + $0xc] sm:$0xf]
      %v955 = vld [vmem:[%s950 + $0x10] sm:$0xf]
      %v956 = vld [vmem:[%s950 + $0x14] sm:$0xf]
      %v957 = vld [vmem:[%s950 + $0x18] sm:$0xf]
      %v958 = vld [vmem:[%s950 + $0x1c] sm:$0xf]
      %v959 = vld [vmem:[%s950 + $0x20] sm:$0xf]
      %v960 = vld [vmem:[%s950 + $0x24] sm:$0xf]
      %v961 = vld [vmem:[%s950 + $0x28] sm:$0xf]
      %v962 = vld [vmem:[%s950 + $0x2c] sm:$0xf]
      %v963 = vld [vmem:[%s950 + $0x30] sm:$0xf]
      %v964 = vld [vmem:[%s950 + $0x34] sm:$0xf]
      %v965 = vld [vmem:[%s950 + $0x38] sm:$0xf]
      %v966 = vld [vmem:[%s950 + $0x3c] sm:$0xf]
      %v983 = vunpack.c.l.b16 %v951
      %v984 = vunpack.c.l.b16 %v952
      %v985 = vunpack.c.l.b16 %v953
      %v986 = vunpack.c.l.b16 %v954
      %v987 = vunpack.c.l.b16 %v955
      %v988 = vunpack.c.l.b16 %v956
      %v989 = vunpack.c.l.b16 %v957
      %v990 = vunpack.c.l.b16 %v958
      %v991 = vunpack.c.l.b16 %v959
      %v992 = vunpack.c.l.b16 %v960
      %v993 = vunpack.c.l.b16 %v961
      %v994 = vunpack.c.l.b16 %v962
      %v995 = vunpack.c.l.b16 %v963
      %v996 = vunpack.c.l.b16 %v964
      %v997 = vunpack.c.l.b16 %v965
      %v998 = vunpack.c.l.b16 %v966
      %v999 = vpack.c.b16 %v984, %v983
      %v1000 = vpack.c.b16 %v986, %v985
      %v1001 = vpack.c.b16 %v988, %v987
      %v1002 = vpack.c.b16 %v990, %v989
      %v1003 = vpack.c.b16 %v992, %v991
      %v1004 = vpack.c.b16 %v994, %v993
      %v1005 = vpack.c.b16 %v996, %v995
      %v1006 = vpack.c.b16 %v998, %v997
      %1015 = vmatprep.subr.bf16.mxu0 0
      %1016 = vmatpush1.bf16.msra.mxu0 %v999
      %1017 = vmatprep.subr.bf16.mxu0 0
      %1018 = vmatpush1.bf16.msra.mxu0 %v1000
      %1019 = vmatprep.subr.bf16.mxu0 0
      %1020 = vmatpush1.bf16.msra.mxu0 %v1001
      %1021 = vmatprep.subr.bf16.mxu0 0
      %1022 = vmatpush1.bf16.msra.mxu0 %v1002
      %1023 = vmatprep.subr.bf16.mxu0 0
      %1024 = vmatpush1.bf16.msra.mxu0 %v1003
      %1025 = vmatprep.subr.bf16.mxu0 0
      %1026 = vmatpush1.bf16.msra.mxu0 %v1004
      %1027 = vmatprep.subr.bf16.mxu0 0
      %1028 = vmatpush1.bf16.msra.mxu0 %v1005
      %1029 = vmatprep.subr.bf16.mxu0 0
      %1030 = vmatpush1.bf16.msra.mxu0 %v1006
      %1031 = vmatprep.subr.bf16.mxu0 0
      %1032 = vmatpush1.bf16.msra.mxu0 0
      %1033 = vmatprep.subr.bf16.mxu0 0
      %1034 = vmatpush1.bf16.msra.mxu0 0
      %1035 = vmatprep.subr.bf16.mxu0 0
      %1036 = vmatpush1.bf16.msra.mxu0 0
      %1037 = vmatprep.subr.bf16.mxu0 0
      %1038 = vmatpush1.bf16.msra.mxu0 0
      %1039 = vmatprep.subr.bf16.mxu0 0
      %1040 = vmatpush1.bf16.msra.mxu0 0
      %1041 = vmatprep.subr.bf16.mxu0 0
      %1042 = vmatpush1.bf16.msra.mxu0 0
      %1043 = vmatprep.subr.bf16.mxu0 0
      %1044 = vmatpush1.bf16.msra.mxu0 0
      %1045 = vmatprep.subr.bf16.mxu0 0
      %1046 = vmatpush1.bf16.msra.mxu0 0
      %1047 = vmatprep.mubr.bf16.mxu0 0
      %1048 = vmatmul.mubr.bf16.gmra.mrb[0].mxu0 %v945
      %v1049 = vpop.f32.mrb[0].mxu0
      %v1050 = vadd.f32 0.0, %v1049
      %v1051 = vpop.f32.mrb[0].mxu0
      %v1052 = vpop.f32.mrb[0].mxu0
      %v1053 = vadd.f32 0.0, %v1052
      %v1054 = vpop.f32.mrb[0].mxu0
      %1055 = vmatprep.mubr.bf16.mxu0 0
      %1056 = vmatmul.mubr.bf16.gmra.mrb[0].mxu0 %v946
      %v1057 = vpop.f32.mrb[0].mxu0
      %v1058 = vadd.f32 0.0, %v1057
      %v1059 = vpop.f32.mrb[0].mxu0
      %v1060 = vpop.f32.mrb[0].mxu0
      %v1061 = vadd.f32 0.0, %v1060
      %v1062 = vpop.f32.mrb[0].mxu0
      %1063 = vmatprep.mubr.bf16.mxu0 0
      %1064 = vmatmul.mubr.bf16.gmra.mrb[0].mxu0 %v947
      %v1065 = vpop.f32.mrb[0].mxu0
      %v1066 = vadd.f32 0.0, %v1065
      %v1067 = vpop.f32.mrb[0].mxu0
      %v1068 = vpop.f32.mrb[0].mxu0
      %v1069 = vadd.f32 0.0, %v1068
      %v1070 = vpop.f32.mrb[0].mxu0
      %1071 = vmatprep.mubr.bf16.mxu0 0
      %1072 = vmatmul.mubr.bf16.gmra.mrb[0].mxu0 %v948
      %v1073 = vpop.f32.mrb[0].mxu0
      %v1074 = vadd.f32 0.0, %v1073
      %v1075 = vpop.f32.mrb[0].mxu0
      %v1076 = vpop.f32.mrb[0].mxu0
      %v1077 = vadd.f32 0.0, %v1076
      %v1078 = vpop.f32.mrb[0].mxu0
      %1079 = vmatprep.mubr.bf16.mxu0 0
      %1080 = vmatmul.mubr.bf16.gmra.mrb[0].mxu0 %v949
      %v1081 = vpop.f32.mrb[0].mxu0
      %v1082 = vadd.f32 0.0, %v1081
      %v1083 = vpop.f32.mrb[0].mxu0
      %v1084 = vpop.f32.mrb[0].mxu0
      %v1085 = vadd.f32 0.0, %v1084
      %v1086 = vpop.f32.mrb[0].mxu0
      %1087 = vdwg.mxu0
      %v1088 = vadd.f32 %v925, %v1050
      %v1089 = vadd.f32 %v926, %v1053
      %v1090 = vadd.f32 %v927, %v1058
      %v1091 = vadd.f32 %v928, %v1061
      %v1092 = vadd.f32 %v929, %v1066
      %v1093 = vadd.f32 %v930, %v1069
      %v1094 = vadd.f32 %v931, %v1074
      %v1095 = vadd.f32 %v932, %v1077
      %v1096 = vadd.f32 %v933, %v1082
      %v1097 = vadd.f32 %v934, %v1085
      %v1098 = vld [vmem:[%s265 + $0xc] sm:$0xff]
      %v1099 = vld [vmem:[%s265 + $0x14] sm:$0xff]
      %v1100 = vld [vmem:[%s265 + $0x1c] sm:$0xff]
      %v1101 = vld [vmem:[%s265 + $0x24] sm:$0xff]
      %v1102 = vld [vmem:[%s265 + $0x2c] sm:$0xff]
      %v1103 = vld [vmem:[%s265 + $0x34] sm:$0xff]
      %v1104 = vld [vmem:[%s265 + $0x3c] sm:$0xff]
      %v1105 = vld [vmem:[%s265 + $0x44] sm:$0xff]
      %v1106 = vld [vmem:[%s265 + $0x4c] sm:$0xff]
      %v1107 = vld [vmem:[%s265 + $0x54] sm:$0xff]
      %v1108 = vpack.c.bf16 %v1099, %v1098
      %v1109 = vpack.c.bf16 %v1101, %v1100
      %v1110 = vpack.c.bf16 %v1103, %v1102
      %v1111 = vpack.c.bf16 %v1105, %v1104
      %v1112 = vpack.c.bf16 %v1107, %v1106
      %s1113 = scalar_lea.vmem %s271, 320
      %v1114 = vld [vmem:[%s1113] sm:$0xf]
      %v1115 = vld [vmem:[%s1113 + $0x4] sm:$0xf]
      %v1116 = vld [vmem:[%s1113 + $0x8] sm:$0xf]
      %v1117 = vld [vmem:[%s1113 + $0xc] sm:$0xf]
      %v1118 = vld [vmem:[%s1113 + $0x10] sm:$0xf]
      %v1119 = vld [vmem:[%s1113 + $0x14] sm:$0xf]
      %v1120 = vld [vmem:[%s1113 + $0x18] sm:$0xf]
      %v1121 = vld [vmem:[%s1113 + $0x1c] sm:$0xf]
      %v1122 = vld [vmem:[%s1113 + $0x20] sm:$0xf]
      %v1123 = vld [vmem:[%s1113 + $0x24] sm:$0xf]
      %v1124 = vld [vmem:[%s1113 + $0x28] sm:$0xf]
      %v1125 = vld [vmem:[%s1113 + $0x2c] sm:$0xf]
      %v1126 = vld [vmem:[%s1113 + $0x30] sm:$0xf]
      %v1127 = vld [vmem:[%s1113 + $0x34] sm:$0xf]
      %v1128 = vld [vmem:[%s1113 + $0x38] sm:$0xf]
      %v1129 = vld [vmem:[%s1113 + $0x3c] sm:$0xf]
      %v1146 = vunpack.c.l.b16 %v1114
      %v1147 = vunpack.c.l.b16 %v1115
      %v1148 = vunpack.c.l.b16 %v1116
      %v1149 = vunpack.c.l.b16 %v1117
      %v1150 = vunpack.c.l.b16 %v1118
      %v1151 = vunpack.c.l.b16 %v1119
      %v1152 = vunpack.c.l.b16 %v1120
      %v1153 = vunpack.c.l.b16 %v1121
      %v1154 = vunpack.c.l.b16 %v1122
      %v1155 = vunpack.c.l.b16 %v1123
      %v1156 = vunpack.c.l.b16 %v1124
      %v1157 = vunpack.c.l.b16 %v1125
      %v1158 = vunpack.c.l.b16 %v1126
      %v1159 = vunpack.c.l.b16 %v1127
      %v1160 = vunpack.c.l.b16 %v1128
      %v1161 = vunpack.c.l.b16 %v1129
      %v1162 = vpack.c.b16 %v1147, %v1146
      %v1163 = vpack.c.b16 %v1149, %v1148
      %v1164 = vpack.c.b16 %v1151, %v1150
      %v1165 = vpack.c.b16 %v1153, %v1152
      %v1166 = vpack.c.b16 %v1155, %v1154
      %v1167 = vpack.c.b16 %v1157, %v1156
      %v1168 = vpack.c.b16 %v1159, %v1158
      %v1169 = vpack.c.b16 %v1161, %v1160
      %1178 = vmatprep.subr.bf16.mxu0 0
      %1179 = vmatpush1.bf16.msra.mxu0 %v1162
      %1180 = vmatprep.subr.bf16.mxu0 0
      %1181 = vmatpush1.bf16.msra.mxu0 %v1163
      %1182 = vmatprep.subr.bf16.mxu0 0
      %1183 = vmatpush1.bf16.msra.mxu0 %v1164
      %1184 = vmatprep.subr.bf16.mxu0 0
      %1185 = vmatpush1.bf16.msra.mxu0 %v1165
      %1186 = vmatprep.subr.bf16.mxu0 0
      %1187 = vmatpush1.bf16.msra.mxu0 %v1166
      %1188 = vmatprep.subr.bf16.mxu0 0
      %1189 = vmatpush1.bf16.msra.mxu0 %v1167
      %1190 = vmatprep.subr.bf16.mxu0 0
      %1191 = vmatpush1.bf16.msra.mxu0 %v1168
      %1192 = vmatprep.subr.bf16.mxu0 0
      %1193 = vmatpush1.bf16.msra.mxu0 %v1169
      %1194 = vmatprep.subr.bf16.mxu0 0
      %1195 = vmatpush1.bf16.msra.mxu0 0
      %1196 = vmatprep.subr.bf16.mxu0 0
      %1197 = vmatpush1.bf16.msra.mxu0 0
      %1198 = vmatprep.subr.bf16.mxu0 0
      %1199 = vmatpush1.bf16.msra.mxu0 0
      %1200 = vmatprep.subr.bf16.mxu0 0
      %1201 = vmatpush1.bf16.msra.mxu0 0
      %1202 = vmatprep.subr.bf16.mxu0 0
      %1203 = vmatpush1.bf16.msra.mxu0 0
      %1204 = vmatprep.subr.bf16.mxu0 0
      %1205 = vmatpush1.bf16.msra.mxu0 0
      %1206 = vmatprep.subr.bf16.mxu0 0
      %1207 = vmatpush1.bf16.msra.mxu0 0
      %1208 = vmatprep.subr.bf16.mxu0 0
      %1209 = vmatpush1.bf16.msra.mxu0 0
      %1210 = vmatprep.mubr.bf16.mxu0 0
      %1211 = vmatmul.mubr.bf16.gmra.mrb[0].mxu0 %v1108
      %v1212 = vpop.f32.mrb[0].mxu0
      %v1213 = vadd.f32 0.0, %v1212
      %v1214 = vpop.f32.mrb[0].mxu0
      %v1215 = vpop.f32.mrb[0].mxu0
      %v1216 = vadd.f32 0.0, %v1215
      %v1217 = vpop.f32.mrb[0].mxu0
      %1218 = vmatprep.mubr.bf16.mxu0 0
      %1219 = vmatmul.mubr.bf16.gmra.mrb[0].mxu0 %v1109
      %v1220 = vpop.f32.mrb[0].mxu0
      %v1221 = vadd.f32 0.0, %v1220
      %v1222 = vpop.f32.mrb[0].mxu0
      %v1223 = vpop.f32.mrb[0].mxu0
      %v1224 = vadd.f32 0.0, %v1223
      %v1225 = vpop.f32.mrb[0].mxu0
      %1226 = vmatprep.mubr.bf16.mxu0 0
      %1227 = vmatmul.mubr.bf16.gmra.mrb[0].mxu0 %v1110
      %v1228 = vpop.f32.mrb[0].mxu0
      %v1229 = vadd.f32 0.0, %v1228
      %v1230 = vpop.f32.mrb[0].mxu0
      %v1231 = vpop.f32.mrb[0].mxu0
      %v1232 = vadd.f32 0.0, %v1231
      %v1233 = vpop.f32.mrb[0].mxu0
      %1234 = vmatprep.mubr.bf16.mxu0 0
      %1235 = vmatmul.mubr.bf16.gmra.mrb[0].mxu0 %v1111
      %v1236 = vpop.f32.mrb[0].mxu0
      %v1237 = vadd.f32 0.0, %v1236
      %v1238 = vpop.f32.mrb[0].mxu0
      %v1239 = vpop.f32.mrb[0].mxu0
      %v1240 = vadd.f32 0.0, %v1239
      %v1241 = vpop.f32.mrb[0].mxu0
      %1242 = vmatprep.mubr.bf16.mxu0 0
      %1243 = vmatmul.mubr.bf16.gmra.mrb[0].mxu0 %v1112
      %v1244 = vpop.f32.mrb[0].mxu0
      %v1245 = vadd.f32 0.0, %v1244
      %v1246 = vpop.f32.mrb[0].mxu0
      %v1247 = vpop.f32.mrb[0].mxu0
      %v1248 = vadd.f32 0.0, %v1247
      %v1249 = vpop.f32.mrb[0].mxu0
      %1250 = vdwg.mxu0
      %v1251 = vadd.f32 %v1088, %v1213
      %v1252 = vadd.f32 %v1089, %v1216
      %v1253 = vadd.f32 %v1090, %v1221
      %v1254 = vadd.f32 %v1091, %v1224
      %v1255 = vadd.f32 %v1092, %v1229
      %v1256 = vadd.f32 %v1093, %v1232
      %v1257 = vadd.f32 %v1094, %v1237
      %v1258 = vadd.f32 %v1095, %v1240
      %v1259 = vadd.f32 %v1096, %v1245
      %v1260 = vadd.f32 %v1097, %v1248
      %v1261 = vld [vmem:[%s265 + $0x14] sm:$0xff]
      %v1262 = vld [vmem:[%s265 + $0x1c] sm:$0xff]
      %v1263 = vld [vmem:[%s265 + $0x24] sm:$0xff]
      %v1264 = vld [vmem:[%s265 + $0x2c] sm:$0xff]
      %v1265 = vld [vmem:[%s265 + $0x34] sm:$0xff]
      %v1266 = vld [vmem:[%s265 + $0x3c] sm:$0xff]
      %v1267 = vld [vmem:[%s265 + $0x44] sm:$0xff]
      %v1268 = vld [vmem:[%s265 + $0x4c] sm:$0xff]
      %v1269 = vld [vmem:[%s265 + $0x54] sm:$0xff]
      %v1270 = vld [vmem:[%s265 + $0x5c] sm:$0xff]
      %v1271 = vpack.c.bf16 %v1262, %v1261
      %v1272 = vpack.c.bf16 %v1264, %v1263
      %v1273 = vpack.c.bf16 %v1266, %v1265
      %v1274 = vpack.c.bf16 %v1268, %v1267
      %v1275 = vpack.c.bf16 %v1270, %v1269
      %s1276 = scalar_lea.vmem %s271, 384
      %v1277 = vld [vmem:[%s1276] sm:$0xf]
      %v1278 = vld [vmem:[%s1276 + $0x4] sm:$0xf]
      %v1279 = vld [vmem:[%s1276 + $0x8] sm:$0xf]
      %v1280 = vld [vmem:[%s1276 + $0xc] sm:$0xf]
      %v1281 = vld [vmem:[%s1276 + $0x10] sm:$0xf]
      %v1282 = vld [vmem:[%s1276 + $0x14] sm:$0xf]
      %v1283 = vld [vmem:[%s1276 + $0x18] sm:$0xf]
      %v1284 = vld [vmem:[%s1276 + $0x1c] sm:$0xf]
      %v1285 = vld [vmem:[%s1276 + $0x20] sm:$0xf]
      %v1286 = vld [vmem:[%s1276 + $0x24] sm:$0xf]
      %v1287 = vld [vmem:[%s1276 + $0x28] sm:$0xf]
      %v1288 = vld [vmem:[%s1276 + $0x2c] sm:$0xf]
      %v1289 = vld [vmem:[%s1276 + $0x30] sm:$0xf]
      %v1290 = vld [vmem:[%s1276 + $0x34] sm:$0xf]
      %v1291 = vld [vmem:[%s1276 + $0x38] sm:$0xf]
      %v1292 = vld [vmem:[%s1276 + $0x3c] sm:$0xf]
      %v1309 = vunpack.c.l.b16 %v1277
      %v1310 = vunpack.c.l.b16 %v1278
      %v1311 = vunpack.c.l.b16 %v1279
      %v1312 = vunpack.c.l.b16 %v1280
      %v1313 = vunpack.c.l.b16 %v1281
      %v1314 = vunpack.c.l.b16 %v1282
      %v1315 = vunpack.c.l.b16 %v1283
      %v1316 = vunpack.c.l.b16 %v1284
      %v1317 = vunpack.c.l.b16 %v1285
      %v1318 = vunpack.c.l.b16 %v1286
      %v1319 = vunpack.c.l.b16 %v1287
      %v1320 = vunpack.c.l.b16 %v1288
      %v1321 = vunpack.c.l.b16 %v1289
      %v1322 = vunpack.c.l.b16 %v1290
      %v1323 = vunpack.c.l.b16 %v1291
      %v1324 = vunpack.c.l.b16 %v1292
      %v1325 = vpack.c.b16 %v1310, %v1309
      %v1326 = vpack.c.b16 %v1312, %v1311
      %v1327 = vpack.c.b16 %v1314, %v1313
      %v1328 = vpack.c.b16 %v1316, %v1315
      %v1329 = vpack.c.b16 %v1318, %v1317
      %v1330 = vpack.c.b16 %v1320, %v1319
      %v1331 = vpack.c.b16 %v1322, %v1321
      %v1332 = vpack.c.b16 %v1324, %v1323
      %1341 = vmatprep.subr.bf16.mxu0 0
      %1342 = vmatpush1.bf16.msra.mxu0 %v1325
      %1343 = vmatprep.subr.bf16.mxu0 0
      %1344 = vmatpush1.bf16.msra.mxu0 %v1326
      %1345 = vmatprep.subr.bf16.mxu0 0
      %1346 = vmatpush1.bf16.msra.mxu0 %v1327
      %1347 = vmatprep.subr.bf16.mxu0 0
      %1348 = vmatpush1.bf16.msra.mxu0 %v1328
      %1349 = vmatprep.subr.bf16.mxu0 0
      %1350 = vmatpush1.bf16.msra.mxu0 %v1329
      %1351 = vmatprep.subr.bf16.mxu0 0
      %1352 = vmatpush1.bf16.msra.mxu0 %v1330
      %1353 = vmatprep.subr.bf16.mxu0 0
      %1354 = vmatpush1.bf16.msra.mxu0 %v1331
      %1355 = vmatprep.subr.bf16.mxu0 0
      %1356 = vmatpush1.bf16.msra.mxu0 %v1332
      %1357 = vmatprep.subr.bf16.mxu0 0
      %1358 = vmatpush1.bf16.msra.mxu0 0
      %1359 = vmatprep.subr.bf16.mxu0 0
      %1360 = vmatpush1.bf16.msra.mxu0 0
      %1361 = vmatprep.subr.bf16.mxu0 0
      %1362 = vmatpush1.bf16.msra.mxu0 0
      %1363 = vmatprep.subr.bf16.mxu0 0
      %1364 = vmatpush1.bf16.msra.mxu0 0
      %1365 = vmatprep.subr.bf16.mxu0 0
      %1366 = vmatpush1.bf16.msra.mxu0 0
      %1367 = vmatprep.subr.bf16.mxu0 0
      %1368 = vmatpush1.bf16.msra.mxu0 0
      %1369 = vmatprep.subr.bf16.mxu0 0
      %1370 = vmatpush1.bf16.msra.mxu0 0
      %1371 = vmatprep.subr.bf16.mxu0 0
      %1372 = vmatpush1.bf16.msra.mxu0 0
      %1373 = vmatprep.mubr.bf16.mxu0 0
      %1374 = vmatmul.mubr.bf16.gmra.mrb[0].mxu0 %v1271
      %v1375 = vpop.f32.mrb[0].mxu0
      %v1376 = vadd.f32 0.0, %v1375
      %v1377 = vpop.f32.mrb[0].mxu0
      %v1378 = vpop.f32.mrb[0].mxu0
      %v1379 = vadd.f32 0.0, %v1378
      %v1380 = vpop.f32.mrb[0].mxu0
      %1381 = vmatprep.mubr.bf16.mxu0 0
      %1382 = vmatmul.mubr.bf16.gmra.mrb[0].mxu0 %v1272
      %v1383 = vpop.f32.mrb[0].mxu0
      %v1384 = vadd.f32 0.0, %v1383
      %v1385 = vpop.f32.mrb[0].mxu0
      %v1386 = vpop.f32.mrb[0].mxu0
      %v1387 = vadd.f32 0.0, %v1386
      %v1388 = vpop.f32.mrb[0].mxu0
      %1389 = vmatprep.mubr.bf16.mxu0 0
      %1390 = vmatmul.mubr.bf16.gmra.mrb[0].mxu0 %v1273
      %v1391 = vpop.f32.mrb[0].mxu0
      %v1392 = vadd.f32 0.0, %v1391
      %v1393 = vpop.f32.mrb[0].mxu0
      %v1394 = vpop.f32.mrb[0].mxu0
      %v1395 = vadd.f32 0.0, %v1394
      %v1396 = vpop.f32.mrb[0].mxu0
      %1397 = vmatprep.mubr.bf16.mxu0 0
      %1398 = vmatmul.mubr.bf16.gmra.mrb[0].mxu0 %v1274
      %v1399 = vpop.f32.mrb[0].mxu0
      %v1400 = vadd.f32 0.0, %v1399
      %v1401 = vpop.f32.mrb[0].mxu0
      %v1402 = vpop.f32.mrb[0].mxu0
      %v1403 = vadd.f32 0.0, %v1402
      %v1404 = vpop.f32.mrb[0].mxu0
      %1405 = vmatprep.mubr.bf16.mxu0 0
      %1406 = vmatmul.mubr.bf16.gmra.mrb[0].mxu0 %v1275
      %v1407 = vpop.f32.mrb[0].mxu0
      %v1408 = vadd.f32 0.0, %v1407
      %v1409 = vpop.f32.mrb[0].mxu0
      %v1410 = vpop.f32.mrb[0].mxu0
      %v1411 = vadd.f32 0.0, %v1410
      %v1412 = vpop.f32.mrb[0].mxu0
      %1413 = vdwg.mxu0
      %v1414 = vadd.f32 %v1251, %v1376
      %v1415 = vadd.f32 %v1252, %v1379
      %v1416 = vadd.f32 %v1253, %v1384
      %v1417 = vadd.f32 %v1254, %v1387
      %v1418 = vadd.f32 %v1255, %v1392
      %v1419 = vadd.f32 %v1256, %v1395
      %v1420 = vadd.f32 %v1257, %v1400
      %v1421 = vadd.f32 %v1258, %v1403
      %v1422 = vadd.f32 %v1259, %v1408
      %v1423 = vadd.f32 %v1260, %v1411
      %v1424 = vld [vmem:[%s265 + $0x15] sm:$0xff]
      %v1425 = vld [vmem:[%s265 + $0x1d] sm:$0xff]
      %v1426 = vld [vmem:[%s265 + $0x25] sm:$0xff]
      %v1427 = vld [vmem:[%s265 + $0x2d] sm:$0xff]
      %v1428 = vld [vmem:[%s265 + $0x35] sm:$0xff]
      %v1429 = vld [vmem:[%s265 + $0x3d] sm:$0xff]
      %v1430 = vld [vmem:[%s265 + $0x45] sm:$0xff]
      %v1431 = vld [vmem:[%s265 + $0x4d] sm:$0xff]
      %v1432 = vld [vmem:[%s265 + $0x55] sm:$0xff]
      %v1433 = vld [vmem:[%s265 + $0x5d] sm:$0xff]
      %v1434 = vpack.c.bf16 %v1425, %v1424
      %v1435 = vpack.c.bf16 %v1427, %v1426
      %v1436 = vpack.c.bf16 %v1429, %v1428
      %v1437 = vpack.c.bf16 %v1431, %v1430
      %v1438 = vpack.c.bf16 %v1433, %v1432
      %s1439 = scalar_lea.vmem %s271, 448
      %v1440 = vld [vmem:[%s1439] sm:$0xf]
      %v1441 = vld [vmem:[%s1439 + $0x4] sm:$0xf]
      %v1442 = vld [vmem:[%s1439 + $0x8] sm:$0xf]
      %v1443 = vld [vmem:[%s1439 + $0xc] sm:$0xf]
      %v1444 = vld [vmem:[%s1439 + $0x10] sm:$0xf]
      %v1445 = vld [vmem:[%s1439 + $0x14] sm:$0xf]
      %v1446 = vld [vmem:[%s1439 + $0x18] sm:$0xf]
      %v1447 = vld [vmem:[%s1439 + $0x1c] sm:$0xf]
      %v1448 = vld [vmem:[%s1439 + $0x20] sm:$0xf]
      %v1449 = vld [vmem:[%s1439 + $0x24] sm:$0xf]
      %v1450 = vld [vmem:[%s1439 + $0x28] sm:$0xf]
      %v1451 = vld [vmem:[%s1439 + $0x2c] sm:$0xf]
      %v1452 = vld [vmem:[%s1439 + $0x30] sm:$0xf]
      %v1453 = vld [vmem:[%s1439 + $0x34] sm:$0xf]
      %v1454 = vld [vmem:[%s1439 + $0x38] sm:$0xf]
      %v1455 = vld [vmem:[%s1439 + $0x3c] sm:$0xf]
      %v1472 = vunpack.c.l.b16 %v1440
      %v1473 = vunpack.c.l.b16 %v1441
      %v1474 = vunpack.c.l.b16 %v1442
      %v1475 = vunpack.c.l.b16 %v1443
      %v1476 = vunpack.c.l.b16 %v1444
      %v1477 = vunpack.c.l.b16 %v1445
      %v1478 = vunpack.c.l.b16 %v1446
      %v1479 = vunpack.c.l.b16 %v1447
      %v1480 = vunpack.c.l.b16 %v1448
      %v1481 = vunpack.c.l.b16 %v1449
      %v1482 = vunpack.c.l.b16 %v1450
      %v1483 = vunpack.c.l.b16 %v1451
      %v1484 = vunpack.c.l.b16 %v1452
      %v1485 = vunpack.c.l.b16 %v1453
      %v1486 = vunpack.c.l.b16 %v1454
      %v1487 = vunpack.c.l.b16 %v1455
      %v1488 = vpack.c.b16 %v1473, %v1472
      %v1489 = vpack.c.b16 %v1475, %v1474
      %v1490 = vpack.c.b16 %v1477, %v1476
      %v1491 = vpack.c.b16 %v1479, %v1478
      %v1492 = vpack.c.b16 %v1481, %v1480
      %v1493 = vpack.c.b16 %v1483, %v1482
      %v1494 = vpack.c.b16 %v1485, %v1484
      %v1495 = vpack.c.b16 %v1487, %v1486
      %1504 = vmatprep.subr.bf16.mxu0 0
      %1505 = vmatpush1.bf16.msra.mxu0 %v1488
      %1506 = vmatprep.subr.bf16.mxu0 0
      %1507 = vmatpush1.bf16.msra.mxu0 %v1489
      %1508 = vmatprep.subr.bf16.mxu0 0
      %1509 = vmatpush1.bf16.msra.mxu0 %v1490
      %1510 = vmatprep.subr.bf16.mxu0 0
      %1511 = vmatpush1.bf16.msra.mxu0 %v1491
      %1512 = vmatprep.subr.bf16.mxu0 0
      %1513 = vmatpush1.bf16.msra.mxu0 %v1492
      %1514 = vmatprep.subr.bf16.mxu0 0
      %1515 = vmatpush1.bf16.msra.mxu0 %v1493
      %1516 = vmatprep.subr.bf16.mxu0 0
      %1517 = vmatpush1.bf16.msra.mxu0 %v1494
      %1518 = vmatprep.subr.bf16.mxu0 0
      %1519 = vmatpush1.bf16.msra.mxu0 %v1495
      %1520 = vmatprep.subr.bf16.mxu0 0
      %1521 = vmatpush1.bf16.msra.mxu0 0
      %1522 = vmatprep.subr.bf16.mxu0 0
      %1523 = vmatpush1.bf16.msra.mxu0 0
      %1524 = vmatprep.subr.bf16.mxu0 0
      %1525 = vmatpush1.bf16.msra.mxu0 0
      %1526 = vmatprep.subr.bf16.mxu0 0
      %1527 = vmatpush1.bf16.msra.mxu0 0
      %1528 = vmatprep.subr.bf16.mxu0 0
      %1529 = vmatpush1.bf16.msra.mxu0 0
      %1530 = vmatprep.subr.bf16.mxu0 0
      %1531 = vmatpush1.bf16.msra.mxu0 0
      %1532 = vmatprep.subr.bf16.mxu0 0
      %1533 = vmatpush1.bf16.msra.mxu0 0
      %1534 = vmatprep.subr.bf16.mxu0 0
      %1535 = vmatpush1.bf16.msra.mxu0 0
      %1536 = vmatprep.mubr.bf16.mxu0 0
      %1537 = vmatmul.mubr.bf16.gmra.mrb[0].mxu0 %v1434
      %v1538 = vpop.f32.mrb[0].mxu0
      %v1539 = vadd.f32 0.0, %v1538
      %v1540 = vpop.f32.mrb[0].mxu0
      %v1541 = vpop.f32.mrb[0].mxu0
      %v1542 = vadd.f32 0.0, %v1541
      %v1543 = vpop.f32.mrb[0].mxu0
      %1544 = vmatprep.mubr.bf16.mxu0 0
      %1545 = vmatmul.mubr.bf16.gmra.mrb[0].mxu0 %v1435
      %v1546 = vpop.f32.mrb[0].mxu0
      %v1547 = vadd.f32 0.0, %v1546
      %v1548 = vpop.f32.mrb[0].mxu0
      %v1549 = vpop.f32.mrb[0].mxu0
      %v1550 = vadd.f32 0.0, %v1549
      %v1551 = vpop.f32.mrb[0].mxu0
      %1552 = vmatprep.mubr.bf16.mxu0 0
      %1553 = vmatmul.mubr.bf16.gmra.mrb[0].mxu0 %v1436
      %v1554 = vpop.f32.mrb[0].mxu0
      %v1555 = vadd.f32 0.0, %v1554
      %v1556 = vpop.f32.mrb[0].mxu0
      %v1557 = vpop.f32.mrb[0].mxu0
      %v1558 = vadd.f32 0.0, %v1557
      %v1559 = vpop.f32.mrb[0].mxu0
      %1560 = vmatprep.mubr.bf16.mxu0 0
      %1561 = vmatmul.mubr.bf16.gmra.mrb[0].mxu0 %v1437
      %v1562 = vpop.f32.mrb[0].mxu0
      %v1563 = vadd.f32 0.0, %v1562
      %v1564 = vpop.f32.mrb[0].mxu0
      %v1565 = vpop.f32.mrb[0].mxu0
      %v1566 = vadd.f32 0.0, %v1565
      %v1567 = vpop.f32.mrb[0].mxu0
      %1568 = vmatprep.mubr.bf16.mxu0 0
      %1569 = vmatmul.mubr.bf16.gmra.mrb[0].mxu0 %v1438
      %v1570 = vpop.f32.mrb[0].mxu0
      %v1571 = vadd.f32 0.0, %v1570
      %v1572 = vpop.f32.mrb[0].mxu0
      %v1573 = vpop.f32.mrb[0].mxu0
      %v1574 = vadd.f32 0.0, %v1573
      %v1575 = vpop.f32.mrb[0].mxu0
      %1576 = vdwg.mxu0
      %v1577 = vadd.f32 %v1414, %v1539
      %v1578 = vadd.f32 %v1415, %v1542
      %v1579 = vadd.f32 %v1416, %v1547
      %v1580 = vadd.f32 %v1417, %v1550
      %v1581 = vadd.f32 %v1418, %v1555
      %v1582 = vadd.f32 %v1419, %v1558
      %v1583 = vadd.f32 %v1420, %v1563
      %v1584 = vadd.f32 %v1421, %v1566
      %v1585 = vadd.f32 %v1422, %v1571
      %v1586 = vadd.f32 %v1423, %v1574
      %v1587 = vld [vmem:[%s265 + $0x16] sm:$0xff]
      %v1588 = vld [vmem:[%s265 + $0x1e] sm:$0xff]
      %v1589 = vld [vmem:[%s265 + $0x26] sm:$0xff]
      %v1590 = vld [vmem:[%s265 + $0x2e] sm:$0xff]
      %v1591 = vld [vmem:[%s265 + $0x36] sm:$0xff]
      %v1592 = vld [vmem:[%s265 + $0x3e] sm:$0xff]
      %v1593 = vld [vmem:[%s265 + $0x46] sm:$0xff]
      %v1594 = vld [vmem:[%s265 + $0x4e] sm:$0xff]
      %v1595 = vld [vmem:[%s265 + $0x56] sm:$0xff]
      %v1596 = vld [vmem:[%s265 + $0x5e] sm:$0xff]
      %v1597 = vpack.c.bf16 %v1588, %v1587
      %v1598 = vpack.c.bf16 %v1590, %v1589
      %v1599 = vpack.c.bf16 %v1592, %v1591
      %v1600 = vpack.c.bf16 %v1594, %v1593
      %v1601 = vpack.c.bf16 %v1596, %v1595
      %s1602 = scalar_lea.vmem %s271, 512
      %v1603 = vld [vmem:[%s1602] sm:$0xf]
      %v1604 = vld [vmem:[%s1602 + $0x4] sm:$0xf]
      %v1605 = vld [vmem:[%s1602 + $0x8] sm:$0xf]
      %v1606 = vld [vmem:[%s1602 + $0xc] sm:$0xf]
      %v1607 = vld [vmem:[%s1602 + $0x10] sm:$0xf]
      %v1608 = vld [vmem:[%s1602 + $0x14] sm:$0xf]
      %v1609 = vld [vmem:[%s1602 + $0x18] sm:$0xf]
      %v1610 = vld [vmem:[%s1602 + $0x1c] sm:$0xf]
      %v1611 = vld [vmem:[%s1602 + $0x20] sm:$0xf]
      %v1612 = vld [vmem:[%s1602 + $0x24] sm:$0xf]
      %v1613 = vld [vmem:[%s1602 + $0x28] sm:$0xf]
      %v1614 = vld [vmem:[%s1602 + $0x2c] sm:$0xf]
      %v1615 = vld [vmem:[%s1602 + $0x30] sm:$0xf]
      %v1616 = vld [vmem:[%s1602 + $0x34] sm:$0xf]
      %v1617 = vld [vmem:[%s1602 + $0x38] sm:$0xf]
      %v1618 = vld [vmem:[%s1602 + $0x3c] sm:$0xf]
      %v1635 = vunpack.c.l.b16 %v1603
      %v1636 = vunpack.c.l.b16 %v1604
      %v1637 = vunpack.c.l.b16 %v1605
      %v1638 = vunpack.c.l.b16 %v1606
      %v1639 = vunpack.c.l.b16 %v1607
      %v1640 = vunpack.c.l.b16 %v1608
      %v1641 = vunpack.c.l.b16 %v1609
      %v1642 = vunpack.c.l.b16 %v1610
      %v1643 = vunpack.c.l.b16 %v1611
      %v1644 = vunpack.c.l.b16 %v1612
      %v1645 = vunpack.c.l.b16 %v1613
      %v1646 = vunpack.c.l.b16 %v1614
      %v1647 = vunpack.c.l.b16 %v1615
      %v1648 = vunpack.c.l.b16 %v1616
      %v1649 = vunpack.c.l.b16 %v1617
      %v1650 = vunpack.c.l.b16 %v1618
      %v1651 = vpack.c.b16 %v1636, %v1635
      %v1652 = vpack.c.b16 %v1638, %v1637
      %v1653 = vpack.c.b16 %v1640, %v1639
      %v1654 = vpack.c.b16 %v1642, %v1641
      %v1655 = vpack.c.b16 %v1644, %v1643
      %v1656 = vpack.c.b16 %v1646, %v1645
      %v1657 = vpack.c.b16 %v1648, %v1647
      %v1658 = vpack.c.b16 %v1650, %v1649
      %1667 = vmatprep.subr.bf16.mxu0 0
      %1668 = vmatpush1.bf16.msra.mxu0 %v1651
      %1669 = vmatprep.subr.bf16.mxu0 0
      %1670 = vmatpush1.bf16.msra.mxu0 %v1652
      %1671 = vmatprep.subr.bf16.mxu0 0
      %1672 = vmatpush1.bf16.msra.mxu0 %v1653
      %1673 = vmatprep.subr.bf16.mxu0 0
      %1674 = vmatpush1.bf16.msra.mxu0 %v1654
      %1675 = vmatprep.subr.bf16.mxu0 0
      %1676 = vmatpush1.bf16.msra.mxu0 %v1655
      %1677 = vmatprep.subr.bf16.mxu0 0
      %1678 = vmatpush1.bf16.msra.mxu0 %v1656
      %1679 = vmatprep.subr.bf16.mxu0 0
      %1680 = vmatpush1.bf16.msra.mxu0 %v1657
      %1681 = vmatprep.subr.bf16.mxu0 0
      %1682 = vmatpush1.bf16.msra.mxu0 %v1658
      %1683 = vmatprep.subr.bf16.mxu0 0
      %1684 = vmatpush1.bf16.msra.mxu0 0
      %1685 = vmatprep.subr.bf16.mxu0 0
      %1686 = vmatpush1.bf16.msra.mxu0 0
      %1687 = vmatprep.subr.bf16.mxu0 0
      %1688 = vmatpush1.bf16.msra.mxu0 0
      %1689 = vmatprep.subr.bf16.mxu0 0
      %1690 = vmatpush1.bf16.msra.mxu0 0
      %1691 = vmatprep.subr.bf16.mxu0 0
      %1692 = vmatpush1.bf16.msra.mxu0 0
      %1693 = vmatprep.subr.bf16.mxu0 0
      %1694 = vmatpush1.bf16.msra.mxu0 0
      %1695 = vmatprep.subr.bf16.mxu0 0
      %1696 = vmatpush1.bf16.msra.mxu0 0
      %1697 = vmatprep.subr.bf16.mxu0 0
      %1698 = vmatpush1.bf16.msra.mxu0 0
      %1699 = vmatprep.mubr.bf16.mxu0 0
      %1700 = vmatmul.mubr.bf16.gmra.mrb[0].mxu0 %v1597
      %v1701 = vpop.f32.mrb[0].mxu0
      %v1702 = vadd.f32 0.0, %v1701
      %v1703 = vpop.f32.mrb[0].mxu0
      %v1704 = vpop.f32.mrb[0].mxu0
      %v1705 = vadd.f32 0.0, %v1704
      %v1706 = vpop.f32.mrb[0].mxu0
      %1707 = vmatprep.mubr.bf16.mxu0 0
      %1708 = vmatmul.mubr.bf16.gmra.mrb[0].mxu0 %v1598
      %v1709 = vpop.f32.mrb[0].mxu0
      %v1710 = vadd.f32 0.0, %v1709
      %v1711 = vpop.f32.mrb[0].mxu0
      %v1712 = vpop.f32.mrb[0].mxu0
      %v1713 = vadd.f32 0.0, %v1712
      %v1714 = vpop.f32.mrb[0].mxu0
      %1715 = vmatprep.mubr.bf16.mxu0 0
      %1716 = vmatmul.mubr.bf16.gmra.mrb[0].mxu0 %v1599
      %v1717 = vpop.f32.mrb[0].mxu0
      %v1718 = vadd.f32 0.0, %v1717
      %v1719 = vpop.f32.mrb[0].mxu0
      %v1720 = vpop.f32.mrb[0].mxu0
      %v1721 = vadd.f32 0.0, %v1720
      %v1722 = vpop.f32.mrb[0].mxu0
      %1723 = vmatprep.mubr.bf16.mxu0 0
      %1724 = vmatmul.mubr.bf16.gmra.mrb[0].mxu0 %v1600
      %v1725 = vpop.f32.mrb[0].mxu0
      %v1726 = vadd.f32 0.0, %v1725
      %v1727 = vpop.f32.mrb[0].mxu0
      %v1728 = vpop.f32.mrb[0].mxu0
      %v1729 = vadd.f32 0.0, %v1728
      %v1730 = vpop.f32.mrb[0].mxu0
      %1731 = vmatprep.mubr.bf16.mxu0 0
      %1732 = vmatmul.mubr.bf16.gmra.mrb[0].mxu0 %v1601
      %v1733 = vpop.f32.mrb[0].mxu0
      %v1734 = vadd.f32 0.0, %v1733
      %v1735 = vpop.f32.mrb[0].mxu0
      %v1736 = vpop.f32.mrb[0].mxu0
      %v1737 = vadd.f32 0.0, %v1736
      %v1738 = vpop.f32.mrb[0].mxu0
      %1739 = vdwg.mxu0
      %v1740 = vadd.f32 %v1577, %v1702
      %v1741 = vadd.f32 %v1578, %v1705
      %v1742 = vadd.f32 %v1579, %v1710
      %v1743 = vadd.f32 %v1580, %v1713
      %v1744 = vadd.f32 %v1581, %v1718
      %v1745 = vadd.f32 %v1582, %v1721
      %v1746 = vadd.f32 %v1583, %v1726
      %v1747 = vadd.f32 %v1584, %v1729
      %v1748 = vadd.f32 %v1585, %v1734
      %v1749 = vadd.f32 %v1586, %v1737
      %v1750 = vld [vmem:[#allocation2] sm:$0xff]
      %v1751 = vld [vmem:[#allocation2 + $0x8] sm:$0xff]
      %v1752 = vld [vmem:[#allocation2 + $0x10] sm:$0xff]
      %v1753 = vld [vmem:[#allocation2 + $0x18] sm:$0xff]
      %v1754 = vld [vmem:[#allocation2 + $0x20] sm:$0xff]
      %v1755 = vld [vmem:[#allocation2 + $0x28] sm:$0xff]
      %v1756 = vld [vmem:[#allocation2 + $0x30] sm:$0xff]
      %v1757 = vld [vmem:[#allocation2 + $0x38] sm:$0xff]
      %v1758 = vld [vmem:[#allocation2 + $0x40] sm:$0xff]
      %v1759 = vld [vmem:[#allocation2 + $0x48] sm:$0xff]
      %v1760 = vadd.f32 %v1750, %v1740
      %v1761 = vadd.f32 %v1751, %v1741
      %v1762 = vadd.f32 %v1752, %v1742
      %v1763 = vadd.f32 %v1753, %v1743
      %v1764 = vadd.f32 %v1754, %v1744
      %v1765 = vadd.f32 %v1755, %v1745
      %v1766 = vadd.f32 %v1756, %v1746
      %v1767 = vadd.f32 %v1757, %v1747
      %v1768 = vadd.f32 %v1758, %v1748
      %v1769 = vadd.f32 %v1759, %v1749
      %1770 = vst [vmem:[#allocation2] sm:$0xff] %v1760
      %1771 = vst [vmem:[#allocation2 + $0x8] sm:$0xff] %v1761
      %1772 = vst [vmem:[#allocation2 + $0x10] sm:$0xff] %v1762
      %1773 = vst [vmem:[#allocation2 + $0x18] sm:$0xff] %v1763
      %1774 = vst [vmem:[#allocation2 + $0x20] sm:$0xff] %v1764
      %1775 = vst [vmem:[#allocation2 + $0x28] sm:$0xff] %v1765
      %1776 = vst [vmem:[#allocation2 + $0x30] sm:$0xff] %v1766
      %1777 = vst [vmem:[#allocation2 + $0x38] sm:$0xff] %v1767
      %1778 = vst [vmem:[#allocation2 + $0x40] sm:$0xff] %v1768
      %1779 = vst [vmem:[#allocation2 + $0x48] sm:$0xff] %v1769
      %p1780 = scmp.eq.s32.totalorder %s23, 2
      // Predicated region
      $region37: #{residual_block_3d.6} parent=31 // pred_check
        %p1781 = pneg %p1780
      $region38: #{residual_block_3d.6} parent=31 // pred_check_branch
        %1783 = sbr.rel (%p1781) target = $region40
      $region39: #{residual_block_3d.6} parent=31 // pred_region
        %v1784 = vld [vmem:[#allocation2] sm:$0xff]
        %v1785 = vld [vmem:[#allocation2 + $0x8] sm:$0xff]
        %v1786 = vld [vmem:[#allocation2 + $0x10] sm:$0xff]
        %v1787 = vld [vmem:[#allocation2 + $0x18] sm:$0xff]
        %v1788 = vld [vmem:[#allocation2 + $0x20] sm:$0xff]
        %v1789 = vld [vmem:[#allocation2 + $0x28] sm:$0xff]
        %v1790 = vld [vmem:[#allocation2 + $0x30] sm:$0xff]
        %v1791 = vld [vmem:[#allocation2 + $0x38] sm:$0xff]
        %v1792 = vld [vmem:[#allocation2 + $0x40] sm:$0xff]
        %v1793 = vld [vmem:[#allocation2 + $0x48] sm:$0xff]
        %1794 = vst [vmem:[%s280] sm:$0xff] %v1784
        %1795 = vst [vmem:[%s280 + $0x8] sm:$0xff] %v1785
        %1796 = vst [vmem:[%s280 + $0x10] sm:$0xff] %v1786
        %1797 = vst [vmem:[%s280 + $0x18] sm:$0xff] %v1787
        %1798 = vst [vmem:[%s280 + $0x20] sm:$0xff] %v1788
        %1799 = vst [vmem:[%s280 + $0x28] sm:$0xff] %v1789
        %1800 = vst [vmem:[%s280 + $0x30] sm:$0xff] %v1790
        %1801 = vst [vmem:[%s280 + $0x38] sm:$0xff] %v1791
        %1802 = vst [vmem:[%s280 + $0x40] sm:$0xff] %v1792
        %1803 = vst [vmem:[%s280 + $0x48] sm:$0xff] %v1793
        %v1804 = vld [vmem:[%s2] sm:$0xff]
        %v1805 = vld [vmem:[%s2 + $0x8] sm:$0xff]
        %v1806 = vld [vmem:[%s2 + $0x10] sm:$0xff]
        %v1807 = vld [vmem:[%s2 + $0x18] sm:$0xff]
        %v1808 = vld [vmem:[%s2 + $0x20] sm:$0xff]
        %v1809 = vld [vmem:[%s2 + $0x28] sm:$0xff]
        %v1810 = vld [vmem:[%s2 + $0x30] sm:$0xff]
        %v1811 = vld [vmem:[%s2 + $0x38] sm:$0xff]
        %v1812 = vld [vmem:[%s2 + $0x40] sm:$0xff]
        %v1813 = vld [vmem:[%s2 + $0x48] sm:$0xff]
        %v1814 = vmul.f32 %v1784, %v1804
        %v1815 = vmul.f32 %v1785, %v1805
        %v1816 = vmul.f32 %v1786, %v1806
        %v1817 = vmul.f32 %v1787, %v1807
        %v1818 = vmul.f32 %v1788, %v1808
        %v1819 = vmul.f32 %v1789, %v1809
        %v1820 = vmul.f32 %v1790, %v1810
        %v1821 = vmul.f32 %v1791, %v1811
        %v1822 = vmul.f32 %v1792, %v1812
        %v1823 = vmul.f32 %v1793, %v1813
        %v1824 = vadd.f32 %v1814, %v1815
        %v1825 = vadd.f32 %v1824, %v1816
        %v1826 = vadd.f32 %v1825, %v1817
        %v1827 = vadd.f32 %v1826, %v1818
        %v1828 = vadd.f32 %v1827, %v1819
        %v1829 = vadd.f32 %v1828, %v1820
        %v1830 = vadd.f32 %v1829, %v1821
        %v1831 = vadd.f32 %v1830, %v1822
        %v1832 = vadd.f32 %v1831, %v1823
        %v1833 = vrot.slane %v1832, 4
        %v1834 = vadd.f32 %v1832, %v1833
        %v1835 = vrot.slane %v1834, 2
        %v1836 = vadd.f32 %v1834, %v1835
        %v1837 = vrot.slane %v1836, 1
        %v1838 = vadd.f32 %v1836, %v1837
        %1839 = vst [vmem:[%s288] sm:$0x1] %v1838
        %v1840 = vmul.f32 %v1814, %v1784
        %v1841 = vmul.f32 %v1815, %v1785
        %v1842 = vmul.f32 %v1816, %v1786
        %v1843 = vmul.f32 %v1817, %v1787
        %v1844 = vmul.f32 %v1818, %v1788
        %v1845 = vmul.f32 %v1819, %v1789
        %v1846 = vmul.f32 %v1820, %v1790
        %v1847 = vmul.f32 %v1821, %v1791
        %v1848 = vmul.f32 %v1822, %v1792
        %v1849 = vmul.f32 %v1823, %v1793
        %v1850 = vadd.f32 %v1840, %v1841
        %v1851 = vadd.f32 %v1850, %v1842
        %v1852 = vadd.f32 %v1851, %v1843
        %v1853 = vadd.f32 %v1852, %v1844
        %v1854 = vadd.f32 %v1853, %v1845
        %v1855 = vadd.f32 %v1854, %v1846
        %v1856 = vadd.f32 %v1855, %v1847
        %v1857 = vadd.f32 %v1856, %v1848
        %v1858 = vadd.f32 %v1857, %v1849
        %v1859 = vrot.slane %v1858, 4
        %v1860 = vadd.f32 %v1858, %v1859
        %v1861 = vrot.slane %v1860, 2
        %v1862 = vadd.f32 %v1860, %v1861
        %v1863 = vrot.slane %v1862, 1
        %v1864 = vadd.f32 %v1862, %v1863
        %1865 = vst [vmem:[%s288 + $0x1] sm:$0x1] %v1864
      $region40: #{residual_block_3d.6} parent=31 // pred_fallthru
        _
      %p1866 = scmp.lt.s32.totalorder %s21, 1
      %s1867 = scalar_select %p1866, %s21, 1
      %p1868 = scmp.lt.s32.totalorder %s22, 7
      %s1869 = scalar_select %p1868, %s22, 7
      %s1870 = smul.addr %s1869, 10
      %s1871 = smul.addr %s1867, 80
      %s1872 = sadd.s32 %s1870, %s1871
      %s1873 = smul.addr %s1872, 8
      %s1874 = scalar_lea.vmem %s3, %s1873
      %p1875 = scmp.lt.s32.totalorder %s21, 1
      %s1876 = scalar_select %p1875, %s21, 1
      %p1877 = scmp.lt.s32.totalorder %s22, 7
      %s1878 = scalar_select %p1877, %s22, 7
      %s1879 = smul.addr %s1876, 8
      %s1880 = sadd.s32 %s1878, %s1879
      %s1881 = smul.addr %s1880, 2
      %s1882 = scalar_lea.vmem %s4, %s1881
      // Predicated region
      $region41: #{residual_block_3d.6} parent=31 // pred_check
        %p1883 = pneg %p132
      $region42: #{residual_block_3d.6} parent=31 // pred_check_branch
        %1885 = sbr.rel (%p1883) target = $region44
      $region43: #{residual_block_3d.6} parent=31 // pred_region
        _
      $region44: #{residual_block_3d.6} parent=31 // pred_fallthru
        _
      // Predicated region
      $region45: #{residual_block_3d.6} parent=31 // pred_check
        %p1886 = pneg %p160
      $region46: #{residual_block_3d.6} parent=31 // pred_check_branch
        %1888 = sbr.rel (%p1886) target = $region48
      $region47: #{residual_block_3d.6} parent=31 // pred_region
        _
      $region48: #{residual_block_3d.6} parent=31 // pred_fallthru
        _
    $region32: #{residual_block_3d.6} parent=5 // pred_fallthru
      _
    %p1889 = scmp.le.s32.totalorder 2, %s11
    // Predicated region
    $region49: #{residual_block_3d.6} parent=5 // pred_check
      %p1890 = pneg %p1889
    $region50: #{residual_block_3d.6} parent=5 // pred_check_branch
      %1892 = sbr.rel (%p1890) target = $region52
    $region51: #{residual_block_3d.6} parent=5 // pred_region
      %s1893 = ssub.s32 %s11, 2
      // Predicated region
      $region53: #{residual_block_3d.6} parent=51 // pred_check
        %p1894 = pneg %p138
      $region54: #{residual_block_3d.6} parent=51 // pred_check_branch
        %1896 = sbr.rel (%p1894) target = $region56
      $region55: #{residual_block_3d.6} parent=51 // pred_region
        %p1897 = scmp.lt.s32.totalorder %s24, 1
        %s1898 = scalar_select %p1897, %s24, 1
        %p1899 = scmp.lt.s32.totalorder %s25, 7
        %s1900 = scalar_select %p1899, %s25, 7
        %s1901 = smul.addr %s1900, 10
        %s1902 = smul.addr %s1898, 80
        %s1903 = sadd.s32 %s1901, %s1902
        %s1904 = smul.addr %s1903, 8
        %s1905 = scalar_lea.vmem %s3, %s1904
      $region56: #{residual_block_3d.6} parent=51 // pred_fallthru
        _
      // Predicated region
      $region57: #{residual_block_3d.6} parent=51 // pred_check
        %p1906 = pneg %p166
      $region58: #{residual_block_3d.6} parent=51 // pred_check_branch
        %1908 = sbr.rel (%p1906) target = $region60
      $region59: #{residual_block_3d.6} parent=51 // pred_region
        %p1909 = scmp.lt.s32.totalorder %s24, 1
        %s1910 = scalar_select %p1909, %s24, 1
        %p1911 = scmp.lt.s32.totalorder %s25, 7
        %s1912 = scalar_select %p1911, %s25, 7
        %s1913 = smul.addr %s1910, 8
        %s1914 = sadd.s32 %s1912, %s1913
        %s1915 = smul.addr %s1914, 2
        %s1916 = scalar_lea.vmem %s4, %s1915
      $region60: #{residual_block_3d.6} parent=51 // pred_fallthru
        _
    $region52: #{residual_block_3d.6} parent=5 // pred_fallthru
      _
  $region6: #{residual_block_3d.6} parent=0 // loop_footer
    %s15 = sadd.s32 1, %s11
  $region7: #{residual_block_3d.6} parent=0 // loop_footer_branch
    %10 = sbr.rel target = $region3
  $region8: #{residual_block_3d.6} parent=0 // loop_exit
    _

// kernel: residual_block_3d.7
$region0: #{residual_block_3d.7}
  #allocation0 [shape = 'u32[]', space=smem, size = 0x4, offset = 0x4, fixed_abs, tag = 'smem constant byte address 0x4 - core index']
  #allocation1 [shape = 'u32[144,128]{1,0:T(1,128)}', space=vmem, size = 0x12000, scoped, tag = 'internal scratch']
  %s0 = inlined_call_operand.vmem [shape: f32[2,8,80,128], index: 0, kind: input, shape index: {}]
  %s1 = inlined_call_operand.vmem [shape: f32[2,8,80,128], index: 1, kind: input, shape index: {}]
  %s2 = inlined_call_operand.vmem [shape: bf16[128,128], index: 2, kind: input, shape index: {}]
  %s3 = inlined_call_operand.vmem [shape: f32[1,128], index: 3, kind: input, shape index: {}]
  %s4 = inlined_call_operand.vmem [shape: f32[1,128], index: 4, kind: input, shape index: {}]
  %s5 = inlined_call_operand.vmem [shape: f32[1,128], index: 5, kind: input, shape index: {}]
  %s6 = inlined_call_operand.vmem [shape: f32[1,128], index: 6, kind: input, shape index: {}]
  %s7 = inlined_call_operand.vmem [shape: f32[2,8,80,128], index: 7, kind: output, shape index: {}]
  %s8 = sld [smem:[#allocation0]]
  $region61: #{residual_block_3d.7} parent=0
    _
  %s10 = ssub.s32 1, %s8
  %s11 = scalar_select 0, %s10, %s8
  loop: start=0, step=1, limit=18
  $region2: #{residual_block_3d.7} parent=0 // loop_pre_header
    _
  $region3: #{residual_block_3d.7} parent=0 // loop_header
    %s13 = sphi 0, %s17
    %p14 = scmp.ge.s32.totalorder %s13, 18
    %s20 = sphi 0, %s32
    %s21 = sphi 0, %s28
    %s22 = sphi 0, %s20
    %s23 = sphi 0, %s21
    %s24 = sphi 0, %s22
    %s25 = sphi 0, %s23
    %s37 = sphi 0, %s39
    %s40 = sphi 0, %s37
    %s41 = sphi 0, %s40
    %s57 = sphi 0, %s41
    %s65 = sphi 0, %s67
    %s68 = sphi 0, %s65
    %s69 = sphi 0, %s68
    %s85 = sphi 0, %s69
    %s89 = sphi 0, %s89
    %s91 = sphi 0, %s89
    %s92 = sphi 0, %s91
    %s106 = sphi 0, %s92
    %s110 = sphi 0, %s110
    %s112 = sphi 0, %s110
    %s113 = sphi 0, %s112
    %s127 = sphi 0, %s113
    %s131 = sphi 0, %s131
    %s133 = sphi 0, %s131
    %s134 = sphi 0, %s133
    %s148 = sphi 0, %s134
    %s152 = sphi 0, %s152
    %s154 = sphi 0, %s152
    %s155 = sphi 0, %s154
    %s169 = sphi 0, %s155
    %s173 = sphi 0, %s173
    %s175 = sphi 0, %s173
    %s176 = sphi 0, %s175
    %s190 = sphi 0, %s176
    %s198 = sphi 0, %s200
    %s201 = sphi 0, %s198
    %s202 = sphi 0, %s201
    %s218 = sphi 0, %s202
  $region4: #{residual_block_3d.7} parent=0 // loop_header_branch
    %16 = sbr.rel (%p14) target = $region8
  $region5: #{residual_block_3d.7} parent=0 // loop_body
    %s18 = ssub.s32 %s13, 1
    %s19 = ssub.s32 %s13, 2
    %s26 = sadd.s32 1, %s21
    %p27 = scmp.ge.s32.totalorder %s26, 8
    %s28 = scalar_select %p27, 0, %s26
    %s29 = sadd.s32 1, %s20
    %s30 = scalar_select %p27, %s29, %s20
    %p31 = scmp.ge.s32.totalorder %s30, 2
    %s32 = scalar_select %p31, 0, %s30
    %s33 = ssub.s32 %s20, %s32
    %s34 = ssub.s32 %s21, %s28
    %s35 = sor.u32 %s33, %s34
    %p36 = scmp.eq.s32.totalorder %s35, 0
    %s38 = sadd.s32 %s37, 1
    %s39 = scalar_select %p36, %s37, %s38
    %p42 = pneg %p36
    %p43 = scmp.eq.s32.totalorder %s13, 15
    %p44 = por %p42, %p43
    %p45 = scmp.ne.s32.totalorder %s37, %s40
    %p46 = scmp.eq.s32.totalorder %s13, 0
    %p47 = por %p45, %p46
    %p48 = scmp.ne.s32.totalorder %s37, %s40
    %p49 = scmp.eq.s32.totalorder %s18, 15
    %p50 = por %p48, %p49
    %p51 = scmp.ne.s32.totalorder %s40, %s41
    %p52 = scmp.eq.s32.totalorder %s18, 0
    %p53 = por %p51, %p52
    %p54 = scmp.ne.s32.totalorder %s40, %s41
    %p55 = scmp.eq.s32.totalorder %s19, 15
    %p56 = por %p54, %p55
    %p58 = scmp.ne.s32.totalorder %s41, %s57
    %p59 = scmp.eq.s32.totalorder %s19, 0
    %p60 = por %p58, %p59
    %s61 = ssub.s32 %s20, %s32
    %s62 = ssub.s32 %s21, %s28
    %s63 = sor.u32 %s61, %s62
    %p64 = scmp.eq.s32.totalorder %s63, 0
    %s66 = sadd.s32 %s65, 1
    %s67 = scalar_select %p64, %s65, %s66
    %p70 = pneg %p64
    %p71 = scmp.eq.s32.totalorder %s13, 15
    %p72 = por %p70, %p71
    %p73 = scmp.ne.s32.totalorder %s65, %s68
    %p74 = scmp.eq.s32.totalorder %s13, 0
    %p75 = por %p73, %p74
    %p76 = scmp.ne.s32.totalorder %s65, %s68
    %p77 = scmp.eq.s32.totalorder %s18, 15
    %p78 = por %p76, %p77
    %p79 = scmp.ne.s32.totalorder %s68, %s69
    %p80 = scmp.eq.s32.totalorder %s18, 0
    %p81 = por %p79, %p80
    %p82 = scmp.ne.s32.totalorder %s68, %s69
    %p83 = scmp.eq.s32.totalorder %s19, 15
    %p84 = por %p82, %p83
    %p86 = scmp.ne.s32.totalorder %s69, %s85
    %p87 = scmp.eq.s32.totalorder %s19, 0
    %p88 = por %p86, %p87
    %s90 = sadd.s32 %s89, 1
    %p93 = scmp.eq.s32.totalorder %s13, 15
    %p94 = scmp.ne.s32.totalorder %s89, %s91
    %p95 = scmp.eq.s32.totalorder %s13, 0
    %p96 = por %p94, %p95
    %p97 = scmp.ne.s32.totalorder %s89, %s91
    %p98 = scmp.eq.s32.totalorder %s18, 15
    %p99 = por %p97, %p98
    %p100 = scmp.ne.s32.totalorder %s91, %s92
    %p101 = scmp.eq.s32.totalorder %s18, 0
    %p102 = por %p100, %p101
    %p103 = scmp.ne.s32.totalorder %s91, %s92
    %p104 = scmp.eq.s32.totalorder %s19, 15
    %p105 = por %p103, %p104
    %p107 = scmp.ne.s32.totalorder %s92, %s106
    %p108 = scmp.eq.s32.totalorder %s19, 0
    %p109 = por %p107, %p108
    %s111 = sadd.s32 %s110, 1
    %p114 = scmp.eq.s32.totalorder %s13, 15
    %p115 = scmp.ne.s32.totalorder %s110, %s112
    %p116 = scmp.eq.s32.totalorder %s13, 0
    %p117 = por %p115, %p116
    %p118 = scmp.ne.s32.totalorder %s110, %s112
    %p119 = scmp.eq.s32.totalorder %s18, 15
    %p120 = por %p118, %p119
    %p121 = scmp.ne.s32.totalorder %s112, %s113
    %p122 = scmp.eq.s32.totalorder %s18, 0
    %p123 = por %p121, %p122
    %p124 = scmp.ne.s32.totalorder %s112, %s113
    %p125 = scmp.eq.s32.totalorder %s19, 15
    %p126 = por %p124, %p125
    %p128 = scmp.ne.s32.totalorder %s113, %s127
    %p129 = scmp.eq.s32.totalorder %s19, 0
    %p130 = por %p128, %p129
    %s132 = sadd.s32 %s131, 1
    %p135 = scmp.eq.s32.totalorder %s13, 15
    %p136 = scmp.ne.s32.totalorder %s131, %s133
    %p137 = scmp.eq.s32.totalorder %s13, 0
    %p138 = por %p136, %p137
    %p139 = scmp.ne.s32.totalorder %s131, %s133
    %p140 = scmp.eq.s32.totalorder %s18, 15
    %p141 = por %p139, %p140
    %p142 = scmp.ne.s32.totalorder %s133, %s134
    %p143 = scmp.eq.s32.totalorder %s18, 0
    %p144 = por %p142, %p143
    %p145 = scmp.ne.s32.totalorder %s133, %s134
    %p146 = scmp.eq.s32.totalorder %s19, 15
    %p147 = por %p145, %p146
    %p149 = scmp.ne.s32.totalorder %s134, %s148
    %p150 = scmp.eq.s32.totalorder %s19, 0
    %p151 = por %p149, %p150
    %s153 = sadd.s32 %s152, 1
    %p156 = scmp.eq.s32.totalorder %s13, 15
    %p157 = scmp.ne.s32.totalorder %s152, %s154
    %p158 = scmp.eq.s32.totalorder %s13, 0
    %p159 = por %p157, %p158
    %p160 = scmp.ne.s32.totalorder %s152, %s154
    %p161 = scmp.eq.s32.totalorder %s18, 15
    %p162 = por %p160, %p161
    %p163 = scmp.ne.s32.totalorder %s154, %s155
    %p164 = scmp.eq.s32.totalorder %s18, 0
    %p165 = por %p163, %p164
    %p166 = scmp.ne.s32.totalorder %s154, %s155
    %p167 = scmp.eq.s32.totalorder %s19, 15
    %p168 = por %p166, %p167
    %p170 = scmp.ne.s32.totalorder %s155, %s169
    %p171 = scmp.eq.s32.totalorder %s19, 0
    %p172 = por %p170, %p171
    %s174 = sadd.s32 %s173, 1
    %p177 = scmp.eq.s32.totalorder %s13, 15
    %p178 = scmp.ne.s32.totalorder %s173, %s175
    %p179 = scmp.eq.s32.totalorder %s13, 0
    %p180 = por %p178, %p179
    %p181 = scmp.ne.s32.totalorder %s173, %s175
    %p182 = scmp.eq.s32.totalorder %s18, 15
    %p183 = por %p181, %p182
    %p184 = scmp.ne.s32.totalorder %s175, %s176
    %p185 = scmp.eq.s32.totalorder %s18, 0
    %p186 = por %p184, %p185
    %p187 = scmp.ne.s32.totalorder %s175, %s176
    %p188 = scmp.eq.s32.totalorder %s19, 15
    %p189 = por %p187, %p188
    %p191 = scmp.ne.s32.totalorder %s176, %s190
    %p192 = scmp.eq.s32.totalorder %s19, 0
    %p193 = por %p191, %p192
    %s194 = ssub.s32 %s20, %s32
    %s195 = ssub.s32 %s21, %s28
    %s196 = sor.u32 %s194, %s195
    %p197 = scmp.eq.s32.totalorder %s196, 0
    %s199 = sadd.s32 %s198, 1
    %s200 = scalar_select %p197, %s198, %s199
    %p203 = pneg %p197
    %p204 = scmp.eq.s32.totalorder %s13, 15
    %p205 = por %p203, %p204
    %p206 = scmp.ne.s32.totalorder %s198, %s201
    %p207 = scmp.eq.s32.totalorder %s13, 0
    %p208 = por %p206, %p207
    %p209 = scmp.ne.s32.totalorder %s198, %s201
    %p210 = scmp.eq.s32.totalorder %s18, 15
    %p211 = por %p209, %p210
    %p212 = scmp.ne.s32.totalorder %s201, %s202
    %p213 = scmp.eq.s32.totalorder %s18, 0
    %p214 = por %p212, %p213
    %p215 = scmp.ne.s32.totalorder %s201, %s202
    %p216 = scmp.eq.s32.totalorder %s19, 15
    %p217 = por %p215, %p216
    %p219 = scmp.ne.s32.totalorder %s202, %s218
    %p220 = scmp.eq.s32.totalorder %s19, 0
    %p221 = por %p219, %p220
    %p222 = scmp.le.s32.totalorder 1, %s13
    %p223 = scmp.lt.s32.totalorder %s13, 17
    %p224 = pnand %p222, %p223
    %p225 = pneg %p224
    // Predicated region
    $region9: #{residual_block_3d.7} parent=5 // pred_check
      _
    $region10: #{residual_block_3d.7} parent=5 // pred_check_branch
      %227 = sbr.rel (%p224) target = $region12
    $region11: #{residual_block_3d.7} parent=5 // pred_region
      %s228 = ssub.s32 %s13, 1
      // Predicated region
      $region13: #{residual_block_3d.7} parent=11 // pred_check
        %p229 = pneg %p102
      $region14: #{residual_block_3d.7} parent=11 // pred_check_branch
        %231 = sbr.rel (%p229) target = $region16
      $region15: #{residual_block_3d.7} parent=11 // pred_region
        _
      $region16: #{residual_block_3d.7} parent=11 // pred_fallthru
        _
      // Predicated region
      $region17: #{residual_block_3d.7} parent=11 // pred_check
        %p232 = pneg %p123
      $region18: #{residual_block_3d.7} parent=11 // pred_check_branch
        %234 = sbr.rel (%p232) target = $region20
      $region19: #{residual_block_3d.7} parent=11 // pred_region
        _
      $region20: #{residual_block_3d.7} parent=11 // pred_fallthru
        _
      // Predicated region
      $region21: #{residual_block_3d.7} parent=11 // pred_check
        %p235 = pneg %p144
      $region22: #{residual_block_3d.7} parent=11 // pred_check_branch
        %237 = sbr.rel (%p235) target = $region24
      $region23: #{residual_block_3d.7} parent=11 // pred_region
        _
      $region24: #{residual_block_3d.7} parent=11 // pred_fallthru
        _
      // Predicated region
      $region25: #{residual_block_3d.7} parent=11 // pred_check
        %p238 = pneg %p165
      $region26: #{residual_block_3d.7} parent=11 // pred_check_branch
        %240 = sbr.rel (%p238) target = $region28
      $region27: #{residual_block_3d.7} parent=11 // pred_region
        _
      $region28: #{residual_block_3d.7} parent=11 // pred_fallthru
        _
      // Predicated region
      $region29: #{residual_block_3d.7} parent=11 // pred_check
        %p241 = pneg %p186
      $region30: #{residual_block_3d.7} parent=11 // pred_check_branch
        %243 = sbr.rel (%p241) target = $region32
      $region31: #{residual_block_3d.7} parent=11 // pred_region
        _
      $region32: #{residual_block_3d.7} parent=11 // pred_fallthru
        _
    $region12: #{residual_block_3d.7} parent=5 // pred_fallthru
      _
    %p244 = scmp.lt.s32.totalorder %s13, 16
    // Predicated region
    $region33: #{residual_block_3d.7} parent=5 // pred_check
      %p245 = pneg %p244
    $region34: #{residual_block_3d.7} parent=5 // pred_check_branch
      %247 = sbr.rel (%p245) target = $region36
    $region35: #{residual_block_3d.7} parent=5 // pred_region
      // Predicated region
      $region37: #{residual_block_3d.7} parent=35 // pred_check
        %p248 = pneg %p47
      $region38: #{residual_block_3d.7} parent=35 // pred_check_branch
        %250 = sbr.rel (%p248) target = $region40
      $region39: #{residual_block_3d.7} parent=35 // pred_region
        %p251 = scmp.lt.s32.totalorder %s20, 1
        %s252 = scalar_select %p251, %s20, 1
        %p253 = scmp.lt.s32.totalorder %s21, 7
        %s254 = scalar_select %p253, %s21, 7
        %s255 = smul.addr %s254, 10
        %s256 = smul.addr %s252, 80
        %s257 = sadd.s32 %s255, %s256
        %s258 = smul.addr %s257, 8
        %s259 = scalar_lea.vmem %s0, %s258
      $region40: #{residual_block_3d.7} parent=35 // pred_fallthru
        _
      // Predicated region
      $region41: #{residual_block_3d.7} parent=35 // pred_check
        %p260 = pneg %p75
      $region42: #{residual_block_3d.7} parent=35 // pred_check_branch
        %262 = sbr.rel (%p260) target = $region44
      $region43: #{residual_block_3d.7} parent=35 // pred_region
        %p263 = scmp.lt.s32.totalorder %s20, 1
        %s264 = scalar_select %p263, %s20, 1
        %p265 = scmp.lt.s32.totalorder %s21, 7
        %s266 = scalar_select %p265, %s21, 7
        %s267 = smul.addr %s266, 10
        %s268 = smul.addr %s264, 80
        %s269 = sadd.s32 %s267, %s268
        %s270 = smul.addr %s269, 8
        %s271 = scalar_lea.vmem %s1, %s270
      $region44: #{residual_block_3d.7} parent=35 // pred_fallthru
        _
    $region36: #{residual_block_3d.7} parent=5 // pred_fallthru
      _
    %p272 = scmp.le.s32.totalorder 1, %s13
    %p273 = scmp.lt.s32.totalorder %s13, 17
    %p274 = pnand %p272, %p273
    %p275 = pneg %p274
    // Predicated region
    $region45: #{residual_block_3d.7} parent=5 // pred_check
      _
    $region46: #{residual_block_3d.7} parent=5 // pred_check_branch
      %277 = sbr.rel (%p274) target = $region48
    $region47: #{residual_block_3d.7} parent=5 // pred_region
      %s278 = ssub.s32 %s13, 1
      %p279 = scmp.lt.s32.totalorder %s22, 1
      %s280 = scalar_select %p279, %s22, 1
      %p281 = scmp.lt.s32.totalorder %s23, 7
      %s282 = scalar_select %p281, %s23, 7
      %s283 = smul.addr %s282, 10
      %s284 = smul.addr %s280, 80
      %s285 = sadd.s32 %s283, %s284
      %s286 = smul.addr %s285, 8
      %s287 = scalar_lea.vmem %s0, %s286
      %p288 = pneg %p53
      %p289 = pneg %p50
      %p290 = scmp.lt.s32.totalorder %s22, 1
      %s291 = scalar_select %p290, %s22, 1
      %p292 = scmp.lt.s32.totalorder %s23, 7
      %s293 = scalar_select %p292, %s23, 7
      %s294 = smul.addr %s293, 10
      %s295 = smul.addr %s291, 80
      %s296 = sadd.s32 %s294, %s295
      %s297 = smul.addr %s296, 8
      %s298 = scalar_lea.vmem %s1, %s297
      %p299 = pneg %p81
      %p300 = pneg %p78
      %p301 = pneg %p102
      %p302 = pneg %p99
      %p303 = pneg %p123
      %p304 = pneg %p120
      %p305 = pneg %p144
      %p306 = pneg %p141
      %p307 = pneg %p165
      %p308 = pneg %p162
      %p309 = pneg %p186
      %p310 = pneg %p183
      %p311 = pneg %p214
      %p312 = pneg %p211
      %p313 = scmp.lt.s32.totalorder %s22, 1
      %s314 = scalar_select %p313, %s22, 1
      %p315 = scmp.lt.s32.totalorder %s23, 7
      %s316 = scalar_select %p315, %s23, 7
      %s317 = smul.addr %s316, 10
      %s318 = smul.addr %s314, 80
      %s319 = sadd.s32 %s317, %s318
      %s320 = smul.addr %s319, 8
      %s321 = scalar_lea.vmem %s7, %s320
      %p322 = scmp.lt.s32.totalorder %s22, 1
      %s323 = scalar_select %p322, %s22, 1
      %p324 = scmp.lt.s32.totalorder %s23, 7
      %s325 = scalar_select %p324, %s23, 7
      %s326 = smul.addr %s325, 10
      %s327 = smul.addr %s323, 80
      %s328 = sadd.s32 %s326, %s327
      %s329 = smul.addr %s328, 8
      %s330 = scalar_lea.vmem %s0, %s329
      %p331 = scmp.lt.s32.totalorder %s22, 1
      %s332 = scalar_select %p331, %s22, 1
      %p333 = scmp.lt.s32.totalorder %s23, 7
      %s334 = scalar_select %p333, %s23, 7
      %s335 = smul.addr %s334, 10
      %s336 = smul.addr %s332, 80
      %s337 = sadd.s32 %s335, %s336
      %s338 = smul.addr %s337, 8
      %s339 = scalar_lea.vmem %s1, %s338
      %p340 = scmp.lt.s32.totalorder %s22, 1
      %s341 = scalar_select %p340, %s22, 1
      %p342 = scmp.lt.s32.totalorder %s23, 7
      %s343 = scalar_select %p342, %s23, 7
      %s344 = smul.addr %s343, 10
      %s345 = smul.addr %s341, 80
      %s346 = sadd.s32 %s344, %s345
      %s347 = smul.addr %s346, 8
      %s348 = scalar_lea.vmem %s7, %s347
      %v350 = vld [vmem:[%s339] sm:$0xff]
      %v351 = vld [vmem:[%s339 + $0x8] sm:$0xff]
      %v352 = vld [vmem:[%s339 + $0x10] sm:$0xff]
      %v353 = vld [vmem:[%s339 + $0x18] sm:$0xff]
      %v354 = vld [vmem:[%s339 + $0x20] sm:$0xff]
      %v355 = vld [vmem:[%s339 + $0x28] sm:$0xff]
      %v356 = vld [vmem:[%s339 + $0x30] sm:$0xff]
      %v357 = vld [vmem:[%s339 + $0x38] sm:$0xff]
      %v358 = vld [vmem:[%s339 + $0x40] sm:$0xff]
      %v359 = vld [vmem:[%s339 + $0x48] sm:$0xff]
      %v360 = vpack.c.bf16 %v351, %v350
      %v361 = vpack.c.bf16 %v353, %v352
      %v362 = vpack.c.bf16 %v355, %v354
      %v363 = vpack.c.bf16 %v357, %v356
      %v364 = vpack.c.bf16 %v359, %v358
      %v365 = vld [vmem:[%s2] sm:$0xf]
      %v366 = vld [vmem:[%s2 + $0x4] sm:$0xf]
      %v367 = vld [vmem:[%s2 + $0x8] sm:$0xf]
      %v368 = vld [vmem:[%s2 + $0xc] sm:$0xf]
      %v369 = vld [vmem:[%s2 + $0x10] sm:$0xf]
      %v370 = vld [vmem:[%s2 + $0x14] sm:$0xf]
      %v371 = vld [vmem:[%s2 + $0x18] sm:$0xf]
      %v372 = vld [vmem:[%s2 + $0x1c] sm:$0xf]
      %v373 = vld [vmem:[%s2 + $0x20] sm:$0xf]
      %v374 = vld [vmem:[%s2 + $0x24] sm:$0xf]
      %v375 = vld [vmem:[%s2 + $0x28] sm:$0xf]
      %v376 = vld [vmem:[%s2 + $0x2c] sm:$0xf]
      %v377 = vld [vmem:[%s2 + $0x30] sm:$0xf]
      %v378 = vld [vmem:[%s2 + $0x34] sm:$0xf]
      %v379 = vld [vmem:[%s2 + $0x38] sm:$0xf]
      %v380 = vld [vmem:[%s2 + $0x3c] sm:$0xf]
      %v397 = vunpack.c.l.b16 %v365
      %v398 = vunpack.c.l.b16 %v366
      %v399 = vunpack.c.l.b16 %v367
      %v400 = vunpack.c.l.b16 %v368
      %v401 = vunpack.c.l.b16 %v369
      %v402 = vunpack.c.l.b16 %v370
      %v403 = vunpack.c.l.b16 %v371
      %v404 = vunpack.c.l.b16 %v372
      %v405 = vunpack.c.l.b16 %v373
      %v406 = vunpack.c.l.b16 %v374
      %v407 = vunpack.c.l.b16 %v375
      %v408 = vunpack.c.l.b16 %v376
      %v409 = vunpack.c.l.b16 %v377
      %v410 = vunpack.c.l.b16 %v378
      %v411 = vunpack.c.l.b16 %v379
      %v412 = vunpack.c.l.b16 %v380
      %v413 = vpack.c.b16 %v398, %v397
      %v414 = vpack.c.b16 %v400, %v399
      %v415 = vpack.c.b16 %v402, %v401
      %v416 = vpack.c.b16 %v404, %v403
      %v417 = vpack.c.b16 %v406, %v405
      %v418 = vpack.c.b16 %v408, %v407
      %v419 = vpack.c.b16 %v410, %v409
      %v420 = vpack.c.b16 %v412, %v411
      %429 = vmatprep.subr.bf16.mxu0 0
      %430 = vmatpush1.bf16.msra.mxu0 %v413
      %431 = vmatprep.subr.bf16.mxu0 0
      %432 = vmatpush1.bf16.msra.mxu0 %v414
      %433 = vmatprep.subr.bf16.mxu0 0
      %434 = vmatpush1.bf16.msra.mxu0 %v415
      %435 = vmatprep.subr.bf16.mxu0 0
      %436 = vmatpush1.bf16.msra.mxu0 %v416
      %437 = vmatprep.subr.bf16.mxu0 0
      %438 = vmatpush1.bf16.msra.mxu0 %v417
      %439 = vmatprep.subr.bf16.mxu0 0
      %440 = vmatpush1.bf16.msra.mxu0 %v418
      %441 = vmatprep.subr.bf16.mxu0 0
      %442 = vmatpush1.bf16.msra.mxu0 %v419
      %443 = vmatprep.subr.bf16.mxu0 0
      %444 = vmatpush1.bf16.msra.mxu0 %v420
      %445 = vmatprep.subr.bf16.mxu0 0
      %446 = vmatpush1.bf16.msra.mxu0 0
      %447 = vmatprep.subr.bf16.mxu0 0
      %448 = vmatpush1.bf16.msra.mxu0 0
      %449 = vmatprep.subr.bf16.mxu0 0
      %450 = vmatpush1.bf16.msra.mxu0 0
      %451 = vmatprep.subr.bf16.mxu0 0
      %452 = vmatpush1.bf16.msra.mxu0 0
      %453 = vmatprep.subr.bf16.mxu0 0
      %454 = vmatpush1.bf16.msra.mxu0 0
      %455 = vmatprep.subr.bf16.mxu0 0
      %456 = vmatpush1.bf16.msra.mxu0 0
      %457 = vmatprep.subr.bf16.mxu0 0
      %458 = vmatpush1.bf16.msra.mxu0 0
      %459 = vmatprep.subr.bf16.mxu0 0
      %460 = vmatpush1.bf16.msra.mxu0 0
      %461 = vmatprep.mubr.bf16.mxu0 0
      %462 = vmatmul.mubr.bf16.gmra.mrb[0].mxu0 %v360
      %v463 = vpop.f32.mrb[0].mxu0
      %v464 = vadd.f32 0.0, %v463
      %v465 = vpop.f32.mrb[0].mxu0
      %v466 = vpop.f32.mrb[0].mxu0
      %v467 = vadd.f32 0.0, %v466
      %v468 = vpop.f32.mrb[0].mxu0
      %469 = vmatprep.mubr.bf16.mxu0 0
      %470 = vmatmul.mubr.bf16.gmra.mrb[0].mxu0 %v361
      %v471 = vpop.f32.mrb[0].mxu0
      %v472 = vadd.f32 0.0, %v471
      %v473 = vpop.f32.mrb[0].mxu0
      %v474 = vpop.f32.mrb[0].mxu0
      %v475 = vadd.f32 0.0, %v474
      %v476 = vpop.f32.mrb[0].mxu0
      %477 = vmatprep.mubr.bf16.mxu0 0
      %478 = vmatmul.mubr.bf16.gmra.mrb[0].mxu0 %v362
      %v479 = vpop.f32.mrb[0].mxu0
      %v480 = vadd.f32 0.0, %v479
      %v481 = vpop.f32.mrb[0].mxu0
      %v482 = vpop.f32.mrb[0].mxu0
      %v483 = vadd.f32 0.0, %v482
      %v484 = vpop.f32.mrb[0].mxu0
      %485 = vmatprep.mubr.bf16.mxu0 0
      %486 = vmatmul.mubr.bf16.gmra.mrb[0].mxu0 %v363
      %v487 = vpop.f32.mrb[0].mxu0
      %v488 = vadd.f32 0.0, %v487
      %v489 = vpop.f32.mrb[0].mxu0
      %v490 = vpop.f32.mrb[0].mxu0
      %v491 = vadd.f32 0.0, %v490
      %v492 = vpop.f32.mrb[0].mxu0
      %493 = vmatprep.mubr.bf16.mxu0 0
      %494 = vmatmul.mubr.bf16.gmra.mrb[0].mxu0 %v364
      %v495 = vpop.f32.mrb[0].mxu0
      %v496 = vadd.f32 0.0, %v495
      %v497 = vpop.f32.mrb[0].mxu0
      %v498 = vpop.f32.mrb[0].mxu0
      %v499 = vadd.f32 0.0, %v498
      %v500 = vpop.f32.mrb[0].mxu0
      %501 = vdwg.mxu0
      %v502 = vld [vmem:[%s5] sm:$0x1]
      %v504 = vlaneseq
      %v505 = vshrl.u32 %v504, 7
      %v506 = vsub.s32 0, %v505
      %v507 = vrot.slane %v502, %v506
      %v509 = vmul.f32 %v464, %v507
      %v510 = vmul.f32 %v467, %v507
      %v511 = vmul.f32 %v472, %v507
      %v512 = vmul.f32 %v475, %v507
      %v513 = vmul.f32 %v480, %v507
      %v514 = vmul.f32 %v483, %v507
      %v515 = vmul.f32 %v488, %v507
      %v516 = vmul.f32 %v491, %v507
      %v517 = vmul.f32 %v496, %v507
      %v518 = vmul.f32 %v499, %v507
      %v519 = vld [vmem:[%s6] sm:$0x1]
      %v521 = vlaneseq
      %v522 = vshrl.u32 %v521, 7
      %v523 = vsub.s32 0, %v522
      %v524 = vrot.slane %v519, %v523
      %v526 = vadd.f32 %v509, %v524
      %v527 = vadd.f32 %v510, %v524
      %v528 = vadd.f32 %v511, %v524
      %v529 = vadd.f32 %v512, %v524
      %v530 = vadd.f32 %v513, %v524
      %v531 = vadd.f32 %v514, %v524
      %v532 = vadd.f32 %v515, %v524
      %v533 = vadd.f32 %v516, %v524
      %v534 = vadd.f32 %v517, %v524
      %v535 = vadd.f32 %v518, %v524
      %v536 = vld [vmem:[%s330] sm:$0xff]
      %v537 = vld [vmem:[%s330 + $0x8] sm:$0xff]
      %v538 = vld [vmem:[%s330 + $0x10] sm:$0xff]
      %v539 = vld [vmem:[%s330 + $0x18] sm:$0xff]
      %v540 = vld [vmem:[%s330 + $0x20] sm:$0xff]
      %v541 = vld [vmem:[%s330 + $0x28] sm:$0xff]
      %v542 = vld [vmem:[%s330 + $0x30] sm:$0xff]
      %v543 = vld [vmem:[%s330 + $0x38] sm:$0xff]
      %v544 = vld [vmem:[%s330 + $0x40] sm:$0xff]
      %v545 = vld [vmem:[%s330 + $0x48] sm:$0xff]
      %v546 = vld [vmem:[%s3] sm:$0x1]
      %v548 = vlaneseq
      %v549 = vshrl.u32 %v548, 7
      %v550 = vsub.s32 0, %v549
      %v551 = vrot.slane %v546, %v550
      %v553 = vmul.f32 %v536, %v551
      %v554 = vmul.f32 %v537, %v551
      %v555 = vmul.f32 %v538, %v551
      %v556 = vmul.f32 %v539, %v551
      %v557 = vmul.f32 %v540, %v551
      %v558 = vmul.f32 %v541, %v551
      %v559 = vmul.f32 %v542, %v551
      %v560 = vmul.f32 %v543, %v551
      %v561 = vmul.f32 %v544, %v551
      %v562 = vmul.f32 %v545, %v551
      %v563 = vld [vmem:[%s4] sm:$0x1]
      %v565 = vlaneseq
      %v566 = vshrl.u32 %v565, 7
      %v567 = vsub.s32 0, %v566
      %v568 = vrot.slane %v563, %v567
      %v570 = vadd.f32 %v553, %v568
      %v571 = vadd.f32 %v554, %v568
      %v572 = vadd.f32 %v555, %v568
      %v573 = vadd.f32 %v556, %v568
      %v574 = vadd.f32 %v557, %v568
      %v575 = vadd.f32 %v558, %v568
      %v576 = vadd.f32 %v559, %v568
      %v577 = vadd.f32 %v560, %v568
      %v578 = vadd.f32 %v561, %v568
      %v579 = vadd.f32 %v562, %v568
      %v580 = vadd.f32 %v570, %v526
      %v581 = vadd.f32 %v571, %v527
      %v582 = vadd.f32 %v572, %v528
      %v583 = vadd.f32 %v573, %v529
      %v584 = vadd.f32 %v574, %v530
      %v585 = vadd.f32 %v575, %v531
      %v586 = vadd.f32 %v576, %v532
      %v587 = vadd.f32 %v577, %v533
      %v588 = vadd.f32 %v578, %v534
      %v589 = vadd.f32 %v579, %v535
      %v590 = vmax.f32 %v580, 0.0
      %v591 = vmax.f32 %v581, 0.0
      %v592 = vmax.f32 %v582, 0.0
      %v593 = vmax.f32 %v583, 0.0
      %v594 = vmax.f32 %v584, 0.0
      %v595 = vmax.f32 %v585, 0.0
      %v596 = vmax.f32 %v586, 0.0
      %v597 = vmax.f32 %v587, 0.0
      %v598 = vmax.f32 %v588, 0.0
      %v599 = vmax.f32 %v589, 0.0
      %600 = vst [vmem:[%s348] sm:$0xff] %v590
      %601 = vst [vmem:[%s348 + $0x8] sm:$0xff] %v591
      %602 = vst [vmem:[%s348 + $0x10] sm:$0xff] %v592
      %603 = vst [vmem:[%s348 + $0x18] sm:$0xff] %v593
      %604 = vst [vmem:[%s348 + $0x20] sm:$0xff] %v594
      %605 = vst [vmem:[%s348 + $0x28] sm:$0xff] %v595
      %606 = vst [vmem:[%s348 + $0x30] sm:$0xff] %v596
      %607 = vst [vmem:[%s348 + $0x38] sm:$0xff] %v597
      %608 = vst [vmem:[%s348 + $0x40] sm:$0xff] %v598
      %609 = vst [vmem:[%s348 + $0x48] sm:$0xff] %v599
      %p610 = scmp.lt.s32.totalorder %s22, 1
      %s611 = scalar_select %p610, %s22, 1
      %p612 = scmp.lt.s32.totalorder %s23, 7
      %s613 = scalar_select %p612, %s23, 7
      %s614 = smul.addr %s613, 10
      %s615 = smul.addr %s611, 80
      %s616 = sadd.s32 %s614, %s615
      %s617 = smul.addr %s616, 8
      %s618 = scalar_lea.vmem %s7, %s617
      // Predicated region
      $region49: #{residual_block_3d.7} parent=47 // pred_check
        %p619 = pneg %p211
      $region50: #{residual_block_3d.7} parent=47 // pred_check_branch
        %621 = sbr.rel (%p619) target = $region52
      $region51: #{residual_block_3d.7} parent=47 // pred_region
        _
      $region52: #{residual_block_3d.7} parent=47 // pred_fallthru
        _
    $region48: #{residual_block_3d.7} parent=5 // pred_fallthru
      _
    %p622 = scmp.le.s32.totalorder 2, %s13
    // Predicated region
    $region53: #{residual_block_3d.7} parent=5 // pred_check
      %p623 = pneg %p622
    $region54: #{residual_block_3d.7} parent=5 // pred_check_branch
      %625 = sbr.rel (%p623) target = $region56
    $region55: #{residual_block_3d.7} parent=5 // pred_region
      %s626 = ssub.s32 %s13, 2
      // Predicated region
      $region57: #{residual_block_3d.7} parent=55 // pred_check
        %p627 = pneg %p217
      $region58: #{residual_block_3d.7} parent=55 // pred_check_branch
        %629 = sbr.rel (%p627) target = $region60
      $region59: #{residual_block_3d.7} parent=55 // pred_region
        %p630 = scmp.lt.s32.totalorder %s24, 1
        %s631 = scalar_select %p630, %s24, 1
        %p632 = scmp.lt.s32.totalorder %s25, 7
        %s633 = scalar_select %p632, %s25, 7
        %s634 = smul.addr %s633, 10
        %s635 = smul.addr %s631, 80
        %s636 = sadd.s32 %s634, %s635
        %s637 = smul.addr %s636, 8
        %s638 = scalar_lea.vmem %s7, %s637
      $region60: #{residual_block_3d.7} parent=55 // pred_fallthru
        _
    $region56: #{residual_block_3d.7} parent=5 // pred_fallthru
      _
  $region6: #{residual_block_3d.7} parent=0 // loop_footer
    %s17 = sadd.s32 1, %s13
  $region7: #{residual_block_3d.7} parent=0 // loop_footer_branch
    %12 = sbr.rel target = $region3
  $region8: #{residual_block_3d.7} parent=0 // loop_exit
    _

</llo_original>
